<compile_context>
chip_gen: v6e
topology: v6e:2x2x1
jax: 0.10.0
libtpu: 0.0.40
codegen_flags: <defaults>
</compile_context>

<pallas_src>
import jax
import jax.numpy as jnp
from jax.experimental import pallas as pl
from jax.experimental.pallas import tpu as pltpu

EPS = 1e-5
LANE = 128


# --------------------------------------------------------------------------
# shared conv helper: halo-pad -> im2col slab -> single MXU matmul -> stats
# --------------------------------------------------------------------------
def _conv3x3_im2col(src, w_ref, y_ref, ssq_ref, pad_ref, slab_ref):
    tile_n, hp2, wp2, cin_p = pad_ref.shape
    hp, wp = hp2 - 2, wp2 - 2
    cout_p = y_ref.shape[-1]

    # Zero only the 1-pixel halo; the interior is fully overwritten each step.
    zrow = jnp.zeros((tile_n, 1, wp2, cin_p), jnp.float32)
    zcol = jnp.zeros((tile_n, hp, 1, cin_p), jnp.float32)
    pad_ref[:, 0:1, :, :] = zrow
    pad_ref[:, hp + 1:hp + 2, :, :] = zrow
    pad_ref[:, 1:hp + 1, 0:1, :] = zcol
    pad_ref[:, 1:hp + 1, wp + 1:wp + 2, :] = zcol
    pad_ref[:, 1:hp + 1, 1:wp + 1, :] = src

    # im2col: pack the 9 taps along the lane (K) axis.
    for dh in range(3):
        for dw in range(3):
            t = dh * 3 + dw
            slab_ref[:, :, :, t * cin_p:(t + 1) * cin_p] = (
                pad_ref[:, dh:dh + hp, dw:dw + wp, :])

    # One fat matmul: (M = tile_n*Hp*Wp) x (K = 9*Cin_p) x (N = Cout_p).
    acc = jnp.dot(slab_ref[...].reshape(tile_n * hp * wp, 9 * cin_p),
                  w_ref[...], preferred_element_type=jnp.float32)

    y_ref[...] = acc.reshape(tile_n, hp, wp, cout_p)

    # One-pass BN statistics: per-channel sum and sum-of-squares for this tile.
    s = jnp.sum(acc, axis=0, keepdims=True)
    sq = jnp.sum(acc * acc, axis=0, keepdims=True)
    ssq_ref[...] = jnp.concatenate([s, sq], axis=0)[None]


# --------------------------------------------------------------------------
# kernels
# --------------------------------------------------------------------------
def pool_conv1_kernel(x_ref, w_ref, y_ref, ssq_ref, pad_ref, slab_ref):
    tile_n, H, W, cin_p = x_ref.shape
    hp, wp = H // 2, W // 2
    # MaxPool2d(2): strided loads along W (sublane axis), reshape+max along H.
    a = x_ref[:, :, pl.ds(0, wp, stride=2), :]
    b = x_ref[:, :, pl.ds(1, wp, stride=2), :]
    xw = jnp.maximum(a, b)                                   # (tile_n, H, wp, cin_p)
    pooled = jnp.max(xw.reshape(tile_n, hp, 2, wp, cin_p), axis=2)
    _conv3x3_im2col(pooled, w_ref, y_ref, ssq_ref, pad_ref, slab_ref)


def bn_relu_conv_kernel(y_in_ref, sc_ref, sh_ref, w_ref, y_ref, ssq_ref,
                        pad_ref, slab_ref):
    h = jnp.maximum(
        y_in_ref[...] * sc_ref[...][None, None] + sh_ref[...][None, None], 0.0)
    _conv3x3_im2col(h, w_ref, y_ref, ssq_ref, pad_ref, slab_ref)


def bn_relu_kernel(y_in_ref, sc_ref, sh_ref, out_ref):
    out_ref[...] = jnp.maximum(
        y_in_ref[...] * sc_ref[...][None, None] + sh_ref[...][None, None], 0.0)


# --------------------------------------------------------------------------
# wrapper
# --------------------------------------------------------------------------
def _round_up(x, m):
    return ((x + m - 1) // m) * m


def _pack_conv_w(w_oihw, cin_p, cout_p):
    """(Cout,Cin,3,3) -> (9*cin_p, cout_p), tap-major to match the im2col slab."""
    co, ci, _, _ = w_oihw.shape
    w = jnp.transpose(w_oihw, (2, 3, 1, 0))                 # (3,3,Cin,Cout)
    w = jnp.pad(w, ((0, 0), (0, 0), (0, cin_p - ci), (0, cout_p - co)))
    return w.reshape(9 * cin_p, cout_p)


def _finalize_bn(stats, gamma, beta, count, c_p):
    """Per-channel scale/shift from tiled sum/sumsq (biased var, train-mode BN)."""
    g = jnp.pad(gamma, (0, c_p - gamma.shape[0]))
    bt = jnp.pad(beta, (0, c_p - beta.shape[0]))
    s = jnp.sum(stats[:, 0, :], axis=0)
    sq = jnp.sum(stats[:, 1, :], axis=0)
    mean = s / count
    var = jnp.maximum(sq / count - mean * mean, 0.0)
    scale = g * jax.lax.rsqrt(var + EPS)
    shift = bt - mean * scale
    return scale.reshape(1, c_p), shift.reshape(1, c_p)


@jax.jit
def down_forward(x_nchw, w1, b1, g1, be1, w2, b2, g2, be2):
    """x_nchw: (N, Cin, H, W) f32 -> (N, Cout, H/2, W/2) f32."""
    # Conv biases are exactly cancelled by training-mode BN's mean subtraction,
    # so the kernels do not consume them (kept in the signature for parity).
    del b1, b2
    N, Cin, H, W = x_nchw.shape
    assert H % 2 == 0 and W % 2 == 0
    Hp, Wp = H // 2, W // 2
    Cout = w1.shape[0]
    cin_p = _round_up(Cin, LANE)
    c_p = _round_up(Cout, LANE)

    # NHWC, channels padded lane-dense.  (In a full network stay NHWC end-to-end.)
    x = jnp.transpose(x_nchw, (0, 2, 3, 1))
    x = jnp.pad(x, ((0, 0), (0, 0), (0, 0), (0, cin_p - Cin)))

    w1p = _pack_conv_w(w1, cin_p, c_p)
    w2p = _pack_conv_w(w2, c_p, c_p)

    tile_n = 1                      # one image per grid step (batch tiling)
    num_t = N // tile_n
    count = float(N * Hp * Wp)

    cparams = pltpu.CompilerParams(
        dimension_semantics=("parallel",),
        vmem_limit_bytes=48 * 1024 * 1024)

    # ---- pass 1: maxpool + conv1 (+ per-tile sum/sumsq) -------------------
    y1, st1 = pl.pallas_call(
        pool_conv1_kernel,
        grid=(num_t,),
        in_specs=[
            pl.BlockSpec((tile_n, H, W, cin_p), lambda i: (i, 0, 0, 0)),
            pl.BlockSpec((9 * cin_p, c_p), lambda i: (0, 0)),
        ],
        out_specs=(
            pl.BlockSpec((tile_n, Hp, Wp, c_p), lambda i: (i, 0, 0, 0)),
            pl.BlockSpec((1, 2, c_p), lambda i: (i, 0, 0)),
        ),
        out_shape=(
            jax.ShapeDtypeStruct((N, Hp, Wp, c_p), jnp.float32),
            jax.ShapeDtypeStruct((num_t, 2, c_p), jnp.float32),
        ),
        scratch_shapes=[
            pltpu.VMEM((tile_n, Hp + 2, Wp + 2, cin_p), jnp.float32),
            pltpu.VMEM((tile_n, Hp, Wp, 9 * cin_p), jnp.float32),
        ],
        compiler_params=cparams,
    )(x, w1p)

    sc1, sh1 = _finalize_bn(st1, g1, be1, count, c_p)

    # ---- pass 2: BN1 + ReLU + conv2 (+ per-tile sum/sumsq) ----------------
    y2, st2 = pl.pallas_call(
        bn_relu_conv_kernel,
        grid=(num_t,),
        in_specs=[
            pl.BlockSpec((tile_n, Hp, Wp, c_p), lambda i: (i, 0, 0, 0)),
            pl.BlockSpec((1, c_p), lambda i: (0, 0)),
            pl.BlockSpec((1, c_p), lambda i: (0, 0)),
            pl.BlockSpec((9 * c_p, c_p), lambda i: (0, 0)),
        ],
        out_specs=(
            pl.BlockSpec((tile_n, Hp, Wp, c_p), lambda i: (i, 0, 0, 0)),
            pl.BlockSpec((1, 2, c_p), lambda i: (i, 0, 0)),
        ),
        out_shape=(
            jax.ShapeDtypeStruct((N, Hp, Wp, c_p), jnp.float32),
            jax.ShapeDtypeStruct((num_t, 2, c_p), jnp.float32),
        ),
        scratch_shapes=[
            pltpu.VMEM((tile_n, Hp + 2, Wp + 2, c_p), jnp.float32),
            pltpu.VMEM((tile_n, Hp, Wp, 9 * c_p), jnp.float32),
        ],
        compiler_params=cparams,
    )(y1, sc1, sh1, w2p)

    sc2, sh2 = _finalize_bn(st2, g2, be2, count, c_p)

    # ---- pass 3: BN2 + ReLU ----------------------------------------------
    out = pl.pallas_call(
        bn_relu_kernel,
        grid=(num_t,),
        in_specs=[
            pl.BlockSpec((tile_n, Hp, Wp, c_p), lambda i: (i, 0, 0, 0)),
            pl.BlockSpec((1, c_p), lambda i: (0, 0)),
            pl.BlockSpec((1, c_p), lambda i: (0, 0)),
        ],
        out_specs=pl.BlockSpec((tile_n, Hp, Wp, c_p), lambda i: (i, 0, 0, 0)),
        out_shape=jax.ShapeDtypeStruct((N, Hp, Wp, c_p), jnp.float32),
        compiler_params=cparams,
    )(y2, sc2, sh2)

    out = out[..., :Cout]                      # drop lane padding
    return jnp.transpose(out, (0, 3, 1, 2))    # back to NCHW


# --------------------------------------------------------------------------
# parameters (PyTorch-style shapes) and pure-JAX reference
# --------------------------------------------------------------------------
def make_params(key, cin, cout):
    ks = jax.random.split(key, 8)
    w1 = 0.1 * jax.random.normal(ks[0], (cout, cin, 3, 3), jnp.float32)
    b1 = 0.05 * jax.random.normal(ks[1], (cout,), jnp.float32)
    g1 = 1.0 + 0.1 * jax.random.normal(ks[2], (cout,), jnp.float32)
    be1 = 0.1 * jax.random.normal(ks[3], (cout,), jnp.float32)
    w2 = 0.1 * jax.random.normal(ks[4], (cout, cout, 3, 3), jnp.float32)
    b2 = 0.05 * jax.random.normal(ks[5], (cout,), jnp.float32)
    g2 = 1.0 + 0.1 * jax.random.normal(ks[6], (cout,), jnp.float32)
    be2 = 0.1 * jax.random.normal(ks[7], (cout,), jnp.float32)
    return w1, b1, g1, be1, w2, b2, g2, be2


def reference(x_nchw, w1, b1, g1, be1, w2, b2, g2, be2):
    x = jnp.transpose(x_nchw, (0, 2, 3, 1))  # NHWC
    x = jax.lax.reduce_window(x, -jnp.inf, jax.lax.max,
                              (1, 2, 2, 1), (1, 2, 2, 1), 'VALID')

    def conv_bn_relu(h, w, b, g, be):
        kh = jnp.transpose(w, (2, 3, 1, 0))   # OIHW -> HWIO
        y = jax.lax.conv_general_dilated(
            h, kh, window_strides=(1, 1), padding='SAME',
            dimension_numbers=('NHWC', 'HWIO', 'NHWC'))
        y = y + b.reshape(1, 1, 1, -1)
        m = jnp.mean(y, axis=(0, 1, 2), keepdims=True)
        v = jnp.mean((y - m) ** 2, axis=(0, 1, 2), keepdims=True)
        y = (y - m) * jax.lax.rsqrt(v + EPS) * g.reshape(1, 1, 1, -1) \
            + be.reshape(1, 1, 1, -1)
        return jnp.maximum(y, 0.0)

    h = conv_bn_relu(x, w1, b1, g1, be1)
    h = conv_bn_relu(h, w2, b2, g2, be2)
    return jnp.transpose(h, (0, 3, 1, 2))


if __name__ == "__main__":
    key = jax.random.PRNGKey(0)
    kx, kp = jax.random.split(key)

    N, Cin, H, W = 2, 4, 16, 16
    Cout = 8
    x = jax.random.normal(kx, (N, Cin, H, W), jnp.float32)
    params = make_params(kp, Cin, Cout)

    out = down_forward(x, *params)
    out = jax.block_until_ready(out)
    assert out.shape == (N, Cout, H // 2, W // 2), out.shape

    ref = reference(x, *params)
    err = float(jnp.max(jnp.abs(out - ref)))
    assert err < 2e-3, f"max abs err {err}"

    print("KERNEL_OK")
</pallas_src>

<mosaic_0001>
module attributes {stable_mosaic.version = 11 : i64} {
  func.func @pool_conv1_kernel(%arg0: i32, %arg1: memref<1x16x16x128xf32, #tpu.memory_space<vmem>>, %arg2: memref<1152x128xf32, #tpu.memory_space<vmem>>, %arg3: memref<1x8x8x128xf32, #tpu.memory_space<vmem>>, %arg4: memref<1x2x128xf32, #tpu.memory_space<vmem>>, %arg5: memref<1x10x10x128xf32, #tpu.memory_space<vmem>>, %arg6: memref<1x8x8x1152xf32, #tpu.memory_space<vmem>>) attributes {dimension_semantics = [#tpu.dimension_semantics<parallel>], iteration_bounds = array<i64: 2>, scalar_prefetch = 0 : i64, scratch_operands = 2 : i64, tpu.core_type = #tpu.core_type<tc>, window_params = [{transform_indices = @transform_0, window_bounds = array<i64: 1, 16, 16, 128>}, {pipeline_mode = #tpu.pipeline_mode<synchronous>, transform_indices = @transform_1, window_bounds = array<i64: 1152, 128>}, {transform_indices = @transform_2, window_bounds = array<i64: 1, 8, 8, 128>}, {transform_indices = @transform_3, window_bounds = array<i64: 1, 2, 128>}]} {
    %c0 = arith.constant 0 : index
    %c0_0 = arith.constant 0 : index
    %c0_1 = arith.constant 0 : index
    %c0_2 = arith.constant 0 : index
    %0 = tpu.strided_load %arg1[%c0, %c0_0, %c0_1, %c0_2] {strides = array<i32: 1, 1, 2, 1>} : memref<1x16x16x128xf32, #tpu.memory_space<vmem>>, vector<1x16x8x128xf32>
    %c0_3 = arith.constant 0 : index
    %c0_4 = arith.constant 0 : index
    %c1 = arith.constant 1 : index
    %c0_5 = arith.constant 0 : index
    %1 = tpu.strided_load %arg1[%c0_3, %c0_4, %c1, %c0_5] {strides = array<i32: 1, 1, 2, 1>} : memref<1x16x16x128xf32, #tpu.memory_space<vmem>>, vector<1x16x8x128xf32>
    %2 = arith.maximumf %0, %1 : vector<1x16x8x128xf32>
    %3 = vector.shape_cast %2 : vector<1x16x8x128xf32> to vector<1x8x2x8x128xf32>
    %cst = arith.constant dense<0xFF800000> : vector<1x8x8x128xf32>
    %4 = vector.multi_reduction <maximumf>, %3, %cst [2] : vector<1x8x2x8x128xf32> to vector<1x8x8x128xf32>
    %cst_6 = arith.constant 0.000000e+00 : f32
    %5 = vector.broadcast %cst_6 : f32 to vector<1x1x10x128xf32>
    %cst_7 = arith.constant 0.000000e+00 : f32
    %6 = vector.broadcast %cst_7 : f32 to vector<1x8x1x128xf32>
    %c0_8 = arith.constant 0 : index
    %c0_9 = arith.constant 0 : index
    %c0_10 = arith.constant 0 : index
    %c0_11 = arith.constant 0 : index
    %7 = vector.load %arg5[%c0_8, %c0_9, %c0_10, %c0_11] : memref<1x10x10x128xf32, #tpu.memory_space<vmem>>, vector<1x1x10x128xf32>
    tpu.vector_store %arg5[%c0_8, %c0_9, %c0_10, %c0_11], %5 {strides = array<i32>} : memref<1x10x10x128xf32, #tpu.memory_space<vmem>>, vector<1x1x10x128xf32>,
    %c0_12 = arith.constant 0 : index
    %c9 = arith.constant 9 : index
    %c0_13 = arith.constant 0 : index
    %c0_14 = arith.constant 0 : index
    %8 = vector.load %arg5[%c0_12, %c9, %c0_13, %c0_14] : memref<1x10x10x128xf32, #tpu.memory_space<vmem>>, vector<1x1x10x128xf32>
    tpu.vector_store %arg5[%c0_12, %c9, %c0_13, %c0_14], %5 {strides = array<i32>} : memref<1x10x10x128xf32, #tpu.memory_space<vmem>>, vector<1x1x10x128xf32>,
    %c0_15 = arith.constant 0 : index
    %c1_16 = arith.constant 1 : index
    %c0_17 = arith.constant 0 : index
    %c0_18 = arith.constant 0 : index
    %9 = vector.load %arg5[%c0_15, %c1_16, %c0_17, %c0_18] : memref<1x10x10x128xf32, #tpu.memory_space<vmem>>, vector<1x8x1x128xf32>
    tpu.vector_store %arg5[%c0_15, %c1_16, %c0_17, %c0_18], %6 {strides = array<i32>} : memref<1x10x10x128xf32, #tpu.memory_space<vmem>>, vector<1x8x1x128xf32>,
    %c0_19 = arith.constant 0 : index
    %c1_20 = arith.constant 1 : index
    %c9_21 = arith.constant 9 : index
    %c0_22 = arith.constant 0 : index
    %10 = vector.load %arg5[%c0_19, %c1_20, %c9_21, %c0_22] : memref<1x10x10x128xf32, #tpu.memory_space<vmem>>, vector<1x8x1x128xf32>
    tpu.vector_store %arg5[%c0_19, %c1_20, %c9_21, %c0_22], %6 {strides = array<i32>} : memref<1x10x10x128xf32, #tpu.memory_space<vmem>>, vector<1x8x1x128xf32>,
    %c0_23 = arith.constant 0 : index
    %c1_24 = arith.constant 1 : index
    %c1_25 = arith.constant 1 : index
    %c0_26 = arith.constant 0 : index
    %11 = vector.load %arg5[%c0_23, %c1_24, %c1_25, %c0_26] : memref<1x10x10x128xf32, #tpu.memory_space<vmem>>, vector<1x8x8x128xf32>
    tpu.vector_store %arg5[%c0_23, %c1_24, %c1_25, %c0_26], %4 {strides = array<i32>} : memref<1x10x10x128xf32, #tpu.memory_space<vmem>>, vector<1x8x8x128xf32>,
    %c0_27 = arith.constant 0 : index
    %c0_28 = arith.constant 0 : index
    %c0_29 = arith.constant 0 : index
    %c0_30 = arith.constant 0 : index
    %12 = vector.load %arg5[%c0_27, %c0_28, %c0_29, %c0_30] : memref<1x10x10x128xf32, #tpu.memory_space<vmem>>, vector<1x8x8x128xf32>
    %c0_31 = arith.constant 0 : index
    %c0_32 = arith.constant 0 : index
    %c0_33 = arith.constant 0 : index
    %c0_34 = arith.constant 0 : index
    %13 = vector.load %arg6[%c0_31, %c0_32, %c0_33, %c0_34] : memref<1x8x8x1152xf32, #tpu.memory_space<vmem>>, vector<1x8x8x128xf32>
    tpu.vector_store %arg6[%c0_31, %c0_32, %c0_33, %c0_34], %12 {strides = array<i32>} : memref<1x8x8x1152xf32, #tpu.memory_space<vmem>>, vector<1x8x8x128xf32>,
    %c0_35 = arith.constant 0 : index
    %c0_36 = arith.constant 0 : index
    %c1_37 = arith.constant 1 : index
    %c0_38 = arith.constant 0 : index
    %14 = vector.load %arg5[%c0_35, %c0_36, %c1_37, %c0_38] : memref<1x10x10x128xf32, #tpu.memory_space<vmem>>, vector<1x8x8x128xf32>
    %c0_39 = arith.constant 0 : index
    %c0_40 = arith.constant 0 : index
    %c0_41 = arith.constant 0 : index
    %c128 = arith.constant 128 : index
    %15 = vector.load %arg6[%c0_39, %c0_40, %c0_41, %c128] : memref<1x8x8x1152xf32, #tpu.memory_space<vmem>>, vector<1x8x8x128xf32>
    tpu.vector_store %arg6[%c0_39, %c0_40, %c0_41, %c128], %14 {strides = array<i32>} : memref<1x8x8x1152xf32, #tpu.memory_space<vmem>>, vector<1x8x8x128xf32>,
    %c0_42 = arith.constant 0 : index
    %c0_43 = arith.constant 0 : index
    %c2 = arith.constant 2 : index
    %c0_44 = arith.constant 0 : index
    %16 = vector.load %arg5[%c0_42, %c0_43, %c2, %c0_44] : memref<1x10x10x128xf32, #tpu.memory_space<vmem>>, vector<1x8x8x128xf32>
    %c0_45 = arith.constant 0 : index
    %c0_46 = arith.constant 0 : index
    %c0_47 = arith.constant 0 : index
    %c256 = arith.constant 256 : index
    %17 = vector.load %arg6[%c0_45, %c0_46, %c0_47, %c256] : memref<1x8x8x1152xf32, #tpu.memory_space<vmem>>, vector<1x8x8x128xf32>
    tpu.vector_store %arg6[%c0_45, %c0_46, %c0_47, %c256], %16 {strides = array<i32>} : memref<1x8x8x1152xf32, #tpu.memory_space<vmem>>, vector<1x8x8x128xf32>,
    %c0_48 = arith.constant 0 : index
    %c1_49 = arith.constant 1 : index
    %c0_50 = arith.constant 0 : index
    %c0_51 = arith.constant 0 : index
    %18 = vector.load %arg5[%c0_48, %c1_49, %c0_50, %c0_51] : memref<1x10x10x128xf32, #tpu.memory_space<vmem>>, vector<1x8x8x128xf32>
    %c0_52 = arith.constant 0 : index
    %c0_53 = arith.constant 0 : index
    %c0_54 = arith.constant 0 : index
    %c384 = arith.constant 384 : index
    %19 = vector.load %arg6[%c0_52, %c0_53, %c0_54, %c384] : memref<1x8x8x1152xf32, #tpu.memory_space<vmem>>, vector<1x8x8x128xf32>
    tpu.vector_store %arg6[%c0_52, %c0_53, %c0_54, %c384], %18 {strides = array<i32>} : memref<1x8x8x1152xf32, #tpu.memory_space<vmem>>, vector<1x8x8x128xf32>,
    %c0_55 = arith.constant 0 : index
    %c1_56 = arith.constant 1 : index
    %c1_57 = arith.constant 1 : index
    %c0_58 = arith.constant 0 : index
    %20 = vector.load %arg5[%c0_55, %c1_56, %c1_57, %c0_58] : memref<1x10x10x128xf32, #tpu.memory_space<vmem>>, vector<1x8x8x128xf32>
    %c0_59 = arith.constant 0 : index
    %c0_60 = arith.constant 0 : index
    %c0_61 = arith.constant 0 : index
    %c512 = arith.constant 512 : index
    %21 = vector.load %arg6[%c0_59, %c0_60, %c0_61, %c512] : memref<1x8x8x1152xf32, #tpu.memory_space<vmem>>, vector<1x8x8x128xf32>
    tpu.vector_store %arg6[%c0_59, %c0_60, %c0_61, %c512], %20 {strides = array<i32>} : memref<1x8x8x1152xf32, #tpu.memory_space<vmem>>, vector<1x8x8x128xf32>,
    %c0_62 = arith.constant 0 : index
    %c1_63 = arith.constant 1 : index
    %c2_64 = arith.constant 2 : index
    %c0_65 = arith.constant 0 : index
    %22 = vector.load %arg5[%c0_62, %c1_63, %c2_64, %c0_65] : memref<1x10x10x128xf32, #tpu.memory_space<vmem>>, vector<1x8x8x128xf32>
    %c0_66 = arith.constant 0 : index
    %c0_67 = arith.constant 0 : index
    %c0_68 = arith.constant 0 : index
    %c640 = arith.constant 640 : index
    %23 = vector.load %arg6[%c0_66, %c0_67, %c0_68, %c640] : memref<1x8x8x1152xf32, #tpu.memory_space<vmem>>, vector<1x8x8x128xf32>
    tpu.vector_store %arg6[%c0_66, %c0_67, %c0_68, %c640], %22 {strides = array<i32>} : memref<1x8x8x1152xf32, #tpu.memory_space<vmem>>, vector<1x8x8x128xf32>,
    %c0_69 = arith.constant 0 : index
    %c2_70 = arith.constant 2 : index
    %c0_71 = arith.constant 0 : index
    %c0_72 = arith.constant 0 : index
    %24 = vector.load %arg5[%c0_69, %c2_70, %c0_71, %c0_72] : memref<1x10x10x128xf32, #tpu.memory_space<vmem>>, vector<1x8x8x128xf32>
    %c0_73 = arith.constant 0 : index
    %c0_74 = arith.constant 0 : index
    %c0_75 = arith.constant 0 : index
    %c768 = arith.constant 768 : index
    %25 = vector.load %arg6[%c0_73, %c0_74, %c0_75, %c768] : memref<1x8x8x1152xf32, #tpu.memory_space<vmem>>, vector<1x8x8x128xf32>
    tpu.vector_store %arg6[%c0_73, %c0_74, %c0_75, %c768], %24 {strides = array<i32>} : memref<1x8x8x1152xf32, #tpu.memory_space<vmem>>, vector<1x8x8x128xf32>,
    %c0_76 = arith.constant 0 : index
    %c2_77 = arith.constant 2 : index
    %c1_78 = arith.constant 1 : index
    %c0_79 = arith.constant 0 : index
    %26 = vector.load %arg5[%c0_76, %c2_77, %c1_78, %c0_79] : memref<1x10x10x128xf32, #tpu.memory_space<vmem>>, vector<1x8x8x128xf32>
    %c0_80 = arith.constant 0 : index
    %c0_81 = arith.constant 0 : index
    %c0_82 = arith.constant 0 : index
    %c896 = arith.constant 896 : index
    %27 = vector.load %arg6[%c0_80, %c0_81, %c0_82, %c896] : memref<1x8x8x1152xf32, #tpu.memory_space<vmem>>, vector<1x8x8x128xf32>
    tpu.vector_store %arg6[%c0_80, %c0_81, %c0_82, %c896], %26 {strides = array<i32>} : memref<1x8x8x1152xf32, #tpu.memory_space<vmem>>, vector<1x8x8x128xf32>,
    %c0_83 = arith.constant 0 : index
    %c2_84 = arith.constant 2 : index
    %c2_85 = arith.constant 2 : index
    %c0_86 = arith.constant 0 : index
    %28 = vector.load %arg5[%c0_83, %c2_84, %c2_85, %c0_86] : memref<1x10x10x128xf32, #tpu.memory_space<vmem>>, vector<1x8x8x128xf32>
    %c0_87 = arith.constant 0 : index
    %c0_88 = arith.constant 0 : index
    %c0_89 = arith.constant 0 : index
    %c1024 = arith.constant 1024 : index
    %29 = vector.load %arg6[%c0_87, %c0_88, %c0_89, %c1024] : memref<1x8x8x1152xf32, #tpu.memory_space<vmem>>, vector<1x8x8x128xf32>
    tpu.vector_store %arg6[%c0_87, %c0_88, %c0_89, %c1024], %28 {strides = array<i32>} : memref<1x8x8x1152xf32, #tpu.memory_space<vmem>>, vector<1x8x8x128xf32>,
    %c0_90 = arith.constant 0 : index
    %c0_91 = arith.constant 0 : index
    %c0_92 = arith.constant 0 : index
    %c0_93 = arith.constant 0 : index
    %30 = vector.load %arg6[%c0_90, %c0_91, %c0_92, %c0_93] : memref<1x8x8x1152xf32, #tpu.memory_space<vmem>>, vector<1x8x8x1152xf32>
    %31 = vector.shape_cast %30 : vector<1x8x8x1152xf32> to vector<64x1152xf32>
    %c0_94 = arith.constant 0 : index
    %c0_95 = arith.constant 0 : index
    %32 = vector.load %arg2[%c0_94, %c0_95] : memref<1152x128xf32, #tpu.memory_space<vmem>>, vector<1152x128xf32>
    %cst_96 = arith.constant dense<0.000000e+00> : vector<64x128xf32>
    %33 = tpu.matmul %31, %32, %cst_96 {dimension_numbers = #tpu.dot_dimension_numbers<[1], [0], [0], [1], [0, 0, 1, 1], [], []>} : vector<64x1152xf32>, vector<1152x128xf32>, vector<64x128xf32> -> vector<64x128xf32>
    %34 = vector.shape_cast %33 : vector<64x128xf32> to vector<1x8x8x128xf32>
    %c0_97 = arith.constant 0 : index
    %c0_98 = arith.constant 0 : index
    %c0_99 = arith.constant 0 : index
    %c0_100 = arith.constant 0 : index
    %35 = vector.load %arg3[%c0_97, %c0_98, %c0_99, %c0_100] : memref<1x8x8x128xf32, #tpu.memory_space<vmem>>, vector<1x8x8x128xf32>
    tpu.vector_store %arg3[%c0_97, %c0_98, %c0_99, %c0_100], %34 {strides = array<i32>} : memref<1x8x8x128xf32, #tpu.memory_space<vmem>>, vector<1x8x8x128xf32>,
    %cst_101 = arith.constant dense<0.000000e+00> : vector<128xf32>
    %36 = vector.multi_reduction <add>, %33, %cst_101 [0] : vector<64x128xf32> to vector<128xf32>
    %37 = vector.shape_cast %36 : vector<128xf32> to vector<1x128xf32>
    %38 = arith.mulf %33, %33 : vector<64x128xf32>
    %cst_102 = arith.constant dense<0.000000e+00> : vector<128xf32>
    %39 = vector.multi_reduction <add>, %38, %cst_102 [0] : vector<64x128xf32> to vector<128xf32>
    %40 = vector.shape_cast %39 : vector<128xf32> to vector<1x128xf32>
    %41 = tpu.concatenate %37, %40 in 0 : vector<1x128xf32>, vector<1x128xf32> -> vector<2x128xf32>
    %42 = vector.shape_cast %41 : vector<2x128xf32> to vector<1x2x128xf32>
    %c0_103 = arith.constant 0 : index
    %c0_104 = arith.constant 0 : index
    %c0_105 = arith.constant 0 : index
    %43 = vector.load %arg4[%c0_103, %c0_104, %c0_105] : memref<1x2x128xf32, #tpu.memory_space<vmem>>, vector<1x2x128xf32>
    tpu.vector_store %arg4[%c0_103, %c0_104, %c0_105], %42 {strides = array<i32>} : memref<1x2x128xf32, #tpu.memory_space<vmem>>, vector<1x2x128xf32>,
    return
  }
  func.func @transform_0(%arg0: i32) -> (i32, i32, i32, i32) {
    %c0_i32 = arith.constant 0 : i32
    %c0_i32_0 = arith.constant 0 : i32
    %c0_i32_1 = arith.constant 0 : i32
    %c0_i32_2 = arith.constant 0 : i32
    return %arg0, %c0_i32, %c0_i32_0, %c0_i32_1 : i32, i32, i32, i32
  }
  func.func @transform_1(%arg0: i32) -> (i32, i32) {
    %c0_i32 = arith.constant 0 : i32
    %c0_i32_0 = arith.constant 0 : i32
    %c0_i32_1 = arith.constant 0 : i32
    return %c0_i32, %c0_i32_0 : i32, i32
  }
  func.func @transform_2(%arg0: i32) -> (i32, i32, i32, i32) {
    %c0_i32 = arith.constant 0 : i32
    %c0_i32_0 = arith.constant 0 : i32
    %c0_i32_1 = arith.constant 0 : i32
    %c0_i32_2 = arith.constant 0 : i32
    return %arg0, %c0_i32, %c0_i32_0, %c0_i32_1 : i32, i32, i32, i32
  }
  func.func @transform_3(%arg0: i32) -> (i32, i32, i32) {
    %c0_i32 = arith.constant 0 : i32
    %c0_i32_0 = arith.constant 0 : i32
    %c0_i32_1 = arith.constant 0 : i32
    return %arg0, %c0_i32, %c0_i32_0 : i32, i32, i32
  }
}

module attributes {stable_mosaic.version = 11 : i64} {
  func.func @bn_relu_conv_kernel(%arg0: i32, %arg1: memref<1x8x8x128xf32, #tpu.memory_space<vmem>>, %arg2: memref<1x128xf32, #tpu.memory_space<vmem>>, %arg3: memref<1x128xf32, #tpu.memory_space<vmem>>, %arg4: memref<1152x128xf32, #tpu.memory_space<vmem>>, %arg5: memref<1x8x8x128xf32, #tpu.memory_space<vmem>>, %arg6: memref<1x2x128xf32, #tpu.memory_space<vmem>>, %arg7: memref<1x10x10x128xf32, #tpu.memory_space<vmem>>, %arg8: memref<1x8x8x1152xf32, #tpu.memory_space<vmem>>) attributes {dimension_semantics = [#tpu.dimension_semantics<parallel>], iteration_bounds = array<i64: 2>, scalar_prefetch = 0 : i64, scratch_operands = 2 : i64, tpu.core_type = #tpu.core_type<tc>, window_params = [{transform_indices = @transform_0, window_bounds = array<i64: 1, 8, 8, 128>}, {pipeline_mode = #tpu.pipeline_mode<synchronous>, transform_indices = @transform_1, window_bounds = array<i64: 1, 128>}, {pipeline_mode = #tpu.pipeline_mode<synchronous>, transform_indices = @transform_2, window_bounds = array<i64: 1, 128>}, {pipeline_mode = #tpu.pipeline_mode<synchronous>, transform_indices = @transform_3, window_bounds = array<i64: 1152, 128>}, {transform_indices = @transform_4, window_bounds = array<i64: 1, 8, 8, 128>}, {transform_indices = @transform_5, window_bounds = array<i64: 1, 2, 128>}]} {
    %c0 = arith.constant 0 : index
    %c0_0 = arith.constant 0 : index
    %c0_1 = arith.constant 0 : index
    %c0_2 = arith.constant 0 : index
    %0 = vector.load %arg1[%c0, %c0_0, %c0_1, %c0_2] : memref<1x8x8x128xf32, #tpu.memory_space<vmem>>, vector<1x8x8x128xf32>
    %c0_3 = arith.constant 0 : index
    %c0_4 = arith.constant 0 : index
    %1 = vector.load %arg2[%c0_3, %c0_4] : memref<1x128xf32, #tpu.memory_space<vmem>>, vector<1x128xf32>
    %2 = vector.shape_cast %1 : vector<1x128xf32> to vector<1x1x1x128xf32>
    %3 = vector.broadcast %2 : vector<1x1x1x128xf32> to vector<1x8x8x128xf32>
    %4 = arith.mulf %0, %3 : vector<1x8x8x128xf32>
    %c0_5 = arith.constant 0 : index
    %c0_6 = arith.constant 0 : index
    %5 = vector.load %arg3[%c0_5, %c0_6] : memref<1x128xf32, #tpu.memory_space<vmem>>, vector<1x128xf32>
    %6 = vector.shape_cast %5 : vector<1x128xf32> to vector<1x1x1x128xf32>
    %7 = vector.broadcast %6 : vector<1x1x1x128xf32> to vector<1x8x8x128xf32>
    %8 = arith.addf %4, %7 : vector<1x8x8x128xf32>
    %cst = arith.constant 0.000000e+00 : f32
    %9 = vector.broadcast %cst : f32 to vector<1x8x8x128xf32>
    %10 = arith.maximumf %8, %9 : vector<1x8x8x128xf32>
    %cst_7 = arith.constant 0.000000e+00 : f32
    %11 = vector.broadcast %cst_7 : f32 to vector<1x1x10x128xf32>
    %cst_8 = arith.constant 0.000000e+00 : f32
    %12 = vector.broadcast %cst_8 : f32 to vector<1x8x1x128xf32>
    %c0_9 = arith.constant 0 : index
    %c0_10 = arith.constant 0 : index
    %c0_11 = arith.constant 0 : index
    %c0_12 = arith.constant 0 : index
    %13 = vector.load %arg7[%c0_9, %c0_10, %c0_11, %c0_12] : memref<1x10x10x128xf32, #tpu.memory_space<vmem>>, vector<1x1x10x128xf32>
    tpu.vector_store %arg7[%c0_9, %c0_10, %c0_11, %c0_12], %11 {strides = array<i32>} : memref<1x10x10x128xf32, #tpu.memory_space<vmem>>, vector<1x1x10x128xf32>,
    %c0_13 = arith.constant 0 : index
    %c9 = arith.constant 9 : index
    %c0_14 = arith.constant 0 : index
    %c0_15 = arith.constant 0 : index
    %14 = vector.load %arg7[%c0_13, %c9, %c0_14, %c0_15] : memref<1x10x10x128xf32, #tpu.memory_space<vmem>>, vector<1x1x10x128xf32>
    tpu.vector_store %arg7[%c0_13, %c9, %c0_14, %c0_15], %11 {strides = array<i32>} : memref<1x10x10x128xf32, #tpu.memory_space<vmem>>, vector<1x1x10x128xf32>,
    %c0_16 = arith.constant 0 : index
    %c1 = arith.constant 1 : index
    %c0_17 = arith.constant 0 : index
    %c0_18 = arith.constant 0 : index
    %15 = vector.load %arg7[%c0_16, %c1, %c0_17, %c0_18] : memref<1x10x10x128xf32, #tpu.memory_space<vmem>>, vector<1x8x1x128xf32>
    tpu.vector_store %arg7[%c0_16, %c1, %c0_17, %c0_18], %12 {strides = array<i32>} : memref<1x10x10x128xf32, #tpu.memory_space<vmem>>, vector<1x8x1x128xf32>,
    %c0_19 = arith.constant 0 : index
    %c1_20 = arith.constant 1 : index
    %c9_21 = arith.constant 9 : index
    %c0_22 = arith.constant 0 : index
    %16 = vector.load %arg7[%c0_19, %c1_20, %c9_21, %c0_22] : memref<1x10x10x128xf32, #tpu.memory_space<vmem>>, vector<1x8x1x128xf32>
    tpu.vector_store %arg7[%c0_19, %c1_20, %c9_21, %c0_22], %12 {strides = array<i32>} : memref<1x10x10x128xf32, #tpu.memory_space<vmem>>, vector<1x8x1x128xf32>,
    %c0_23 = arith.constant 0 : index
    %c1_24 = arith.constant 1 : index
    %c1_25 = arith.constant 1 : index
    %c0_26 = arith.constant 0 : index
    %17 = vector.load %arg7[%c0_23, %c1_24, %c1_25, %c0_26] : memref<1x10x10x128xf32, #tpu.memory_space<vmem>>, vector<1x8x8x128xf32>
    tpu.vector_store %arg7[%c0_23, %c1_24, %c1_25, %c0_26], %10 {strides = array<i32>} : memref<1x10x10x128xf32, #tpu.memory_space<vmem>>, vector<1x8x8x128xf32>,
    %c0_27 = arith.constant 0 : index
    %c0_28 = arith.constant 0 : index
    %c0_29 = arith.constant 0 : index
    %c0_30 = arith.constant 0 : index
    %18 = vector.load %arg7[%c0_27, %c0_28, %c0_29, %c0_30] : memref<1x10x10x128xf32, #tpu.memory_space<vmem>>, vector<1x8x8x128xf32>
    %c0_31 = arith.constant 0 : index
    %c0_32 = arith.constant 0 : index
    %c0_33 = arith.constant 0 : index
    %c0_34 = arith.constant 0 : index
    %19 = vector.load %arg8[%c0_31, %c0_32, %c0_33, %c0_34] : memref<1x8x8x1152xf32, #tpu.memory_space<vmem>>, vector<1x8x8x128xf32>
    tpu.vector_store %arg8[%c0_31, %c0_32, %c0_33, %c0_34], %18 {strides = array<i32>} : memref<1x8x8x1152xf32, #tpu.memory_space<vmem>>, vector<1x8x8x128xf32>,
    %c0_35 = arith.constant 0 : index
    %c0_36 = arith.constant 0 : index
    %c1_37 = arith.constant 1 : index
    %c0_38 = arith.constant 0 : index
    %20 = vector.load %arg7[%c0_35, %c0_36, %c1_37, %c0_38] : memref<1x10x10x128xf32, #tpu.memory_space<vmem>>, vector<1x8x8x128xf32>
    %c0_39 = arith.constant 0 : index
    %c0_40 = arith.constant 0 : index
    %c0_41 = arith.constant 0 : index
    %c128 = arith.constant 128 : index
    %21 = vector.load %arg8[%c0_39, %c0_40, %c0_41, %c128] : memref<1x8x8x1152xf32, #tpu.memory_space<vmem>>, vector<1x8x8x128xf32>
    tpu.vector_store %arg8[%c0_39, %c0_40, %c0_41, %c128], %20 {strides = array<i32>} : memref<1x8x8x1152xf32, #tpu.memory_space<vmem>>, vector<1x8x8x128xf32>,
    %c0_42 = arith.constant 0 : index
    %c0_43 = arith.constant 0 : index
    %c2 = arith.constant 2 : index
    %c0_44 = arith.constant 0 : index
    %22 = vector.load %arg7[%c0_42, %c0_43, %c2, %c0_44] : memref<1x10x10x128xf32, #tpu.memory_space<vmem>>, vector<1x8x8x128xf32>
    %c0_45 = arith.constant 0 : index
    %c0_46 = arith.constant 0 : index
    %c0_47 = arith.constant 0 : index
    %c256 = arith.constant 256 : index
    %23 = vector.load %arg8[%c0_45, %c0_46, %c0_47, %c256] : memref<1x8x8x1152xf32, #tpu.memory_space<vmem>>, vector<1x8x8x128xf32>
    tpu.vector_store %arg8[%c0_45, %c0_46, %c0_47, %c256], %22 {strides = array<i32>} : memref<1x8x8x1152xf32, #tpu.memory_space<vmem>>, vector<1x8x8x128xf32>,
    %c0_48 = arith.constant 0 : index
    %c1_49 = arith.constant 1 : index
    %c0_50 = arith.constant 0 : index
    %c0_51 = arith.constant 0 : index
    %24 = vector.load %arg7[%c0_48, %c1_49, %c0_50, %c0_51] : memref<1x10x10x128xf32, #tpu.memory_space<vmem>>, vector<1x8x8x128xf32>
    %c0_52 = arith.constant 0 : index
    %c0_53 = arith.constant 0 : index
    %c0_54 = arith.constant 0 : index
    %c384 = arith.constant 384 : index
    %25 = vector.load %arg8[%c0_52, %c0_53, %c0_54, %c384] : memref<1x8x8x1152xf32, #tpu.memory_space<vmem>>, vector<1x8x8x128xf32>
    tpu.vector_store %arg8[%c0_52, %c0_53, %c0_54, %c384], %24 {strides = array<i32>} : memref<1x8x8x1152xf32, #tpu.memory_space<vmem>>, vector<1x8x8x128xf32>,
    %c0_55 = arith.constant 0 : index
    %c1_56 = arith.constant 1 : index
    %c1_57 = arith.constant 1 : index
    %c0_58 = arith.constant 0 : index
    %26 = vector.load %arg7[%c0_55, %c1_56, %c1_57, %c0_58] : memref<1x10x10x128xf32, #tpu.memory_space<vmem>>, vector<1x8x8x128xf32>
    %c0_59 = arith.constant 0 : index
    %c0_60 = arith.constant 0 : index
    %c0_61 = arith.constant 0 : index
    %c512 = arith.constant 512 : index
    %27 = vector.load %arg8[%c0_59, %c0_60, %c0_61, %c512] : memref<1x8x8x1152xf32, #tpu.memory_space<vmem>>, vector<1x8x8x128xf32>
    tpu.vector_store %arg8[%c0_59, %c0_60, %c0_61, %c512], %26 {strides = array<i32>} : memref<1x8x8x1152xf32, #tpu.memory_space<vmem>>, vector<1x8x8x128xf32>,
    %c0_62 = arith.constant 0 : index
    %c1_63 = arith.constant 1 : index
    %c2_64 = arith.constant 2 : index
    %c0_65 = arith.constant 0 : index
    %28 = vector.load %arg7[%c0_62, %c1_63, %c2_64, %c0_65] : memref<1x10x10x128xf32, #tpu.memory_space<vmem>>, vector<1x8x8x128xf32>
    %c0_66 = arith.constant 0 : index
    %c0_67 = arith.constant 0 : index
    %c0_68 = arith.constant 0 : index
    %c640 = arith.constant 640 : index
    %29 = vector.load %arg8[%c0_66, %c0_67, %c0_68, %c640] : memref<1x8x8x1152xf32, #tpu.memory_space<vmem>>, vector<1x8x8x128xf32>
    tpu.vector_store %arg8[%c0_66, %c0_67, %c0_68, %c640], %28 {strides = array<i32>} : memref<1x8x8x1152xf32, #tpu.memory_space<vmem>>, vector<1x8x8x128xf32>,
    %c0_69 = arith.constant 0 : index
    %c2_70 = arith.constant 2 : index
    %c0_71 = arith.constant 0 : index
    %c0_72 = arith.constant 0 : index
    %30 = vector.load %arg7[%c0_69, %c2_70, %c0_71, %c0_72] : memref<1x10x10x128xf32, #tpu.memory_space<vmem>>, vector<1x8x8x128xf32>
    %c0_73 = arith.constant 0 : index
    %c0_74 = arith.constant 0 : index
    %c0_75 = arith.constant 0 : index
    %c768 = arith.constant 768 : index
    %31 = vector.load %arg8[%c0_73, %c0_74, %c0_75, %c768] : memref<1x8x8x1152xf32, #tpu.memory_space<vmem>>, vector<1x8x8x128xf32>
    tpu.vector_store %arg8[%c0_73, %c0_74, %c0_75, %c768], %30 {strides = array<i32>} : memref<1x8x8x1152xf32, #tpu.memory_space<vmem>>, vector<1x8x8x128xf32>,
    %c0_76 = arith.constant 0 : index
    %c2_77 = arith.constant 2 : index
    %c1_78 = arith.constant 1 : index
    %c0_79 = arith.constant 0 : index
    %32 = vector.load %arg7[%c0_76, %c2_77, %c1_78, %c0_79] : memref<1x10x10x128xf32, #tpu.memory_space<vmem>>, vector<1x8x8x128xf32>
    %c0_80 = arith.constant 0 : index
    %c0_81 = arith.constant 0 : index
    %c0_82 = arith.constant 0 : index
    %c896 = arith.constant 896 : index
    %33 = vector.load %arg8[%c0_80, %c0_81, %c0_82, %c896] : memref<1x8x8x1152xf32, #tpu.memory_space<vmem>>, vector<1x8x8x128xf32>
    tpu.vector_store %arg8[%c0_80, %c0_81, %c0_82, %c896], %32 {strides = array<i32>} : memref<1x8x8x1152xf32, #tpu.memory_space<vmem>>, vector<1x8x8x128xf32>,
    %c0_83 = arith.constant 0 : index
    %c2_84 = arith.constant 2 : index
    %c2_85 = arith.constant 2 : index
    %c0_86 = arith.constant 0 : index
    %34 = vector.load %arg7[%c0_83, %c2_84, %c2_85, %c0_86] : memref<1x10x10x128xf32, #tpu.memory_space<vmem>>, vector<1x8x8x128xf32>
    %c0_87 = arith.constant 0 : index
    %c0_88 = arith.constant 0 : index
    %c0_89 = arith.constant 0 : index
    %c1024 = arith.constant 1024 : index
    %35 = vector.load %arg8[%c0_87, %c0_88, %c0_89, %c1024] : memref<1x8x8x1152xf32, #tpu.memory_space<vmem>>, vector<1x8x8x128xf32>
    tpu.vector_store %arg8[%c0_87, %c0_88, %c0_89, %c1024], %34 {strides = array<i32>} : memref<1x8x8x1152xf32, #tpu.memory_space<vmem>>, vector<1x8x8x128xf32>,
    %c0_90 = arith.constant 0 : index
    %c0_91 = arith.constant 0 : index
    %c0_92 = arith.constant 0 : index
    %c0_93 = arith.constant 0 : index
    %36 = vector.load %arg8[%c0_90, %c0_91, %c0_92, %c0_93] : memref<1x8x8x1152xf32, #tpu.memory_space<vmem>>, vector<1x8x8x1152xf32>
    %37 = vector.shape_cast %36 : vector<1x8x8x1152xf32> to vector<64x1152xf32>
    %c0_94 = arith.constant 0 : index
    %c0_95 = arith.constant 0 : index
    %38 = vector.load %arg4[%c0_94, %c0_95] : memref<1152x128xf32, #tpu.memory_space<vmem>>, vector<1152x128xf32>
    %cst_96 = arith.constant dense<0.000000e+00> : vector<64x128xf32>
    %39 = tpu.matmul %37, %38, %cst_96 {dimension_numbers = #tpu.dot_dimension_numbers<[1], [0], [0], [1], [0, 0, 1, 1], [], []>} : vector<64x1152xf32>, vector<1152x128xf32>, vector<64x128xf32> -> vector<64x128xf32>
    %40 = vector.shape_cast %39 : vector<64x128xf32> to vector<1x8x8x128xf32>
    %c0_97 = arith.constant 0 : index
    %c0_98 = arith.constant 0 : index
    %c0_99 = arith.constant 0 : index
    %c0_100 = arith.constant 0 : index
    %41 = vector.load %arg5[%c0_97, %c0_98, %c0_99, %c0_100] : memref<1x8x8x128xf32, #tpu.memory_space<vmem>>, vector<1x8x8x128xf32>
    tpu.vector_store %arg5[%c0_97, %c0_98, %c0_99, %c0_100], %40 {strides = array<i32>} : memref<1x8x8x128xf32, #tpu.memory_space<vmem>>, vector<1x8x8x128xf32>,
    %cst_101 = arith.constant dense<0.000000e+00> : vector<128xf32>
    %42 = vector.multi_reduction <add>, %39, %cst_101 [0] : vector<64x128xf32> to vector<128xf32>
    %43 = vector.shape_cast %42 : vector<128xf32> to vector<1x128xf32>
    %44 = arith.mulf %39, %39 : vector<64x128xf32>
    %cst_102 = arith.constant dense<0.000000e+00> : vector<128xf32>
    %45 = vector.multi_reduction <add>, %44, %cst_102 [0] : vector<64x128xf32> to vector<128xf32>
    %46 = vector.shape_cast %45 : vector<128xf32> to vector<1x128xf32>
    %47 = tpu.concatenate %43, %46 in 0 : vector<1x128xf32>, vector<1x128xf32> -> vector<2x128xf32>
    %48 = vector.shape_cast %47 : vector<2x128xf32> to vector<1x2x128xf32>
    %c0_103 = arith.constant 0 : index
    %c0_104 = arith.constant 0 : index
    %c0_105 = arith.constant 0 : index
    %49 = vector.load %arg6[%c0_103, %c0_104, %c0_105] : memref<1x2x128xf32, #tpu.memory_space<vmem>>, vector<1x2x128xf32>
    tpu.vector_store %arg6[%c0_103, %c0_104, %c0_105], %48 {strides = array<i32>} : memref<1x2x128xf32, #tpu.memory_space<vmem>>, vector<1x2x128xf32>,
    return
  }
  func.func @transform_0(%arg0: i32) -> (i32, i32, i32, i32) {
    %c0_i32 = arith.constant 0 : i32
    %c0_i32_0 = arith.constant 0 : i32
    %c0_i32_1 = arith.constant 0 : i32
    %c0_i32_2 = arith.constant 0 : i32
    return %arg0, %c0_i32, %c0_i32_0, %c0_i32_1 : i32, i32, i32, i32
  }
  func.func @transform_1(%arg0: i32) -> (i32, i32) {
    %c0_i32 = arith.constant 0 : i32
    %c0_i32_0 = arith.constant 0 : i32
    %c0_i32_1 = arith.constant 0 : i32
    return %c0_i32, %c0_i32_0 : i32, i32
  }
  func.func @transform_2(%arg0: i32) -> (i32, i32) {
    %c0_i32 = arith.constant 0 : i32
    %c0_i32_0 = arith.constant 0 : i32
    %c0_i32_1 = arith.constant 0 : i32
    return %c0_i32, %c0_i32_0 : i32, i32
  }
  func.func @transform_3(%arg0: i32) -> (i32, i32) {
    %c0_i32 = arith.constant 0 : i32
    %c0_i32_0 = arith.constant 0 : i32
    %c0_i32_1 = arith.constant 0 : i32
    return %c0_i32, %c0_i32_0 : i32, i32
  }
  func.func @transform_4(%arg0: i32) -> (i32, i32, i32, i32) {
    %c0_i32 = arith.constant 0 : i32
    %c0_i32_0 = arith.constant 0 : i32
    %c0_i32_1 = arith.constant 0 : i32
    %c0_i32_2 = arith.constant 0 : i32
    return %arg0, %c0_i32, %c0_i32_0, %c0_i32_1 : i32, i32, i32, i32
  }
  func.func @transform_5(%arg0: i32) -> (i32, i32, i32) {
    %c0_i32 = arith.constant 0 : i32
    %c0_i32_0 = arith.constant 0 : i32
    %c0_i32_1 = arith.constant 0 : i32
    return %arg0, %c0_i32, %c0_i32_0 : i32, i32, i32
  }
}

module attributes {stable_mosaic.version = 11 : i64} {
  func.func @bn_relu_kernel(%arg0: i32, %arg1: memref<1x8x8x128xf32, #tpu.memory_space<vmem>>, %arg2: memref<1x128xf32, #tpu.memory_space<vmem>>, %arg3: memref<1x128xf32, #tpu.memory_space<vmem>>, %arg4: memref<1x8x8x128xf32, #tpu.memory_space<vmem>>) attributes {dimension_semantics = [#tpu.dimension_semantics<parallel>], iteration_bounds = array<i64: 2>, scalar_prefetch = 0 : i64, scratch_operands = 0 : i64, tpu.core_type = #tpu.core_type<tc>, window_params = [{transform_indices = @transform_0, window_bounds = array<i64: 1, 8, 8, 128>}, {pipeline_mode = #tpu.pipeline_mode<synchronous>, transform_indices = @transform_1, window_bounds = array<i64: 1, 128>}, {pipeline_mode = #tpu.pipeline_mode<synchronous>, transform_indices = @transform_2, window_bounds = array<i64: 1, 128>}, {transform_indices = @transform_3, window_bounds = array<i64: 1, 8, 8, 128>}]} {
    %c0 = arith.constant 0 : index
    %c0_0 = arith.constant 0 : index
    %c0_1 = arith.constant 0 : index
    %c0_2 = arith.constant 0 : index
    %0 = vector.load %arg1[%c0, %c0_0, %c0_1, %c0_2] : memref<1x8x8x128xf32, #tpu.memory_space<vmem>>, vector<1x8x8x128xf32>
    %c0_3 = arith.constant 0 : index
    %c0_4 = arith.constant 0 : index
    %1 = vector.load %arg2[%c0_3, %c0_4] : memref<1x128xf32, #tpu.memory_space<vmem>>, vector<1x128xf32>
    %2 = vector.shape_cast %1 : vector<1x128xf32> to vector<1x1x1x128xf32>
    %3 = vector.broadcast %2 : vector<1x1x1x128xf32> to vector<1x8x8x128xf32>
    %4 = arith.mulf %0, %3 : vector<1x8x8x128xf32>
    %c0_5 = arith.constant 0 : index
    %c0_6 = arith.constant 0 : index
    %5 = vector.load %arg3[%c0_5, %c0_6] : memref<1x128xf32, #tpu.memory_space<vmem>>, vector<1x128xf32>
    %6 = vector.shape_cast %5 : vector<1x128xf32> to vector<1x1x1x128xf32>
    %7 = vector.broadcast %6 : vector<1x1x1x128xf32> to vector<1x8x8x128xf32>
    %8 = arith.addf %4, %7 : vector<1x8x8x128xf32>
    %cst = arith.constant 0.000000e+00 : f32
    %9 = vector.broadcast %cst : f32 to vector<1x8x8x128xf32>
    %10 = arith.maximumf %8, %9 : vector<1x8x8x128xf32>
    %c0_7 = arith.constant 0 : index
    %c0_8 = arith.constant 0 : index
    %c0_9 = arith.constant 0 : index
    %c0_10 = arith.constant 0 : index
    %11 = vector.load %arg4[%c0_7, %c0_8, %c0_9, %c0_10] : memref<1x8x8x128xf32, #tpu.memory_space<vmem>>, vector<1x8x8x128xf32>
    tpu.vector_store %arg4[%c0_7, %c0_8, %c0_9, %c0_10], %10 {strides = array<i32>} : memref<1x8x8x128xf32, #tpu.memory_space<vmem>>, vector<1x8x8x128xf32>,
    return
  }
  func.func @transform_0(%arg0: i32) -> (i32, i32, i32, i32) {
    %c0_i32 = arith.constant 0 : i32
    %c0_i32_0 = arith.constant 0 : i32
    %c0_i32_1 = arith.constant 0 : i32
    %c0_i32_2 = arith.constant 0 : i32
    return %arg0, %c0_i32, %c0_i32_0, %c0_i32_1 : i32, i32, i32, i32
  }
  func.func @transform_1(%arg0: i32) -> (i32, i32) {
    %c0_i32 = arith.constant 0 : i32
    %c0_i32_0 = arith.constant 0 : i32
    %c0_i32_1 = arith.constant 0 : i32
    return %c0_i32, %c0_i32_0 : i32, i32
  }
  func.func @transform_2(%arg0: i32) -> (i32, i32) {
    %c0_i32 = arith.constant 0 : i32
    %c0_i32_0 = arith.constant 0 : i32
    %c0_i32_1 = arith.constant 0 : i32
    return %c0_i32, %c0_i32_0 : i32, i32
  }
  func.func @transform_3(%arg0: i32) -> (i32, i32, i32, i32) {
    %c0_i32 = arith.constant 0 : i32
    %c0_i32_0 = arith.constant 0 : i32
    %c0_i32_1 = arith.constant 0 : i32
    %c0_i32_2 = arith.constant 0 : i32
    return %arg0, %c0_i32, %c0_i32_0, %c0_i32_1 : i32, i32, i32, i32
  }
}

</mosaic_0001>

<llo_original>
// kernel: down_forward.5
$region0: #{down_forward.5}
  #allocation0 [shape = 'u32[]', space=smem, size = 0x4, offset = 0x4, fixed_abs, tag = 'smem constant byte address 0x4 - core index']
  #allocation1 [shape = 'u32[144,128]{1,0:T(1,128)}', space=vmem, size = 0x12000, scoped, tag = 'internal scratch']
  %s0 = inlined_call_operand.vmem [shape: f32[2,8,8,128], index: 0, kind: input, shape index: {}]
  %s1 = inlined_call_operand.vmem [shape: f32[1,128], index: 1, kind: input, shape index: {}]
  %s2 = inlined_call_operand.vmem [shape: f32[1,128], index: 2, kind: input, shape index: {}]
  %s3 = inlined_call_operand.vmem [shape: f32[2,8,8,128], index: 3, kind: output, shape index: {}]
  %s4 = sld [smem:[#allocation0]]
  $region45: #{down_forward.5} parent=0
    _
  %s6 = ssub.s32 1, %s4
  %s7 = scalar_select 0, %s6, %s4
  loop: start=0, step=1, limit=4
  $region2: #{down_forward.5} parent=0 // loop_pre_header
    _
  $region3: #{down_forward.5} parent=0 // loop_header
    %s9 = sphi 0, %s13
    %p10 = scmp.ge.s32.totalorder %s9, 4
    %s19 = sphi 0, %s21
    %s22 = sphi 0, %s19
    %s23 = sphi 0, %s22
    %s39 = sphi 0, %s23
    %s43 = sphi 0, %s43
    %s45 = sphi 0, %s43
    %s46 = sphi 0, %s45
    %s60 = sphi 0, %s46
    %s64 = sphi 0, %s64
    %s66 = sphi 0, %s64
    %s67 = sphi 0, %s66
    %s81 = sphi 0, %s67
    %s87 = sphi 0, %s89
    %s90 = sphi 0, %s87
    %s91 = sphi 0, %s90
    %s107 = sphi 0, %s91
  $region4: #{down_forward.5} parent=0 // loop_header_branch
    %12 = sbr.rel (%p10) target = $region8
  $region5: #{down_forward.5} parent=0 // loop_body
    %s14 = ssub.s32 %s9, 1
    %s15 = ssub.s32 %s9, 2
    %s16 = sadd.s32 %s9, 1
    %s17 = ssub.s32 %s9, %s16
    %p18 = scmp.eq.s32.totalorder %s17, 0
    %s20 = sadd.s32 %s19, 1
    %s21 = scalar_select %p18, %s19, %s20
    %p24 = pneg %p18
    %p25 = scmp.eq.s32.totalorder %s9, 1
    %p26 = por %p24, %p25
    %p27 = scmp.ne.s32.totalorder %s19, %s22
    %p28 = scmp.eq.s32.totalorder %s9, 0
    %p29 = por %p27, %p28
    %p30 = scmp.ne.s32.totalorder %s19, %s22
    %p31 = scmp.eq.s32.totalorder %s14, 1
    %p32 = por %p30, %p31
    %p33 = scmp.ne.s32.totalorder %s22, %s23
    %p34 = scmp.eq.s32.totalorder %s14, 0
    %p35 = por %p33, %p34
    %p36 = scmp.ne.s32.totalorder %s22, %s23
    %p37 = scmp.eq.s32.totalorder %s15, 1
    %p38 = por %p36, %p37
    %p40 = scmp.ne.s32.totalorder %s23, %s39
    %p41 = scmp.eq.s32.totalorder %s15, 0
    %p42 = por %p40, %p41
    %s44 = sadd.s32 %s43, 1
    %p47 = scmp.eq.s32.totalorder %s9, 1
    %p48 = scmp.ne.s32.totalorder %s43, %s45
    %p49 = scmp.eq.s32.totalorder %s9, 0
    %p50 = por %p48, %p49
    %p51 = scmp.ne.s32.totalorder %s43, %s45
    %p52 = scmp.eq.s32.totalorder %s14, 1
    %p53 = por %p51, %p52
    %p54 = scmp.ne.s32.totalorder %s45, %s46
    %p55 = scmp.eq.s32.totalorder %s14, 0
    %p56 = por %p54, %p55
    %p57 = scmp.ne.s32.totalorder %s45, %s46
    %p58 = scmp.eq.s32.totalorder %s15, 1
    %p59 = por %p57, %p58
    %p61 = scmp.ne.s32.totalorder %s46, %s60
    %p62 = scmp.eq.s32.totalorder %s15, 0
    %p63 = por %p61, %p62
    %s65 = sadd.s32 %s64, 1
    %p68 = scmp.eq.s32.totalorder %s9, 1
    %p69 = scmp.ne.s32.totalorder %s64, %s66
    %p70 = scmp.eq.s32.totalorder %s9, 0
    %p71 = por %p69, %p70
    %p72 = scmp.ne.s32.totalorder %s64, %s66
    %p73 = scmp.eq.s32.totalorder %s14, 1
    %p74 = por %p72, %p73
    %p75 = scmp.ne.s32.totalorder %s66, %s67
    %p76 = scmp.eq.s32.totalorder %s14, 0
    %p77 = por %p75, %p76
    %p78 = scmp.ne.s32.totalorder %s66, %s67
    %p79 = scmp.eq.s32.totalorder %s15, 1
    %p80 = por %p78, %p79
    %p82 = scmp.ne.s32.totalorder %s67, %s81
    %p83 = scmp.eq.s32.totalorder %s15, 0
    %p84 = por %p82, %p83
    %s85 = ssub.s32 %s9, %s16
    %p86 = scmp.eq.s32.totalorder %s85, 0
    %s88 = sadd.s32 %s87, 1
    %s89 = scalar_select %p86, %s87, %s88
    %p92 = pneg %p86
    %p93 = scmp.eq.s32.totalorder %s9, 1
    %p94 = por %p92, %p93
    %p95 = scmp.ne.s32.totalorder %s87, %s90
    %p96 = scmp.eq.s32.totalorder %s9, 0
    %p97 = por %p95, %p96
    %p98 = scmp.ne.s32.totalorder %s87, %s90
    %p99 = scmp.eq.s32.totalorder %s14, 1
    %p100 = por %p98, %p99
    %p101 = scmp.ne.s32.totalorder %s90, %s91
    %p102 = scmp.eq.s32.totalorder %s14, 0
    %p103 = por %p101, %p102
    %p104 = scmp.ne.s32.totalorder %s90, %s91
    %p105 = scmp.eq.s32.totalorder %s15, 1
    %p106 = por %p104, %p105
    %p108 = scmp.ne.s32.totalorder %s91, %s107
    %p109 = scmp.eq.s32.totalorder %s15, 0
    %p110 = por %p108, %p109
    %p111 = scmp.le.s32.totalorder 1, %s9
    %p112 = scmp.lt.s32.totalorder %s9, 3
    %p113 = pnand %p111, %p112
    %p114 = pneg %p113
    // Predicated region
    $region9: #{down_forward.5} parent=5 // pred_check
      _
    $region10: #{down_forward.5} parent=5 // pred_check_branch
      %116 = sbr.rel (%p113) target = $region12
    $region11: #{down_forward.5} parent=5 // pred_region
      %s117 = ssub.s32 %s9, 1
      // Predicated region
      $region13: #{down_forward.5} parent=11 // pred_check
        %p118 = pneg %p56
      $region14: #{down_forward.5} parent=11 // pred_check_branch
        %120 = sbr.rel (%p118) target = $region16
      $region15: #{down_forward.5} parent=11 // pred_region
        _
      $region16: #{down_forward.5} parent=11 // pred_fallthru
        _
      // Predicated region
      $region17: #{down_forward.5} parent=11 // pred_check
        %p121 = pneg %p77
      $region18: #{down_forward.5} parent=11 // pred_check_branch
        %123 = sbr.rel (%p121) target = $region20
      $region19: #{down_forward.5} parent=11 // pred_region
        _
      $region20: #{down_forward.5} parent=11 // pred_fallthru
        _
    $region12: #{down_forward.5} parent=5 // pred_fallthru
      _
    %p124 = scmp.lt.s32.totalorder %s9, 2
    // Predicated region
    $region21: #{down_forward.5} parent=5 // pred_check
      %p125 = pneg %p124
    $region22: #{down_forward.5} parent=5 // pred_check_branch
      %127 = sbr.rel (%p125) target = $region24
    $region23: #{down_forward.5} parent=5 // pred_region
      // Predicated region
      $region25: #{down_forward.5} parent=23 // pred_check
        %p128 = pneg %p29
      $region26: #{down_forward.5} parent=23 // pred_check_branch
        %130 = sbr.rel (%p128) target = $region28
      $region27: #{down_forward.5} parent=23 // pred_region
        %p131 = scmp.lt.s32.totalorder %s9, 1
        %s132 = scalar_select %p131, %s9, 1
        %s133 = smul.addr %s132, 8
        %s134 = smul.addr %s133, 8
        %s135 = scalar_lea.vmem %s0, %s134
      $region28: #{down_forward.5} parent=23 // pred_fallthru
        _
    $region24: #{down_forward.5} parent=5 // pred_fallthru
      _
    %p136 = scmp.le.s32.totalorder 1, %s9
    %p137 = scmp.lt.s32.totalorder %s9, 3
    %p138 = pnand %p136, %p137
    %p139 = pneg %p138
    // Predicated region
    $region29: #{down_forward.5} parent=5 // pred_check
      _
    $region30: #{down_forward.5} parent=5 // pred_check_branch
      %141 = sbr.rel (%p138) target = $region32
    $region31: #{down_forward.5} parent=5 // pred_region
      %s142 = ssub.s32 %s9, 1
      %p143 = scmp.lt.s32.totalorder %s14, 1
      %s144 = scalar_select %p143, %s14, 1
      %s145 = smul.addr %s144, 8
      %s146 = smul.addr %s145, 8
      %s147 = scalar_lea.vmem %s0, %s146
      %p148 = pneg %p35
      %p149 = pneg %p32
      %p150 = pneg %p56
      %p151 = pneg %p53
      %p152 = pneg %p77
      %p153 = pneg %p74
      %p154 = pneg %p103
      %p155 = pneg %p100
      %p156 = scmp.lt.s32.totalorder %s14, 1
      %s157 = scalar_select %p156, %s14, 1
      %s158 = smul.addr %s157, 8
      %s159 = smul.addr %s158, 8
      %s160 = scalar_lea.vmem %s3, %s159
      %p161 = scmp.lt.s32.totalorder %s14, 1
      %s162 = scalar_select %p161, %s14, 1
      %s163 = smul.addr %s162, 8
      %s164 = smul.addr %s163, 8
      %s165 = scalar_lea.vmem %s0, %s164
      %p166 = scmp.lt.s32.totalorder %s14, 1
      %s167 = scalar_select %p166, %s14, 1
      %s168 = smul.addr %s167, 8
      %s169 = smul.addr %s168, 8
      %s170 = scalar_lea.vmem %s3, %s169
      %v171 = vld [vmem:[%s165] sm:$0xff]
      %v172 = vld [vmem:[%s165 + $0x8] sm:$0xff]
      %v173 = vld [vmem:[%s165 + $0x10] sm:$0xff]
      %v174 = vld [vmem:[%s165 + $0x18] sm:$0xff]
      %v175 = vld [vmem:[%s165 + $0x20] sm:$0xff]
      %v176 = vld [vmem:[%s165 + $0x28] sm:$0xff]
      %v177 = vld [vmem:[%s165 + $0x30] sm:$0xff]
      %v178 = vld [vmem:[%s165 + $0x38] sm:$0xff]
      %v179 = vld [vmem:[%s1] sm:$0x1]
      %v181 = vlaneseq
      %v182 = vshrl.u32 %v181, 7
      %v183 = vsub.s32 0, %v182
      %v184 = vrot.slane %v179, %v183
      %v186 = vmul.f32 %v171, %v184
      %v187 = vmul.f32 %v172, %v184
      %v188 = vmul.f32 %v173, %v184
      %v189 = vmul.f32 %v174, %v184
      %v190 = vmul.f32 %v175, %v184
      %v191 = vmul.f32 %v176, %v184
      %v192 = vmul.f32 %v177, %v184
      %v193 = vmul.f32 %v178, %v184
      %v194 = vld [vmem:[%s2] sm:$0x1]
      %v196 = vlaneseq
      %v197 = vshrl.u32 %v196, 7
      %v198 = vsub.s32 0, %v197
      %v199 = vrot.slane %v194, %v198
      %v201 = vadd.f32 %v186, %v199
      %v202 = vadd.f32 %v187, %v199
      %v203 = vadd.f32 %v188, %v199
      %v204 = vadd.f32 %v189, %v199
      %v205 = vadd.f32 %v190, %v199
      %v206 = vadd.f32 %v191, %v199
      %v207 = vadd.f32 %v192, %v199
      %v208 = vadd.f32 %v193, %v199
      %v209 = vmax.f32 %v201, 0.0
      %v210 = vmax.f32 %v202, 0.0
      %v211 = vmax.f32 %v203, 0.0
      %v212 = vmax.f32 %v204, 0.0
      %v213 = vmax.f32 %v205, 0.0
      %v214 = vmax.f32 %v206, 0.0
      %v215 = vmax.f32 %v207, 0.0
      %v216 = vmax.f32 %v208, 0.0
      %217 = vst [vmem:[%s170] sm:$0xff] %v209
      %218 = vst [vmem:[%s170 + $0x8] sm:$0xff] %v210
      %219 = vst [vmem:[%s170 + $0x10] sm:$0xff] %v211
      %220 = vst [vmem:[%s170 + $0x18] sm:$0xff] %v212
      %221 = vst [vmem:[%s170 + $0x20] sm:$0xff] %v213
      %222 = vst [vmem:[%s170 + $0x28] sm:$0xff] %v214
      %223 = vst [vmem:[%s170 + $0x30] sm:$0xff] %v215
      %224 = vst [vmem:[%s170 + $0x38] sm:$0xff] %v216
      %p225 = scmp.lt.s32.totalorder %s14, 1
      %s226 = scalar_select %p225, %s14, 1
      %s227 = smul.addr %s226, 8
      %s228 = smul.addr %s227, 8
      %s229 = scalar_lea.vmem %s3, %s228
      // Predicated region
      $region33: #{down_forward.5} parent=31 // pred_check
        %p230 = pneg %p100
      $region34: #{down_forward.5} parent=31 // pred_check_branch
        %232 = sbr.rel (%p230) target = $region36
      $region35: #{down_forward.5} parent=31 // pred_region
        _
      $region36: #{down_forward.5} parent=31 // pred_fallthru
        _
    $region32: #{down_forward.5} parent=5 // pred_fallthru
      _
    %p233 = scmp.le.s32.totalorder 2, %s9
    // Predicated region
    $region37: #{down_forward.5} parent=5 // pred_check
      %p234 = pneg %p233
    $region38: #{down_forward.5} parent=5 // pred_check_branch
      %236 = sbr.rel (%p234) target = $region40
    $region39: #{down_forward.5} parent=5 // pred_region
      %s237 = ssub.s32 %s9, 2
      // Predicated region
      $region41: #{down_forward.5} parent=39 // pred_check
        %p238 = pneg %p106
      $region42: #{down_forward.5} parent=39 // pred_check_branch
        %240 = sbr.rel (%p238) target = $region44
      $region43: #{down_forward.5} parent=39 // pred_region
        %p241 = scmp.lt.s32.totalorder %s15, 1
        %s242 = scalar_select %p241, %s15, 1
        %s243 = smul.addr %s242, 8
        %s244 = smul.addr %s243, 8
        %s245 = scalar_lea.vmem %s3, %s244
      $region44: #{down_forward.5} parent=39 // pred_fallthru
        _
    $region40: #{down_forward.5} parent=5 // pred_fallthru
      _
  $region6: #{down_forward.5} parent=0 // loop_footer
    %s13 = sadd.s32 1, %s9
  $region7: #{down_forward.5} parent=0 // loop_footer_branch
    %8 = sbr.rel target = $region3
  $region8: #{down_forward.5} parent=0 // loop_exit
    _

// kernel: down_forward.3
$region0: #{down_forward.3}
  #allocation0 [shape = 'u32[]', space=smem, size = 0x4, offset = 0x4, fixed_abs, tag = 'smem constant byte address 0x4 - core index']
  #allocation1 [shape = 'u32[144,128]{1,0:T(1,128)}', space=vmem, size = 0x12000, scoped, tag = 'internal scratch']
  #allocation2 [shape = 'f32[1,10,10,128]{3,2,1,0:T(8,128)}', space=vmem, size = 0x14000, scoped, tag = 'scratch operand']
  #allocation3 [shape = 'f32[1,8,8,1152]{3,2,1,0:T(8,128)}', space=vmem, size = 0x48000, scoped, tag = 'scratch operand']
  %s0 = inlined_call_operand.vmem [shape: f32[2,16,16,128], index: 0, kind: input, shape index: {}]
  %s1 = inlined_call_operand.vmem [shape: f32[1152,128], index: 1, kind: input, shape index: {}]
  %s2 = inlined_call_operand.vmem [shape: f32[2,8,8,128], index: 2, kind: output, shape index: {0}]
  %s3 = inlined_call_operand.vmem [shape: f32[2,2,128], index: 3, kind: output, shape index: {1}]
  %4 = xla_tuple %s2, %s3
  %s5 = sld [smem:[#allocation0]]
  $region49: #{down_forward.3} parent=0
    _
  %s7 = ssub.s32 1, %s5
  %s8 = scalar_select 0, %s7, %s5
  loop: start=0, step=1, limit=4
  $region2: #{down_forward.3} parent=0 // loop_pre_header
    _
  $region3: #{down_forward.3} parent=0 // loop_header
    %s10 = sphi 0, %s14
    %p11 = scmp.ge.s32.totalorder %s10, 4
    %s20 = sphi 0, %s22
    %s23 = sphi 0, %s20
    %s24 = sphi 0, %s23
    %s40 = sphi 0, %s24
    %s44 = sphi 0, %s44
    %s46 = sphi 0, %s44
    %s47 = sphi 0, %s46
    %s61 = sphi 0, %s47
    %s67 = sphi 0, %s69
    %s70 = sphi 0, %s67
    %s71 = sphi 0, %s70
    %s87 = sphi 0, %s71
    %s93 = sphi 0, %s95
    %s96 = sphi 0, %s93
    %s97 = sphi 0, %s96
    %s113 = sphi 0, %s97
  $region4: #{down_forward.3} parent=0 // loop_header_branch
    %13 = sbr.rel (%p11) target = $region8
  $region5: #{down_forward.3} parent=0 // loop_body
    %s15 = ssub.s32 %s10, 1
    %s16 = ssub.s32 %s10, 2
    %s17 = sadd.s32 %s10, 1
    %s18 = ssub.s32 %s10, %s17
    %p19 = scmp.eq.s32.totalorder %s18, 0
    %s21 = sadd.s32 %s20, 1
    %s22 = scalar_select %p19, %s20, %s21
    %p25 = pneg %p19
    %p26 = scmp.eq.s32.totalorder %s10, 1
    %p27 = por %p25, %p26
    %p28 = scmp.ne.s32.totalorder %s20, %s23
    %p29 = scmp.eq.s32.totalorder %s10, 0
    %p30 = por %p28, %p29
    %p31 = scmp.ne.s32.totalorder %s20, %s23
    %p32 = scmp.eq.s32.totalorder %s15, 1
    %p33 = por %p31, %p32
    %p34 = scmp.ne.s32.totalorder %s23, %s24
    %p35 = scmp.eq.s32.totalorder %s15, 0
    %p36 = por %p34, %p35
    %p37 = scmp.ne.s32.totalorder %s23, %s24
    %p38 = scmp.eq.s32.totalorder %s16, 1
    %p39 = por %p37, %p38
    %p41 = scmp.ne.s32.totalorder %s24, %s40
    %p42 = scmp.eq.s32.totalorder %s16, 0
    %p43 = por %p41, %p42
    %s45 = sadd.s32 %s44, 1
    %p48 = scmp.eq.s32.totalorder %s10, 1
    %p49 = scmp.ne.s32.totalorder %s44, %s46
    %p50 = scmp.eq.s32.totalorder %s10, 0
    %p51 = por %p49, %p50
    %p52 = scmp.ne.s32.totalorder %s44, %s46
    %p53 = scmp.eq.s32.totalorder %s15, 1
    %p54 = por %p52, %p53
    %p55 = scmp.ne.s32.totalorder %s46, %s47
    %p56 = scmp.eq.s32.totalorder %s15, 0
    %p57 = por %p55, %p56
    %p58 = scmp.ne.s32.totalorder %s46, %s47
    %p59 = scmp.eq.s32.totalorder %s16, 1
    %p60 = por %p58, %p59
    %p62 = scmp.ne.s32.totalorder %s47, %s61
    %p63 = scmp.eq.s32.totalorder %s16, 0
    %p64 = por %p62, %p63
    %s65 = ssub.s32 %s10, %s17
    %p66 = scmp.eq.s32.totalorder %s65, 0
    %s68 = sadd.s32 %s67, 1
    %s69 = scalar_select %p66, %s67, %s68
    %p72 = pneg %p66
    %p73 = scmp.eq.s32.totalorder %s10, 1
    %p74 = por %p72, %p73
    %p75 = scmp.ne.s32.totalorder %s67, %s70
    %p76 = scmp.eq.s32.totalorder %s10, 0
    %p77 = por %p75, %p76
    %p78 = scmp.ne.s32.totalorder %s67, %s70
    %p79 = scmp.eq.s32.totalorder %s15, 1
    %p80 = por %p78, %p79
    %p81 = scmp.ne.s32.totalorder %s70, %s71
    %p82 = scmp.eq.s32.totalorder %s15, 0
    %p83 = por %p81, %p82
    %p84 = scmp.ne.s32.totalorder %s70, %s71
    %p85 = scmp.eq.s32.totalorder %s16, 1
    %p86 = por %p84, %p85
    %p88 = scmp.ne.s32.totalorder %s71, %s87
    %p89 = scmp.eq.s32.totalorder %s16, 0
    %p90 = por %p88, %p89
    %s91 = ssub.s32 %s10, %s17
    %p92 = scmp.eq.s32.totalorder %s91, 0
    %s94 = sadd.s32 %s93, 1
    %s95 = scalar_select %p92, %s93, %s94
    %p98 = pneg %p92
    %p99 = scmp.eq.s32.totalorder %s10, 1
    %p100 = por %p98, %p99
    %p101 = scmp.ne.s32.totalorder %s93, %s96
    %p102 = scmp.eq.s32.totalorder %s10, 0
    %p103 = por %p101, %p102
    %p104 = scmp.ne.s32.totalorder %s93, %s96
    %p105 = scmp.eq.s32.totalorder %s15, 1
    %p106 = por %p104, %p105
    %p107 = scmp.ne.s32.totalorder %s96, %s97
    %p108 = scmp.eq.s32.totalorder %s15, 0
    %p109 = por %p107, %p108
    %p110 = scmp.ne.s32.totalorder %s96, %s97
    %p111 = scmp.eq.s32.totalorder %s16, 1
    %p112 = por %p110, %p111
    %p114 = scmp.ne.s32.totalorder %s97, %s113
    %p115 = scmp.eq.s32.totalorder %s16, 0
    %p116 = por %p114, %p115
    %p117 = scmp.le.s32.totalorder 1, %s10
    %p118 = scmp.lt.s32.totalorder %s10, 3
    %p119 = pnand %p117, %p118
    %p120 = pneg %p119
    // Predicated region
    $region9: #{down_forward.3} parent=5 // pred_check
      _
    $region10: #{down_forward.3} parent=5 // pred_check_branch
      %122 = sbr.rel (%p119) target = $region12
    $region11: #{down_forward.3} parent=5 // pred_region
      %s123 = ssub.s32 %s10, 1
      // Predicated region
      $region13: #{down_forward.3} parent=11 // pred_check
        %p124 = pneg %p57
      $region14: #{down_forward.3} parent=11 // pred_check_branch
        %126 = sbr.rel (%p124) target = $region16
      $region15: #{down_forward.3} parent=11 // pred_region
        _
      $region16: #{down_forward.3} parent=11 // pred_fallthru
        _
    $region12: #{down_forward.3} parent=5 // pred_fallthru
      _
    %p127 = scmp.lt.s32.totalorder %s10, 2
    // Predicated region
    $region17: #{down_forward.3} parent=5 // pred_check
      %p128 = pneg %p127
    $region18: #{down_forward.3} parent=5 // pred_check_branch
      %130 = sbr.rel (%p128) target = $region20
    $region19: #{down_forward.3} parent=5 // pred_region
      // Predicated region
      $region21: #{down_forward.3} parent=19 // pred_check
        %p131 = pneg %p30
      $region22: #{down_forward.3} parent=19 // pred_check_branch
        %133 = sbr.rel (%p131) target = $region24
      $region23: #{down_forward.3} parent=19 // pred_region
        %p134 = scmp.lt.s32.totalorder %s10, 1
        %s135 = scalar_select %p134, %s10, 1
        %s136 = smul.addr %s135, 32
        %s137 = smul.addr %s136, 8
        %s138 = scalar_lea.vmem %s0, %s137
      $region24: #{down_forward.3} parent=19 // pred_fallthru
        _
    $region20: #{down_forward.3} parent=5 // pred_fallthru
      _
    %p139 = scmp.le.s32.totalorder 1, %s10
    %p140 = scmp.lt.s32.totalorder %s10, 3
    %p141 = pnand %p139, %p140
    %p142 = pneg %p141
    // Predicated region
    $region25: #{down_forward.3} parent=5 // pred_check
      _
    $region26: #{down_forward.3} parent=5 // pred_check_branch
      %144 = sbr.rel (%p141) target = $region28
    $region27: #{down_forward.3} parent=5 // pred_region
      %s145 = ssub.s32 %s10, 1
      %p146 = scmp.lt.s32.totalorder %s15, 1
      %s147 = scalar_select %p146, %s15, 1
      %s148 = smul.addr %s147, 32
      %s149 = smul.addr %s148, 8
      %s150 = scalar_lea.vmem %s0, %s149
      %p151 = pneg %p36
      %p152 = pneg %p33
      %p153 = pneg %p57
      %p154 = pneg %p54
      %p155 = pneg %p83
      %p156 = pneg %p80
      %p157 = scmp.lt.s32.totalorder %s15, 1
      %s158 = scalar_select %p157, %s15, 1
      %s159 = smul.addr %s158, 8
      %s160 = smul.addr %s159, 8
      %s161 = scalar_lea.vmem %s2, %s160
      %p162 = pneg %p109
      %p163 = pneg %p106
      %p164 = scmp.lt.s32.totalorder %s15, 1
      %s165 = scalar_select %p164, %s15, 1
      %s166 = smul.addr %s165, 2
      %s167 = scalar_lea.vmem %s3, %s166
      %p168 = scmp.lt.s32.totalorder %s15, 1
      %s169 = scalar_select %p168, %s15, 1
      %s170 = smul.addr %s169, 32
      %s171 = smul.addr %s170, 8
      %s172 = scalar_lea.vmem %s0, %s171
      %p173 = scmp.lt.s32.totalorder %s15, 1
      %s174 = scalar_select %p173, %s15, 1
      %s175 = smul.addr %s174, 8
      %s176 = smul.addr %s175, 8
      %s177 = scalar_lea.vmem %s2, %s176
      %p178 = scmp.lt.s32.totalorder %s15, 1
      %s179 = scalar_select %p178, %s15, 1
      %s180 = smul.addr %s179, 2
      %s181 = scalar_lea.vmem %s3, %s180
      %v182 = vld [vmem:[%s172] ss:$2 sm:$0xff]
      %s183 = scalar_lea.vmem %s172, 16
      %v184 = vld [vmem:[%s183] ss:$2 sm:$0xff]
      %s185 = scalar_lea.vmem %s172, 32
      %v186 = vld [vmem:[%s185] ss:$2 sm:$0xff]
      %s187 = scalar_lea.vmem %s172, 48
      %v188 = vld [vmem:[%s187] ss:$2 sm:$0xff]
      %s189 = scalar_lea.vmem %s172, 64
      %v190 = vld [vmem:[%s189] ss:$2 sm:$0xff]
      %s191 = scalar_lea.vmem %s172, 80
      %v192 = vld [vmem:[%s191] ss:$2 sm:$0xff]
      %s193 = scalar_lea.vmem %s172, 96
      %v194 = vld [vmem:[%s193] ss:$2 sm:$0xff]
      %s195 = scalar_lea.vmem %s172, 112
      %v196 = vld [vmem:[%s195] ss:$2 sm:$0xff]
      %s197 = scalar_lea.vmem %s172, 128
      %v198 = vld [vmem:[%s197] ss:$2 sm:$0xff]
      %s199 = scalar_lea.vmem %s172, 144
      %v200 = vld [vmem:[%s199] ss:$2 sm:$0xff]
      %s201 = scalar_lea.vmem %s172, 160
      %v202 = vld [vmem:[%s201] ss:$2 sm:$0xff]
      %s203 = scalar_lea.vmem %s172, 176
      %v204 = vld [vmem:[%s203] ss:$2 sm:$0xff]
      %s205 = scalar_lea.vmem %s172, 192
      %v206 = vld [vmem:[%s205] ss:$2 sm:$0xff]
      %s207 = scalar_lea.vmem %s172, 208
      %v208 = vld [vmem:[%s207] ss:$2 sm:$0xff]
      %s209 = scalar_lea.vmem %s172, 224
      %v210 = vld [vmem:[%s209] ss:$2 sm:$0xff]
      %s211 = scalar_lea.vmem %s172, 240
      %v212 = vld [vmem:[%s211] ss:$2 sm:$0xff]
      %s213 = scalar_lea.vmem %s172, 1
      %v214 = vld [vmem:[%s213] ss:$2 sm:$0xff]
      %s215 = scalar_lea.vmem %s172, 17
      %v216 = vld [vmem:[%s215] ss:$2 sm:$0xff]
      %s217 = scalar_lea.vmem %s172, 33
      %v218 = vld [vmem:[%s217] ss:$2 sm:$0xff]
      %s219 = scalar_lea.vmem %s172, 49
      %v220 = vld [vmem:[%s219] ss:$2 sm:$0xff]
      %s221 = scalar_lea.vmem %s172, 65
      %v222 = vld [vmem:[%s221] ss:$2 sm:$0xff]
      %s223 = scalar_lea.vmem %s172, 81
      %v224 = vld [vmem:[%s223] ss:$2 sm:$0xff]
      %s225 = scalar_lea.vmem %s172, 97
      %v226 = vld [vmem:[%s225] ss:$2 sm:$0xff]
      %s227 = scalar_lea.vmem %s172, 113
      %v228 = vld [vmem:[%s227] ss:$2 sm:$0xff]
      %s229 = scalar_lea.vmem %s172, 129
      %v230 = vld [vmem:[%s229] ss:$2 sm:$0xff]
      %s231 = scalar_lea.vmem %s172, 145
      %v232 = vld [vmem:[%s231] ss:$2 sm:$0xff]
      %s233 = scalar_lea.vmem %s172, 161
      %v234 = vld [vmem:[%s233] ss:$2 sm:$0xff]
      %s235 = scalar_lea.vmem %s172, 177
      %v236 = vld [vmem:[%s235] ss:$2 sm:$0xff]
      %s237 = scalar_lea.vmem %s172, 193
      %v238 = vld [vmem:[%s237] ss:$2 sm:$0xff]
      %s239 = scalar_lea.vmem %s172, 209
      %v240 = vld [vmem:[%s239] ss:$2 sm:$0xff]
      %s241 = scalar_lea.vmem %s172, 225
      %v242 = vld [vmem:[%s241] ss:$2 sm:$0xff]
      %s243 = scalar_lea.vmem %s172, 241
      %v244 = vld [vmem:[%s243] ss:$2 sm:$0xff]
      %v245 = vmax.f32 %v182, %v214
      %v246 = vmax.f32 %v184, %v216
      %v247 = vmax.f32 %v186, %v218
      %v248 = vmax.f32 %v188, %v220
      %v249 = vmax.f32 %v190, %v222
      %v250 = vmax.f32 %v192, %v224
      %v251 = vmax.f32 %v194, %v226
      %v252 = vmax.f32 %v196, %v228
      %v253 = vmax.f32 %v198, %v230
      %v254 = vmax.f32 %v200, %v232
      %v255 = vmax.f32 %v202, %v234
      %v256 = vmax.f32 %v204, %v236
      %v257 = vmax.f32 %v206, %v238
      %v258 = vmax.f32 %v208, %v240
      %v259 = vmax.f32 %v210, %v242
      %v260 = vmax.f32 %v212, %v244
      %v261 = vmax.f32 %v245, %v246
      %v262 = vmax.f32 %v247, %v248
      %v263 = vmax.f32 %v249, %v250
      %v264 = vmax.f32 %v251, %v252
      %v265 = vmax.f32 %v253, %v254
      %v266 = vmax.f32 %v255, %v256
      %v267 = vmax.f32 %v257, %v258
      %v268 = vmax.f32 %v259, %v260
      %269 = vst [vmem:[#allocation2] sm:$0xff] 0.0
      %270 = vst [vmem:[#allocation2 + $0x8] sm:$0x3] 0.0
      %s271 = scalar_lea.vmem [#allocation2], 144
      %272 = vst [vmem:[%s271] sm:$0xff] 0.0
      %273 = vst [vmem:[%s271 + $0x8] sm:$0x3] 0.0
      %s274 = scalar_lea.vmem [#allocation2], 16
      %275 = vst [vmem:[%s274] sm:$0x1] 0.0
      %276 = vst [vmem:[%s274 + $0x10] sm:$0x1] 0.0
      %277 = vst [vmem:[%s274 + $0x20] sm:$0x1] 0.0
      %278 = vst [vmem:[%s274 + $0x30] sm:$0x1] 0.0
      %279 = vst [vmem:[%s274 + $0x40] sm:$0x1] 0.0
      %280 = vst [vmem:[%s274 + $0x50] sm:$0x1] 0.0
      %281 = vst [vmem:[%s274 + $0x60] sm:$0x1] 0.0
      %282 = vst [vmem:[%s274 + $0x70] sm:$0x1] 0.0
      %283 = vst [vmem:[%s274 + $0x9] sm:$0x1] 0.0
      %284 = vst [vmem:[%s274 + $0x19] sm:$0x1] 0.0
      %285 = vst [vmem:[%s274 + $0x29] sm:$0x1] 0.0
      %286 = vst [vmem:[%s274 + $0x39] sm:$0x1] 0.0
      %287 = vst [vmem:[%s274 + $0x49] sm:$0x1] 0.0
      %288 = vst [vmem:[%s274 + $0x59] sm:$0x1] 0.0
      %289 = vst [vmem:[%s274 + $0x69] sm:$0x1] 0.0
      %290 = vst [vmem:[%s274 + $0x79] sm:$0x1] 0.0
      %291 = vst [vmem:[%s274 + $0x1] sm:$0xff] %v261
      %292 = vst [vmem:[%s274 + $0x11] sm:$0xff] %v262
      %293 = vst [vmem:[%s274 + $0x21] sm:$0xff] %v263
      %294 = vst [vmem:[%s274 + $0x31] sm:$0xff] %v264
      %295 = vst [vmem:[%s274 + $0x41] sm:$0xff] %v265
      %296 = vst [vmem:[%s274 + $0x51] sm:$0xff] %v266
      %297 = vst [vmem:[%s274 + $0x61] sm:$0xff] %v267
      %298 = vst [vmem:[%s274 + $0x71] sm:$0xff] %v268
      %v299 = vld [vmem:[#allocation2] sm:$0xff]
      %v300 = vld [vmem:[#allocation2 + $0x10] sm:$0xff]
      %v301 = vld [vmem:[#allocation2 + $0x20] sm:$0xff]
      %v302 = vld [vmem:[#allocation2 + $0x30] sm:$0xff]
      %v303 = vld [vmem:[#allocation2 + $0x40] sm:$0xff]
      %v304 = vld [vmem:[#allocation2 + $0x50] sm:$0xff]
      %v305 = vld [vmem:[#allocation2 + $0x60] sm:$0xff]
      %v306 = vld [vmem:[#allocation2 + $0x70] sm:$0xff]
      %307 = vst [vmem:[#allocation3] sm:$0xff] %v299
      %308 = vst [vmem:[#allocation3 + $0x48] sm:$0xff] %v300
      %309 = vst [vmem:[#allocation3 + $0x90] sm:$0xff] %v301
      %310 = vst [vmem:[#allocation3 + $0xd8] sm:$0xff] %v302
      %311 = vst [vmem:[#allocation3 + $0x120] sm:$0xff] %v303
      %312 = vst [vmem:[#allocation3 + $0x168] sm:$0xff] %v304
      %313 = vst [vmem:[#allocation3 + $0x1b0] sm:$0xff] %v305
      %314 = vst [vmem:[#allocation3 + $0x1f8] sm:$0xff] %v306
      %v315 = vld [vmem:[#allocation2 + $0x1] sm:$0xff]
      %v316 = vld [vmem:[#allocation2 + $0x11] sm:$0xff]
      %v317 = vld [vmem:[#allocation2 + $0x21] sm:$0xff]
      %v318 = vld [vmem:[#allocation2 + $0x31] sm:$0xff]
      %v319 = vld [vmem:[#allocation2 + $0x41] sm:$0xff]
      %v320 = vld [vmem:[#allocation2 + $0x51] sm:$0xff]
      %v321 = vld [vmem:[#allocation2 + $0x61] sm:$0xff]
      %v322 = vld [vmem:[#allocation2 + $0x71] sm:$0xff]
      %323 = vst [vmem:[#allocation3 + $0x8] sm:$0xff] %v315
      %324 = vst [vmem:[#allocation3 + $0x50] sm:$0xff] %v316
      %325 = vst [vmem:[#allocation3 + $0x98] sm:$0xff] %v317
      %326 = vst [vmem:[#allocation3 + $0xe0] sm:$0xff] %v318
      %327 = vst [vmem:[#allocation3 + $0x128] sm:$0xff] %v319
      %328 = vst [vmem:[#allocation3 + $0x170] sm:$0xff] %v320
      %329 = vst [vmem:[#allocation3 + $0x1b8] sm:$0xff] %v321
      %330 = vst [vmem:[#allocation3 + $0x200] sm:$0xff] %v322
      %v331 = vld [vmem:[#allocation2 + $0x2] sm:$0xff]
      %v332 = vld [vmem:[#allocation2 + $0x12] sm:$0xff]
      %v333 = vld [vmem:[#allocation2 + $0x22] sm:$0xff]
      %v334 = vld [vmem:[#allocation2 + $0x32] sm:$0xff]
      %v335 = vld [vmem:[#allocation2 + $0x42] sm:$0xff]
      %v336 = vld [vmem:[#allocation2 + $0x52] sm:$0xff]
      %v337 = vld [vmem:[#allocation2 + $0x62] sm:$0xff]
      %v338 = vld [vmem:[#allocation2 + $0x72] sm:$0xff]
      %339 = vst [vmem:[#allocation3 + $0x10] sm:$0xff] %v331
      %340 = vst [vmem:[#allocation3 + $0x58] sm:$0xff] %v332
      %341 = vst [vmem:[#allocation3 + $0xa0] sm:$0xff] %v333
      %342 = vst [vmem:[#allocation3 + $0xe8] sm:$0xff] %v334
      %343 = vst [vmem:[#allocation3 + $0x130] sm:$0xff] %v335
      %344 = vst [vmem:[#allocation3 + $0x178] sm:$0xff] %v336
      %345 = vst [vmem:[#allocation3 + $0x1c0] sm:$0xff] %v337
      %346 = vst [vmem:[#allocation3 + $0x208] sm:$0xff] %v338
      %v347 = vld [vmem:[%s274] sm:$0xff]
      %v348 = vld [vmem:[%s274 + $0x10] sm:$0xff]
      %v349 = vld [vmem:[%s274 + $0x20] sm:$0xff]
      %v350 = vld [vmem:[%s274 + $0x30] sm:$0xff]
      %v351 = vld [vmem:[%s274 + $0x40] sm:$0xff]
      %v352 = vld [vmem:[%s274 + $0x50] sm:$0xff]
      %v353 = vld [vmem:[%s274 + $0x60] sm:$0xff]
      %v354 = vld [vmem:[%s274 + $0x70] sm:$0xff]
      %355 = vst [vmem:[#allocation3 + $0x18] sm:$0xff] %v347
      %356 = vst [vmem:[#allocation3 + $0x60] sm:$0xff] %v348
      %357 = vst [vmem:[#allocation3 + $0xa8] sm:$0xff] %v349
      %358 = vst [vmem:[#allocation3 + $0xf0] sm:$0xff] %v350
      %359 = vst [vmem:[#allocation3 + $0x138] sm:$0xff] %v351
      %360 = vst [vmem:[#allocation3 + $0x180] sm:$0xff] %v352
      %361 = vst [vmem:[#allocation3 + $0x1c8] sm:$0xff] %v353
      %362 = vst [vmem:[#allocation3 + $0x210] sm:$0xff] %v354
      %v363 = vld [vmem:[%s274 + $0x1] sm:$0xff]
      %v364 = vld [vmem:[%s274 + $0x11] sm:$0xff]
      %v365 = vld [vmem:[%s274 + $0x21] sm:$0xff]
      %v366 = vld [vmem:[%s274 + $0x31] sm:$0xff]
      %v367 = vld [vmem:[%s274 + $0x41] sm:$0xff]
      %v368 = vld [vmem:[%s274 + $0x51] sm:$0xff]
      %v369 = vld [vmem:[%s274 + $0x61] sm:$0xff]
      %v370 = vld [vmem:[%s274 + $0x71] sm:$0xff]
      %371 = vst [vmem:[#allocation3 + $0x20] sm:$0xff] %v363
      %372 = vst [vmem:[#allocation3 + $0x68] sm:$0xff] %v364
      %373 = vst [vmem:[#allocation3 + $0xb0] sm:$0xff] %v365
      %374 = vst [vmem:[#allocation3 + $0xf8] sm:$0xff] %v366
      %375 = vst [vmem:[#allocation3 + $0x140] sm:$0xff] %v367
      %376 = vst [vmem:[#allocation3 + $0x188] sm:$0xff] %v368
      %377 = vst [vmem:[#allocation3 + $0x1d0] sm:$0xff] %v369
      %378 = vst [vmem:[#allocation3 + $0x218] sm:$0xff] %v370
      %v379 = vld [vmem:[%s274 + $0x2] sm:$0xff]
      %v380 = vld [vmem:[%s274 + $0x12] sm:$0xff]
      %v381 = vld [vmem:[%s274 + $0x22] sm:$0xff]
      %v382 = vld [vmem:[%s274 + $0x32] sm:$0xff]
      %v383 = vld [vmem:[%s274 + $0x42] sm:$0xff]
      %v384 = vld [vmem:[%s274 + $0x52] sm:$0xff]
      %v385 = vld [vmem:[%s274 + $0x62] sm:$0xff]
      %v386 = vld [vmem:[%s274 + $0x72] sm:$0xff]
      %387 = vst [vmem:[#allocation3 + $0x28] sm:$0xff] %v379
      %388 = vst [vmem:[#allocation3 + $0x70] sm:$0xff] %v380
      %389 = vst [vmem:[#allocation3 + $0xb8] sm:$0xff] %v381
      %390 = vst [vmem:[#allocation3 + $0x100] sm:$0xff] %v382
      %391 = vst [vmem:[#allocation3 + $0x148] sm:$0xff] %v383
      %392 = vst [vmem:[#allocation3 + $0x190] sm:$0xff] %v384
      %393 = vst [vmem:[#allocation3 + $0x1d8] sm:$0xff] %v385
      %394 = vst [vmem:[#allocation3 + $0x220] sm:$0xff] %v386
      %s395 = scalar_lea.vmem [#allocation2], 32
      %v396 = vld [vmem:[%s395] sm:$0xff]
      %v397 = vld [vmem:[%s395 + $0x10] sm:$0xff]
      %v398 = vld [vmem:[%s395 + $0x20] sm:$0xff]
      %v399 = vld [vmem:[%s395 + $0x30] sm:$0xff]
      %v400 = vld [vmem:[%s395 + $0x40] sm:$0xff]
      %v401 = vld [vmem:[%s395 + $0x50] sm:$0xff]
      %v402 = vld [vmem:[%s395 + $0x60] sm:$0xff]
      %v403 = vld [vmem:[%s395 + $0x70] sm:$0xff]
      %404 = vst [vmem:[#allocation3 + $0x30] sm:$0xff] %v396
      %405 = vst [vmem:[#allocation3 + $0x78] sm:$0xff] %v397
      %406 = vst [vmem:[#allocation3 + $0xc0] sm:$0xff] %v398
      %407 = vst [vmem:[#allocation3 + $0x108] sm:$0xff] %v399
      %408 = vst [vmem:[#allocation3 + $0x150] sm:$0xff] %v400
      %409 = vst [vmem:[#allocation3 + $0x198] sm:$0xff] %v401
      %410 = vst [vmem:[#allocation3 + $0x1e0] sm:$0xff] %v402
      %411 = vst [vmem:[#allocation3 + $0x228] sm:$0xff] %v403
      %v412 = vld [vmem:[%s395 + $0x1] sm:$0xff]
      %v413 = vld [vmem:[%s395 + $0x11] sm:$0xff]
      %v414 = vld [vmem:[%s395 + $0x21] sm:$0xff]
      %v415 = vld [vmem:[%s395 + $0x31] sm:$0xff]
      %v416 = vld [vmem:[%s395 + $0x41] sm:$0xff]
      %v417 = vld [vmem:[%s395 + $0x51] sm:$0xff]
      %v418 = vld [vmem:[%s395 + $0x61] sm:$0xff]
      %v419 = vld [vmem:[%s395 + $0x71] sm:$0xff]
      %420 = vst [vmem:[#allocation3 + $0x38] sm:$0xff] %v412
      %421 = vst [vmem:[#allocation3 + $0x80] sm:$0xff] %v413
      %422 = vst [vmem:[#allocation3 + $0xc8] sm:$0xff] %v414
      %423 = vst [vmem:[#allocation3 + $0x110] sm:$0xff] %v415
      %424 = vst [vmem:[#allocation3 + $0x158] sm:$0xff] %v416
      %425 = vst [vmem:[#allocation3 + $0x1a0] sm:$0xff] %v417
      %426 = vst [vmem:[#allocation3 + $0x1e8] sm:$0xff] %v418
      %427 = vst [vmem:[#allocation3 + $0x230] sm:$0xff] %v419
      %v428 = vld [vmem:[%s395 + $0x2] sm:$0xff]
      %v429 = vld [vmem:[%s395 + $0x12] sm:$0xff]
      %v430 = vld [vmem:[%s395 + $0x22] sm:$0xff]
      %v431 = vld [vmem:[%s395 + $0x32] sm:$0xff]
      %v432 = vld [vmem:[%s395 + $0x42] sm:$0xff]
      %v433 = vld [vmem:[%s395 + $0x52] sm:$0xff]
      %v434 = vld [vmem:[%s395 + $0x62] sm:$0xff]
      %v435 = vld [vmem:[%s395 + $0x72] sm:$0xff]
      %436 = vst [vmem:[#allocation3 + $0x40] sm:$0xff] %v428
      %437 = vst [vmem:[#allocation3 + $0x88] sm:$0xff] %v429
      %438 = vst [vmem:[#allocation3 + $0xd0] sm:$0xff] %v430
      %439 = vst [vmem:[#allocation3 + $0x118] sm:$0xff] %v431
      %440 = vst [vmem:[#allocation3 + $0x160] sm:$0xff] %v432
      %441 = vst [vmem:[#allocation3 + $0x1a8] sm:$0xff] %v433
      %442 = vst [vmem:[#allocation3 + $0x1f0] sm:$0xff] %v434
      %443 = vst [vmem:[#allocation3 + $0x238] sm:$0xff] %v435
      %v444 = vld [vmem:[#allocation3] sm:$0xff]
      %v445 = vld [vmem:[#allocation3 + $0x8] sm:$0xff]
      %v446 = vld [vmem:[#allocation3 + $0x10] sm:$0xff]
      %v447 = vld [vmem:[#allocation3 + $0x18] sm:$0xff]
      %v448 = vld [vmem:[#allocation3 + $0x20] sm:$0xff]
      %v449 = vld [vmem:[#allocation3 + $0x28] sm:$0xff]
      %v450 = vld [vmem:[#allocation3 + $0x30] sm:$0xff]
      %v451 = vld [vmem:[#allocation3 + $0x38] sm:$0xff]
      %v452 = vld [vmem:[#allocation3 + $0x40] sm:$0xff]
      %v453 = vld [vmem:[#allocation3 + $0x48] sm:$0xff]
      %v454 = vld [vmem:[#allocation3 + $0x50] sm:$0xff]
      %v455 = vld [vmem:[#allocation3 + $0x58] sm:$0xff]
      %v456 = vld [vmem:[#allocation3 + $0x60] sm:$0xff]
      %v457 = vld [vmem:[#allocation3 + $0x68] sm:$0xff]
      %v458 = vld [vmem:[#allocation3 + $0x70] sm:$0xff]
      %v459 = vld [vmem:[#allocation3 + $0x78] sm:$0xff]
      %v460 = vld [vmem:[#allocation3 + $0x80] sm:$0xff]
      %v461 = vld [vmem:[#allocation3 + $0x88] sm:$0xff]
      %v462 = vld [vmem:[#allocation3 + $0x90] sm:$0xff]
      %v463 = vld [vmem:[#allocation3 + $0x98] sm:$0xff]
      %v464 = vld [vmem:[#allocation3 + $0xa0] sm:$0xff]
      %v465 = vld [vmem:[#allocation3 + $0xa8] sm:$0xff]
      %v466 = vld [vmem:[#allocation3 + $0xb0] sm:$0xff]
      %v467 = vld [vmem:[#allocation3 + $0xb8] sm:$0xff]
      %v468 = vld [vmem:[#allocation3 + $0xc0] sm:$0xff]
      %v469 = vld [vmem:[#allocation3 + $0xc8] sm:$0xff]
      %v470 = vld [vmem:[#allocation3 + $0xd0] sm:$0xff]
      %v471 = vld [vmem:[#allocation3 + $0xd8] sm:$0xff]
      %v472 = vld [vmem:[#allocation3 + $0xe0] sm:$0xff]
      %v473 = vld [vmem:[#allocation3 + $0xe8] sm:$0xff]
      %v474 = vld [vmem:[#allocation3 + $0xf0] sm:$0xff]
      %v475 = vld [vmem:[#allocation3 + $0xf8] sm:$0xff]
      %v476 = vld [vmem:[#allocation3 + $0x100] sm:$0xff]
      %v477 = vld [vmem:[#allocation3 + $0x108] sm:$0xff]
      %v478 = vld [vmem:[#allocation3 + $0x110] sm:$0xff]
      %v479 = vld [vmem:[#allocation3 + $0x118] sm:$0xff]
      %v480 = vld [vmem:[#allocation3 + $0x120] sm:$0xff]
      %v481 = vld [vmem:[#allocation3 + $0x128] sm:$0xff]
      %v482 = vld [vmem:[#allocation3 + $0x130] sm:$0xff]
      %v483 = vld [vmem:[#allocation3 + $0x138] sm:$0xff]
      %v484 = vld [vmem:[#allocation3 + $0x140] sm:$0xff]
      %v485 = vld [vmem:[#allocation3 + $0x148] sm:$0xff]
      %v486 = vld [vmem:[#allocation3 + $0x150] sm:$0xff]
      %v487 = vld [vmem:[#allocation3 + $0x158] sm:$0xff]
      %v488 = vld [vmem:[#allocation3 + $0x160] sm:$0xff]
      %v489 = vld [vmem:[#allocation3 + $0x168] sm:$0xff]
      %v490 = vld [vmem:[#allocation3 + $0x170] sm:$0xff]
      %v491 = vld [vmem:[#allocation3 + $0x178] sm:$0xff]
      %v492 = vld [vmem:[#allocation3 + $0x180] sm:$0xff]
      %v493 = vld [vmem:[#allocation3 + $0x188] sm:$0xff]
      %v494 = vld [vmem:[#allocation3 + $0x190] sm:$0xff]
      %v495 = vld [vmem:[#allocation3 + $0x198] sm:$0xff]
      %v496 = vld [vmem:[#allocation3 + $0x1a0] sm:$0xff]
      %v497 = vld [vmem:[#allocation3 + $0x1a8] sm:$0xff]
      %v498 = vld [vmem:[#allocation3 + $0x1b0] sm:$0xff]
      %v499 = vld [vmem:[#allocation3 + $0x1b8] sm:$0xff]
      %v500 = vld [vmem:[#allocation3 + $0x1c0] sm:$0xff]
      %v501 = vld [vmem:[#allocation3 + $0x1c8] sm:$0xff]
      %v502 = vld [vmem:[#allocation3 + $0x1d0] sm:$0xff]
      %v503 = vld [vmem:[#allocation3 + $0x1d8] sm:$0xff]
      %v504 = vld [vmem:[#allocation3 + $0x1e0] sm:$0xff]
      %v505 = vld [vmem:[#allocation3 + $0x1e8] sm:$0xff]
      %v506 = vld [vmem:[#allocation3 + $0x1f0] sm:$0xff]
      %v507 = vld [vmem:[#allocation3 + $0x1f8] sm:$0xff]
      %v508 = vld [vmem:[#allocation3 + $0x200] sm:$0xff]
      %v509 = vld [vmem:[#allocation3 + $0x208] sm:$0xff]
      %v510 = vld [vmem:[#allocation3 + $0x210] sm:$0xff]
      %v511 = vld [vmem:[#allocation3 + $0x218] sm:$0xff]
      %v512 = vld [vmem:[#allocation3 + $0x220] sm:$0xff]
      %v513 = vld [vmem:[#allocation3 + $0x228] sm:$0xff]
      %v514 = vld [vmem:[#allocation3 + $0x230] sm:$0xff]
      %v515 = vld [vmem:[#allocation3 + $0x238] sm:$0xff]
      %v516 = vld [vmem:[%s1] sm:$0xff]
      %v517 = vld [vmem:[%s1 + $0x8] sm:$0xff]
      %v518 = vld [vmem:[%s1 + $0x10] sm:$0xff]
      %v519 = vld [vmem:[%s1 + $0x18] sm:$0xff]
      %v520 = vld [vmem:[%s1 + $0x20] sm:$0xff]
      %v521 = vld [vmem:[%s1 + $0x28] sm:$0xff]
      %v522 = vld [vmem:[%s1 + $0x30] sm:$0xff]
      %v523 = vld [vmem:[%s1 + $0x38] sm:$0xff]
      %v524 = vld [vmem:[%s1 + $0x40] sm:$0xff]
      %v525 = vld [vmem:[%s1 + $0x48] sm:$0xff]
      %v526 = vld [vmem:[%s1 + $0x50] sm:$0xff]
      %v527 = vld [vmem:[%s1 + $0x58] sm:$0xff]
      %v528 = vld [vmem:[%s1 + $0x60] sm:$0xff]
      %v529 = vld [vmem:[%s1 + $0x68] sm:$0xff]
      %v530 = vld [vmem:[%s1 + $0x70] sm:$0xff]
      %v531 = vld [vmem:[%s1 + $0x78] sm:$0xff]
      %v532 = vld [vmem:[%s1 + $0x80] sm:$0xff]
      %v533 = vld [vmem:[%s1 + $0x88] sm:$0xff]
      %v534 = vld [vmem:[%s1 + $0x90] sm:$0xff]
      %v535 = vld [vmem:[%s1 + $0x98] sm:$0xff]
      %v536 = vld [vmem:[%s1 + $0xa0] sm:$0xff]
      %v537 = vld [vmem:[%s1 + $0xa8] sm:$0xff]
      %v538 = vld [vmem:[%s1 + $0xb0] sm:$0xff]
      %v539 = vld [vmem:[%s1 + $0xb8] sm:$0xff]
      %v540 = vld [vmem:[%s1 + $0xc0] sm:$0xff]
      %v541 = vld [vmem:[%s1 + $0xc8] sm:$0xff]
      %v542 = vld [vmem:[%s1 + $0xd0] sm:$0xff]
      %v543 = vld [vmem:[%s1 + $0xd8] sm:$0xff]
      %v544 = vld [vmem:[%s1 + $0xe0] sm:$0xff]
      %v545 = vld [vmem:[%s1 + $0xe8] sm:$0xff]
      %v546 = vld [vmem:[%s1 + $0xf0] sm:$0xff]
      %v547 = vld [vmem:[%s1 + $0xf8] sm:$0xff]
      %v548 = vld [vmem:[%s1 + $0x100] sm:$0xff]
      %v549 = vld [vmem:[%s1 + $0x108] sm:$0xff]
      %v550 = vld [vmem:[%s1 + $0x110] sm:$0xff]
      %v551 = vld [vmem:[%s1 + $0x118] sm:$0xff]
      %v552 = vld [vmem:[%s1 + $0x120] sm:$0xff]
      %v553 = vld [vmem:[%s1 + $0x128] sm:$0xff]
      %v554 = vld [vmem:[%s1 + $0x130] sm:$0xff]
      %v555 = vld [vmem:[%s1 + $0x138] sm:$0xff]
      %v556 = vld [vmem:[%s1 + $0x140] sm:$0xff]
      %v557 = vld [vmem:[%s1 + $0x148] sm:$0xff]
      %v558 = vld [vmem:[%s1 + $0x150] sm:$0xff]
      %v559 = vld [vmem:[%s1 + $0x158] sm:$0xff]
      %v560 = vld [vmem:[%s1 + $0x160] sm:$0xff]
      %v561 = vld [vmem:[%s1 + $0x168] sm:$0xff]
      %v562 = vld [vmem:[%s1 + $0x170] sm:$0xff]
      %v563 = vld [vmem:[%s1 + $0x178] sm:$0xff]
      %v564 = vld [vmem:[%s1 + $0x180] sm:$0xff]
      %v565 = vld [vmem:[%s1 + $0x188] sm:$0xff]
      %v566 = vld [vmem:[%s1 + $0x190] sm:$0xff]
      %v567 = vld [vmem:[%s1 + $0x198] sm:$0xff]
      %v568 = vld [vmem:[%s1 + $0x1a0] sm:$0xff]
      %v569 = vld [vmem:[%s1 + $0x1a8] sm:$0xff]
      %v570 = vld [vmem:[%s1 + $0x1b0] sm:$0xff]
      %v571 = vld [vmem:[%s1 + $0x1b8] sm:$0xff]
      %v572 = vld [vmem:[%s1 + $0x1c0] sm:$0xff]
      %v573 = vld [vmem:[%s1 + $0x1c8] sm:$0xff]
      %v574 = vld [vmem:[%s1 + $0x1d0] sm:$0xff]
      %v575 = vld [vmem:[%s1 + $0x1d8] sm:$0xff]
      %v576 = vld [vmem:[%s1 + $0x1e0] sm:$0xff]
      %v577 = vld [vmem:[%s1 + $0x1e8] sm:$0xff]
      %v578 = vld [vmem:[%s1 + $0x1f0] sm:$0xff]
      %v579 = vld [vmem:[%s1 + $0x1f8] sm:$0xff]
      %v580 = vld [vmem:[%s1 + $0x200] sm:$0xff]
      %v581 = vld [vmem:[%s1 + $0x208] sm:$0xff]
      %v582 = vld [vmem:[%s1 + $0x210] sm:$0xff]
      %v583 = vld [vmem:[%s1 + $0x218] sm:$0xff]
      %v584 = vld [vmem:[%s1 + $0x220] sm:$0xff]
      %v585 = vld [vmem:[%s1 + $0x228] sm:$0xff]
      %v586 = vld [vmem:[%s1 + $0x230] sm:$0xff]
      %v587 = vld [vmem:[%s1 + $0x238] sm:$0xff]
      %v588 = vld [vmem:[%s1 + $0x240] sm:$0xff]
      %v589 = vld [vmem:[%s1 + $0x248] sm:$0xff]
      %v590 = vld [vmem:[%s1 + $0x250] sm:$0xff]
      %v591 = vld [vmem:[%s1 + $0x258] sm:$0xff]
      %v592 = vld [vmem:[%s1 + $0x260] sm:$0xff]
      %v593 = vld [vmem:[%s1 + $0x268] sm:$0xff]
      %v594 = vld [vmem:[%s1 + $0x270] sm:$0xff]
      %v595 = vld [vmem:[%s1 + $0x278] sm:$0xff]
      %v596 = vld [vmem:[%s1 + $0x280] sm:$0xff]
      %v597 = vld [vmem:[%s1 + $0x288] sm:$0xff]
      %v598 = vld [vmem:[%s1 + $0x290] sm:$0xff]
      %v599 = vld [vmem:[%s1 + $0x298] sm:$0xff]
      %v600 = vld [vmem:[%s1 + $0x2a0] sm:$0xff]
      %v601 = vld [vmem:[%s1 + $0x2a8] sm:$0xff]
      %v602 = vld [vmem:[%s1 + $0x2b0] sm:$0xff]
      %v603 = vld [vmem:[%s1 + $0x2b8] sm:$0xff]
      %v604 = vld [vmem:[%s1 + $0x2c0] sm:$0xff]
      %v605 = vld [vmem:[%s1 + $0x2c8] sm:$0xff]
      %v606 = vld [vmem:[%s1 + $0x2d0] sm:$0xff]
      %v607 = vld [vmem:[%s1 + $0x2d8] sm:$0xff]
      %v608 = vld [vmem:[%s1 + $0x2e0] sm:$0xff]
      %v609 = vld [vmem:[%s1 + $0x2e8] sm:$0xff]
      %v610 = vld [vmem:[%s1 + $0x2f0] sm:$0xff]
      %v611 = vld [vmem:[%s1 + $0x2f8] sm:$0xff]
      %v612 = vld [vmem:[%s1 + $0x300] sm:$0xff]
      %v613 = vld [vmem:[%s1 + $0x308] sm:$0xff]
      %v614 = vld [vmem:[%s1 + $0x310] sm:$0xff]
      %v615 = vld [vmem:[%s1 + $0x318] sm:$0xff]
      %v616 = vld [vmem:[%s1 + $0x320] sm:$0xff]
      %v617 = vld [vmem:[%s1 + $0x328] sm:$0xff]
      %v618 = vld [vmem:[%s1 + $0x330] sm:$0xff]
      %v619 = vld [vmem:[%s1 + $0x338] sm:$0xff]
      %v620 = vld [vmem:[%s1 + $0x340] sm:$0xff]
      %v621 = vld [vmem:[%s1 + $0x348] sm:$0xff]
      %v622 = vld [vmem:[%s1 + $0x350] sm:$0xff]
      %v623 = vld [vmem:[%s1 + $0x358] sm:$0xff]
      %v624 = vld [vmem:[%s1 + $0x360] sm:$0xff]
      %v625 = vld [vmem:[%s1 + $0x368] sm:$0xff]
      %v626 = vld [vmem:[%s1 + $0x370] sm:$0xff]
      %v627 = vld [vmem:[%s1 + $0x378] sm:$0xff]
      %v628 = vld [vmem:[%s1 + $0x380] sm:$0xff]
      %v629 = vld [vmem:[%s1 + $0x388] sm:$0xff]
      %v630 = vld [vmem:[%s1 + $0x390] sm:$0xff]
      %v631 = vld [vmem:[%s1 + $0x398] sm:$0xff]
      %v632 = vld [vmem:[%s1 + $0x3a0] sm:$0xff]
      %v633 = vld [vmem:[%s1 + $0x3a8] sm:$0xff]
      %v634 = vld [vmem:[%s1 + $0x3b0] sm:$0xff]
      %v635 = vld [vmem:[%s1 + $0x3b8] sm:$0xff]
      %v636 = vld [vmem:[%s1 + $0x3c0] sm:$0xff]
      %v637 = vld [vmem:[%s1 + $0x3c8] sm:$0xff]
      %v638 = vld [vmem:[%s1 + $0x3d0] sm:$0xff]
      %v639 = vld [vmem:[%s1 + $0x3d8] sm:$0xff]
      %v640 = vld [vmem:[%s1 + $0x3e0] sm:$0xff]
      %v641 = vld [vmem:[%s1 + $0x3e8] sm:$0xff]
      %v642 = vld [vmem:[%s1 + $0x3f0] sm:$0xff]
      %v643 = vld [vmem:[%s1 + $0x3f8] sm:$0xff]
      %v644 = vld [vmem:[%s1 + $0x400] sm:$0xff]
      %v645 = vld [vmem:[%s1 + $0x408] sm:$0xff]
      %v646 = vld [vmem:[%s1 + $0x410] sm:$0xff]
      %v647 = vld [vmem:[%s1 + $0x418] sm:$0xff]
      %v648 = vld [vmem:[%s1 + $0x420] sm:$0xff]
      %v649 = vld [vmem:[%s1 + $0x428] sm:$0xff]
      %v650 = vld [vmem:[%s1 + $0x430] sm:$0xff]
      %v651 = vld [vmem:[%s1 + $0x438] sm:$0xff]
      %v652 = vld [vmem:[%s1 + $0x440] sm:$0xff]
      %v653 = vld [vmem:[%s1 + $0x448] sm:$0xff]
      %v654 = vld [vmem:[%s1 + $0x450] sm:$0xff]
      %v655 = vld [vmem:[%s1 + $0x458] sm:$0xff]
      %v656 = vld [vmem:[%s1 + $0x460] sm:$0xff]
      %v657 = vld [vmem:[%s1 + $0x468] sm:$0xff]
      %v658 = vld [vmem:[%s1 + $0x470] sm:$0xff]
      %v659 = vld [vmem:[%s1 + $0x478] sm:$0xff]
      %660 = vmatprep.subr.mxu0 0.0
      %661 = vmatpush1.msra.mxu0 %v531
      %662 = vmatprep.subr.mxu0 0.0
      %663 = vmatpush1.msra.mxu0 %v530
      %664 = vmatprep.subr.mxu0 0.0
      %665 = vmatpush1.msra.mxu0 %v529
      %666 = vmatprep.subr.mxu0 0.0
      %667 = vmatpush1.msra.mxu0 %v528
      %668 = vmatprep.subr.mxu0 0.0
      %669 = vmatpush1.msra.mxu0 %v527
      %670 = vmatprep.subr.mxu0 0.0
      %671 = vmatpush1.msra.mxu0 %v526
      %672 = vmatprep.subr.mxu0 0.0
      %673 = vmatpush1.msra.mxu0 %v525
      %674 = vmatprep.subr.mxu0 0.0
      %675 = vmatpush1.msra.mxu0 %v524
      %676 = vmatprep.subr.mxu0 0.0
      %677 = vmatpush1.msra.mxu0 %v523
      %678 = vmatprep.subr.mxu0 0.0
      %679 = vmatpush1.msra.mxu0 %v522
      %680 = vmatprep.subr.mxu0 0.0
      %681 = vmatpush1.msra.mxu0 %v521
      %682 = vmatprep.subr.mxu0 0.0
      %683 = vmatpush1.msra.mxu0 %v520
      %684 = vmatprep.subr.mxu0 0.0
      %685 = vmatpush1.msra.mxu0 %v519
      %686 = vmatprep.subr.mxu0 0.0
      %687 = vmatpush1.msra.mxu0 %v518
      %688 = vmatprep.subr.mxu0 0.0
      %689 = vmatpush1.msra.mxu0 %v517
      %690 = vmatprep.subr.mxu0 0.0
      %691 = vmatpush1.msra.mxu0 %v516
      %692 = vmatprep.subr.mxu0 0.0
      %693 = vmatpush2.msra.mxu0 %v547
      %694 = vmatprep.subr.mxu0 0.0
      %695 = vmatpush2.msra.mxu0 %v546
      %696 = vmatprep.subr.mxu0 0.0
      %697 = vmatpush2.msra.mxu0 %v545
      %698 = vmatprep.subr.mxu0 0.0
      %699 = vmatpush2.msra.mxu0 %v544
      %700 = vmatprep.subr.mxu0 0.0
      %701 = vmatpush2.msra.mxu0 %v543
      %702 = vmatprep.subr.mxu0 0.0
      %703 = vmatpush2.msra.mxu0 %v542
      %704 = vmatprep.subr.mxu0 0.0
      %705 = vmatpush2.msra.mxu0 %v541
      %706 = vmatprep.subr.mxu0 0.0
      %707 = vmatpush2.msra.mxu0 %v540
      %708 = vmatprep.subr.mxu0 0.0
      %709 = vmatpush2.msra.mxu0 %v539
      %710 = vmatprep.subr.mxu0 0.0
      %711 = vmatpush2.msra.mxu0 %v538
      %712 = vmatprep.subr.mxu0 0.0
      %713 = vmatpush2.msra.mxu0 %v537
      %714 = vmatprep.subr.mxu0 0.0
      %715 = vmatpush2.msra.mxu0 %v536
      %716 = vmatprep.subr.mxu0 0.0
      %717 = vmatpush2.msra.mxu0 %v535
      %718 = vmatprep.subr.mxu0 0.0
      %719 = vmatpush2.msra.mxu0 %v534
      %720 = vmatprep.subr.mxu0 0.0
      %721 = vmatpush2.msra.mxu0 %v533
      %722 = vmatprep.subr.mxu0 0.0
      %723 = vmatpush2.msra.mxu0 %v532
      %724 = vmatprep.mubr.f32.mxu0 %v445
      %725 = vmatmul.mubr.f32.gmra.mxu0 %v444
      %v726 = vpop.f32.mrf.mxu0
      %v727 = vadd.f32 0.0, %v726
      %v728 = vpop.f32.mrf.mxu0
      %729 = vmatprep.mubr.f32.mxu0 %v454
      %730 = vmatmul.mubr.f32.gmra.mxu0 %v453
      %v731 = vpop.f32.mrf.mxu0
      %v732 = vadd.f32 0.0, %v731
      %v733 = vpop.f32.mrf.mxu0
      %734 = vmatprep.mubr.f32.mxu0 %v463
      %735 = vmatmul.mubr.f32.gmra.mxu0 %v462
      %v736 = vpop.f32.mrf.mxu0
      %v737 = vadd.f32 0.0, %v736
      %v738 = vpop.f32.mrf.mxu0
      %739 = vmatprep.mubr.f32.mxu0 %v472
      %740 = vmatmul.mubr.f32.gmra.mxu0 %v471
      %v741 = vpop.f32.mrf.mxu0
      %v742 = vadd.f32 0.0, %v741
      %v743 = vpop.f32.mrf.mxu0
      %744 = vmatprep.mubr.f32.mxu0 %v481
      %745 = vmatmul.mubr.f32.gmra.mxu0 %v480
      %v746 = vpop.f32.mrf.mxu0
      %v747 = vadd.f32 0.0, %v746
      %v748 = vpop.f32.mrf.mxu0
      %749 = vmatprep.mubr.f32.mxu0 %v490
      %750 = vmatmul.mubr.f32.gmra.mxu0 %v489
      %v751 = vpop.f32.mrf.mxu0
      %v752 = vadd.f32 0.0, %v751
      %v753 = vpop.f32.mrf.mxu0
      %754 = vmatprep.mubr.f32.mxu0 %v499
      %755 = vmatmul.mubr.f32.gmra.mxu0 %v498
      %v756 = vpop.f32.mrf.mxu0
      %v757 = vadd.f32 0.0, %v756
      %v758 = vpop.f32.mrf.mxu0
      %759 = vmatprep.mubr.f32.mxu0 %v508
      %760 = vmatmul.mubr.f32.gmra.mxu0 %v507
      %v761 = vpop.f32.mrf.mxu0
      %v762 = vadd.f32 0.0, %v761
      %v763 = vpop.f32.mrf.mxu0
      %764 = vdwg.mxu0
      %765 = vmatprep.subr.mxu0 0.0
      %766 = vmatpush1.msra.mxu0 %v563
      %767 = vmatprep.subr.mxu0 0.0
      %768 = vmatpush1.msra.mxu0 %v562
      %769 = vmatprep.subr.mxu0 0.0
      %770 = vmatpush1.msra.mxu0 %v561
      %771 = vmatprep.subr.mxu0 0.0
      %772 = vmatpush1.msra.mxu0 %v560
      %773 = vmatprep.subr.mxu0 0.0
      %774 = vmatpush1.msra.mxu0 %v559
      %775 = vmatprep.subr.mxu0 0.0
      %776 = vmatpush1.msra.mxu0 %v558
      %777 = vmatprep.subr.mxu0 0.0
      %778 = vmatpush1.msra.mxu0 %v557
      %779 = vmatprep.subr.mxu0 0.0
      %780 = vmatpush1.msra.mxu0 %v556
      %781 = vmatprep.subr.mxu0 0.0
      %782 = vmatpush1.msra.mxu0 %v555
      %783 = vmatprep.subr.mxu0 0.0
      %784 = vmatpush1.msra.mxu0 %v554
      %785 = vmatprep.subr.mxu0 0.0
      %786 = vmatpush1.msra.mxu0 %v553
      %787 = vmatprep.subr.mxu0 0.0
      %788 = vmatpush1.msra.mxu0 %v552
      %789 = vmatprep.subr.mxu0 0.0
      %790 = vmatpush1.msra.mxu0 %v551
      %791 = vmatprep.subr.mxu0 0.0
      %792 = vmatpush1.msra.mxu0 %v550
      %793 = vmatprep.subr.mxu0 0.0
      %794 = vmatpush1.msra.mxu0 %v549
      %795 = vmatprep.subr.mxu0 0.0
      %796 = vmatpush1.msra.mxu0 %v548
      %797 = vmatprep.subr.mxu0 0.0
      %798 = vmatpush2.msra.mxu0 %v579
      %799 = vmatprep.subr.mxu0 0.0
      %800 = vmatpush2.msra.mxu0 %v578
      %801 = vmatprep.subr.mxu0 0.0
      %802 = vmatpush2.msra.mxu0 %v577
      %803 = vmatprep.subr.mxu0 0.0
      %804 = vmatpush2.msra.mxu0 %v576
      %805 = vmatprep.subr.mxu0 0.0
      %806 = vmatpush2.msra.mxu0 %v575
      %807 = vmatprep.subr.mxu0 0.0
      %808 = vmatpush2.msra.mxu0 %v574
      %809 = vmatprep.subr.mxu0 0.0
      %810 = vmatpush2.msra.mxu0 %v573
      %811 = vmatprep.subr.mxu0 0.0
      %812 = vmatpush2.msra.mxu0 %v572
      %813 = vmatprep.subr.mxu0 0.0
      %814 = vmatpush2.msra.mxu0 %v571
      %815 = vmatprep.subr.mxu0 0.0
      %816 = vmatpush2.msra.mxu0 %v570
      %817 = vmatprep.subr.mxu0 0.0
      %818 = vmatpush2.msra.mxu0 %v569
      %819 = vmatprep.subr.mxu0 0.0
      %820 = vmatpush2.msra.mxu0 %v568
      %821 = vmatprep.subr.mxu0 0.0
      %822 = vmatpush2.msra.mxu0 %v567
      %823 = vmatprep.subr.mxu0 0.0
      %824 = vmatpush2.msra.mxu0 %v566
      %825 = vmatprep.subr.mxu0 0.0
      %826 = vmatpush2.msra.mxu0 %v565
      %827 = vmatprep.subr.mxu0 0.0
      %828 = vmatpush2.msra.mxu0 %v564
      %829 = vmatprep.mubr.f32.mxu0 %v447
      %830 = vmatmul.mubr.f32.gmra.mxu0 %v446
      %v831 = vpop.f32.mrf.mxu0
      %v832 = vadd.f32 %v727, %v831
      %v833 = vpop.f32.mrf.mxu0
      %834 = vmatprep.mubr.f32.mxu0 %v456
      %835 = vmatmul.mubr.f32.gmra.mxu0 %v455
      %v836 = vpop.f32.mrf.mxu0
      %v837 = vadd.f32 %v732, %v836
      %v838 = vpop.f32.mrf.mxu0
      %839 = vmatprep.mubr.f32.mxu0 %v465
      %840 = vmatmul.mubr.f32.gmra.mxu0 %v464
      %v841 = vpop.f32.mrf.mxu0
      %v842 = vadd.f32 %v737, %v841
      %v843 = vpop.f32.mrf.mxu0
      %844 = vmatprep.mubr.f32.mxu0 %v474
      %845 = vmatmul.mubr.f32.gmra.mxu0 %v473
      %v846 = vpop.f32.mrf.mxu0
      %v847 = vadd.f32 %v742, %v846
      %v848 = vpop.f32.mrf.mxu0
      %849 = vmatprep.mubr.f32.mxu0 %v483
      %850 = vmatmul.mubr.f32.gmra.mxu0 %v482
      %v851 = vpop.f32.mrf.mxu0
      %v852 = vadd.f32 %v747, %v851
      %v853 = vpop.f32.mrf.mxu0
      %854 = vmatprep.mubr.f32.mxu0 %v492
      %855 = vmatmul.mubr.f32.gmra.mxu0 %v491
      %v856 = vpop.f32.mrf.mxu0
      %v857 = vadd.f32 %v752, %v856
      %v858 = vpop.f32.mrf.mxu0
      %859 = vmatprep.mubr.f32.mxu0 %v501
      %860 = vmatmul.mubr.f32.gmra.mxu0 %v500
      %v861 = vpop.f32.mrf.mxu0
      %v862 = vadd.f32 %v757, %v861
      %v863 = vpop.f32.mrf.mxu0
      %864 = vmatprep.mubr.f32.mxu0 %v510
      %865 = vmatmul.mubr.f32.gmra.mxu0 %v509
      %v866 = vpop.f32.mrf.mxu0
      %v867 = vadd.f32 %v762, %v866
      %v868 = vpop.f32.mrf.mxu0
      %869 = vdwg.mxu0
      %870 = vmatprep.subr.mxu0 0.0
      %871 = vmatpush1.msra.mxu0 %v595
      %872 = vmatprep.subr.mxu0 0.0
      %873 = vmatpush1.msra.mxu0 %v594
      %874 = vmatprep.subr.mxu0 0.0
      %875 = vmatpush1.msra.mxu0 %v593
      %876 = vmatprep.subr.mxu0 0.0
      %877 = vmatpush1.msra.mxu0 %v592
      %878 = vmatprep.subr.mxu0 0.0
      %879 = vmatpush1.msra.mxu0 %v591
      %880 = vmatprep.subr.mxu0 0.0
      %881 = vmatpush1.msra.mxu0 %v590
      %882 = vmatprep.subr.mxu0 0.0
      %883 = vmatpush1.msra.mxu0 %v589
      %884 = vmatprep.subr.mxu0 0.0
      %885 = vmatpush1.msra.mxu0 %v588
      %886 = vmatprep.subr.mxu0 0.0
      %887 = vmatpush1.msra.mxu0 %v587
      %888 = vmatprep.subr.mxu0 0.0
      %889 = vmatpush1.msra.mxu0 %v586
      %890 = vmatprep.subr.mxu0 0.0
      %891 = vmatpush1.msra.mxu0 %v585
      %892 = vmatprep.subr.mxu0 0.0
      %893 = vmatpush1.msra.mxu0 %v584
      %894 = vmatprep.subr.mxu0 0.0
      %895 = vmatpush1.msra.mxu0 %v583
      %896 = vmatprep.subr.mxu0 0.0
      %897 = vmatpush1.msra.mxu0 %v582
      %898 = vmatprep.subr.mxu0 0.0
      %899 = vmatpush1.msra.mxu0 %v581
      %900 = vmatprep.subr.mxu0 0.0
      %901 = vmatpush1.msra.mxu0 %v580
      %902 = vmatprep.subr.mxu0 0.0
      %903 = vmatpush2.msra.mxu0 %v611
      %904 = vmatprep.subr.mxu0 0.0
      %905 = vmatpush2.msra.mxu0 %v610
      %906 = vmatprep.subr.mxu0 0.0
      %907 = vmatpush2.msra.mxu0 %v609
      %908 = vmatprep.subr.mxu0 0.0
      %909 = vmatpush2.msra.mxu0 %v608
      %910 = vmatprep.subr.mxu0 0.0
      %911 = vmatpush2.msra.mxu0 %v607
      %912 = vmatprep.subr.mxu0 0.0
      %913 = vmatpush2.msra.mxu0 %v606
      %914 = vmatprep.subr.mxu0 0.0
      %915 = vmatpush2.msra.mxu0 %v605
      %916 = vmatprep.subr.mxu0 0.0
      %917 = vmatpush2.msra.mxu0 %v604
      %918 = vmatprep.subr.mxu0 0.0
      %919 = vmatpush2.msra.mxu0 %v603
      %920 = vmatprep.subr.mxu0 0.0
      %921 = vmatpush2.msra.mxu0 %v602
      %922 = vmatprep.subr.mxu0 0.0
      %923 = vmatpush2.msra.mxu0 %v601
      %924 = vmatprep.subr.mxu0 0.0
      %925 = vmatpush2.msra.mxu0 %v600
      %926 = vmatprep.subr.mxu0 0.0
      %927 = vmatpush2.msra.mxu0 %v599
      %928 = vmatprep.subr.mxu0 0.0
      %929 = vmatpush2.msra.mxu0 %v598
      %930 = vmatprep.subr.mxu0 0.0
      %931 = vmatpush2.msra.mxu0 %v597
      %932 = vmatprep.subr.mxu0 0.0
      %933 = vmatpush2.msra.mxu0 %v596
      %934 = vmatprep.mubr.f32.mxu0 %v449
      %935 = vmatmul.mubr.f32.gmra.mxu0 %v448
      %v936 = vpop.f32.mrf.mxu0
      %v937 = vadd.f32 %v832, %v936
      %v938 = vpop.f32.mrf.mxu0
      %939 = vmatprep.mubr.f32.mxu0 %v458
      %940 = vmatmul.mubr.f32.gmra.mxu0 %v457
      %v941 = vpop.f32.mrf.mxu0
      %v942 = vadd.f32 %v837, %v941
      %v943 = vpop.f32.mrf.mxu0
      %944 = vmatprep.mubr.f32.mxu0 %v467
      %945 = vmatmul.mubr.f32.gmra.mxu0 %v466
      %v946 = vpop.f32.mrf.mxu0
      %v947 = vadd.f32 %v842, %v946
      %v948 = vpop.f32.mrf.mxu0
      %949 = vmatprep.mubr.f32.mxu0 %v476
      %950 = vmatmul.mubr.f32.gmra.mxu0 %v475
      %v951 = vpop.f32.mrf.mxu0
      %v952 = vadd.f32 %v847, %v951
      %v953 = vpop.f32.mrf.mxu0
      %954 = vmatprep.mubr.f32.mxu0 %v485
      %955 = vmatmul.mubr.f32.gmra.mxu0 %v484
      %v956 = vpop.f32.mrf.mxu0
      %v957 = vadd.f32 %v852, %v956
      %v958 = vpop.f32.mrf.mxu0
      %959 = vmatprep.mubr.f32.mxu0 %v494
      %960 = vmatmul.mubr.f32.gmra.mxu0 %v493
      %v961 = vpop.f32.mrf.mxu0
      %v962 = vadd.f32 %v857, %v961
      %v963 = vpop.f32.mrf.mxu0
      %964 = vmatprep.mubr.f32.mxu0 %v503
      %965 = vmatmul.mubr.f32.gmra.mxu0 %v502
      %v966 = vpop.f32.mrf.mxu0
      %v967 = vadd.f32 %v862, %v966
      %v968 = vpop.f32.mrf.mxu0
      %969 = vmatprep.mubr.f32.mxu0 %v512
      %970 = vmatmul.mubr.f32.gmra.mxu0 %v511
      %v971 = vpop.f32.mrf.mxu0
      %v972 = vadd.f32 %v867, %v971
      %v973 = vpop.f32.mrf.mxu0
      %974 = vdwg.mxu0
      %975 = vmatprep.subr.mxu0 0.0
      %976 = vmatpush1.msra.mxu0 %v627
      %977 = vmatprep.subr.mxu0 0.0
      %978 = vmatpush1.msra.mxu0 %v626
      %979 = vmatprep.subr.mxu0 0.0
      %980 = vmatpush1.msra.mxu0 %v625
      %981 = vmatprep.subr.mxu0 0.0
      %982 = vmatpush1.msra.mxu0 %v624
      %983 = vmatprep.subr.mxu0 0.0
      %984 = vmatpush1.msra.mxu0 %v623
      %985 = vmatprep.subr.mxu0 0.0
      %986 = vmatpush1.msra.mxu0 %v622
      %987 = vmatprep.subr.mxu0 0.0
      %988 = vmatpush1.msra.mxu0 %v621
      %989 = vmatprep.subr.mxu0 0.0
      %990 = vmatpush1.msra.mxu0 %v620
      %991 = vmatprep.subr.mxu0 0.0
      %992 = vmatpush1.msra.mxu0 %v619
      %993 = vmatprep.subr.mxu0 0.0
      %994 = vmatpush1.msra.mxu0 %v618
      %995 = vmatprep.subr.mxu0 0.0
      %996 = vmatpush1.msra.mxu0 %v617
      %997 = vmatprep.subr.mxu0 0.0
      %998 = vmatpush1.msra.mxu0 %v616
      %999 = vmatprep.subr.mxu0 0.0
      %1000 = vmatpush1.msra.mxu0 %v615
      %1001 = vmatprep.subr.mxu0 0.0
      %1002 = vmatpush1.msra.mxu0 %v614
      %1003 = vmatprep.subr.mxu0 0.0
      %1004 = vmatpush1.msra.mxu0 %v613
      %1005 = vmatprep.subr.mxu0 0.0
      %1006 = vmatpush1.msra.mxu0 %v612
      %1007 = vmatprep.subr.mxu0 0.0
      %1008 = vmatpush2.msra.mxu0 %v643
      %1009 = vmatprep.subr.mxu0 0.0
      %1010 = vmatpush2.msra.mxu0 %v642
      %1011 = vmatprep.subr.mxu0 0.0
      %1012 = vmatpush2.msra.mxu0 %v641
      %1013 = vmatprep.subr.mxu0 0.0
      %1014 = vmatpush2.msra.mxu0 %v640
      %1015 = vmatprep.subr.mxu0 0.0
      %1016 = vmatpush2.msra.mxu0 %v639
      %1017 = vmatprep.subr.mxu0 0.0
      %1018 = vmatpush2.msra.mxu0 %v638
      %1019 = vmatprep.subr.mxu0 0.0
      %1020 = vmatpush2.msra.mxu0 %v637
      %1021 = vmatprep.subr.mxu0 0.0
      %1022 = vmatpush2.msra.mxu0 %v636
      %1023 = vmatprep.subr.mxu0 0.0
      %1024 = vmatpush2.msra.mxu0 %v635
      %1025 = vmatprep.subr.mxu0 0.0
      %1026 = vmatpush2.msra.mxu0 %v634
      %1027 = vmatprep.subr.mxu0 0.0
      %1028 = vmatpush2.msra.mxu0 %v633
      %1029 = vmatprep.subr.mxu0 0.0
      %1030 = vmatpush2.msra.mxu0 %v632
      %1031 = vmatprep.subr.mxu0 0.0
      %1032 = vmatpush2.msra.mxu0 %v631
      %1033 = vmatprep.subr.mxu0 0.0
      %1034 = vmatpush2.msra.mxu0 %v630
      %1035 = vmatprep.subr.mxu0 0.0
      %1036 = vmatpush2.msra.mxu0 %v629
      %1037 = vmatprep.subr.mxu0 0.0
      %1038 = vmatpush2.msra.mxu0 %v628
      %1039 = vmatprep.mubr.f32.mxu0 %v451
      %1040 = vmatmul.mubr.f32.gmra.mxu0 %v450
      %v1041 = vpop.f32.mrf.mxu0
      %v1042 = vadd.f32 %v937, %v1041
      %v1043 = vpop.f32.mrf.mxu0
      %1044 = vmatprep.mubr.f32.mxu0 %v460
      %1045 = vmatmul.mubr.f32.gmra.mxu0 %v459
      %v1046 = vpop.f32.mrf.mxu0
      %v1047 = vadd.f32 %v942, %v1046
      %v1048 = vpop.f32.mrf.mxu0
      %1049 = vmatprep.mubr.f32.mxu0 %v469
      %1050 = vmatmul.mubr.f32.gmra.mxu0 %v468
      %v1051 = vpop.f32.mrf.mxu0
      %v1052 = vadd.f32 %v947, %v1051
      %v1053 = vpop.f32.mrf.mxu0
      %1054 = vmatprep.mubr.f32.mxu0 %v478
      %1055 = vmatmul.mubr.f32.gmra.mxu0 %v477
      %v1056 = vpop.f32.mrf.mxu0
      %v1057 = vadd.f32 %v952, %v1056
      %v1058 = vpop.f32.mrf.mxu0
      %1059 = vmatprep.mubr.f32.mxu0 %v487
      %1060 = vmatmul.mubr.f32.gmra.mxu0 %v486
      %v1061 = vpop.f32.mrf.mxu0
      %v1062 = vadd.f32 %v957, %v1061
      %v1063 = vpop.f32.mrf.mxu0
      %1064 = vmatprep.mubr.f32.mxu0 %v496
      %1065 = vmatmul.mubr.f32.gmra.mxu0 %v495
      %v1066 = vpop.f32.mrf.mxu0
      %v1067 = vadd.f32 %v962, %v1066
      %v1068 = vpop.f32.mrf.mxu0
      %1069 = vmatprep.mubr.f32.mxu0 %v505
      %1070 = vmatmul.mubr.f32.gmra.mxu0 %v504
      %v1071 = vpop.f32.mrf.mxu0
      %v1072 = vadd.f32 %v967, %v1071
      %v1073 = vpop.f32.mrf.mxu0
      %1074 = vmatprep.mubr.f32.mxu0 %v514
      %1075 = vmatmul.mubr.f32.gmra.mxu0 %v513
      %v1076 = vpop.f32.mrf.mxu0
      %v1077 = vadd.f32 %v972, %v1076
      %v1078 = vpop.f32.mrf.mxu0
      %1079 = vdwg.mxu0
      %1080 = vmatprep.subr.mxu0 0.0
      %1081 = vmatpush1.msra.mxu0 %v659
      %1082 = vmatprep.subr.mxu0 0.0
      %1083 = vmatpush1.msra.mxu0 %v658
      %1084 = vmatprep.subr.mxu0 0.0
      %1085 = vmatpush1.msra.mxu0 %v657
      %1086 = vmatprep.subr.mxu0 0.0
      %1087 = vmatpush1.msra.mxu0 %v656
      %1088 = vmatprep.subr.mxu0 0.0
      %1089 = vmatpush1.msra.mxu0 %v655
      %1090 = vmatprep.subr.mxu0 0.0
      %1091 = vmatpush1.msra.mxu0 %v654
      %1092 = vmatprep.subr.mxu0 0.0
      %1093 = vmatpush1.msra.mxu0 %v653
      %1094 = vmatprep.subr.mxu0 0.0
      %1095 = vmatpush1.msra.mxu0 %v652
      %1096 = vmatprep.subr.mxu0 0.0
      %1097 = vmatpush1.msra.mxu0 %v651
      %1098 = vmatprep.subr.mxu0 0.0
      %1099 = vmatpush1.msra.mxu0 %v650
      %1100 = vmatprep.subr.mxu0 0.0
      %1101 = vmatpush1.msra.mxu0 %v649
      %1102 = vmatprep.subr.mxu0 0.0
      %1103 = vmatpush1.msra.mxu0 %v648
      %1104 = vmatprep.subr.mxu0 0.0
      %1105 = vmatpush1.msra.mxu0 %v647
      %1106 = vmatprep.subr.mxu0 0.0
      %1107 = vmatpush1.msra.mxu0 %v646
      %1108 = vmatprep.subr.mxu0 0.0
      %1109 = vmatpush1.msra.mxu0 %v645
      %1110 = vmatprep.subr.mxu0 0.0
      %1111 = vmatpush1.msra.mxu0 %v644
      %1112 = vmatprep.subr.mxu0 0.0
      %1113 = vmatpush2.msra.mxu0 0.0
      %1114 = vmatprep.subr.mxu0 0.0
      %1115 = vmatpush2.msra.mxu0 0.0
      %1116 = vmatprep.subr.mxu0 0.0
      %1117 = vmatpush2.msra.mxu0 0.0
      %1118 = vmatprep.subr.mxu0 0.0
      %1119 = vmatpush2.msra.mxu0 0.0
      %1120 = vmatprep.subr.mxu0 0.0
      %1121 = vmatpush2.msra.mxu0 0.0
      %1122 = vmatprep.subr.mxu0 0.0
      %1123 = vmatpush2.msra.mxu0 0.0
      %1124 = vmatprep.subr.mxu0 0.0
      %1125 = vmatpush2.msra.mxu0 0.0
      %1126 = vmatprep.subr.mxu0 0.0
      %1127 = vmatpush2.msra.mxu0 0.0
      %1128 = vmatprep.subr.mxu0 0.0
      %1129 = vmatpush2.msra.mxu0 0.0
      %1130 = vmatprep.subr.mxu0 0.0
      %1131 = vmatpush2.msra.mxu0 0.0
      %1132 = vmatprep.subr.mxu0 0.0
      %1133 = vmatpush2.msra.mxu0 0.0
      %1134 = vmatprep.subr.mxu0 0.0
      %1135 = vmatpush2.msra.mxu0 0.0
      %1136 = vmatprep.subr.mxu0 0.0
      %1137 = vmatpush2.msra.mxu0 0.0
      %1138 = vmatprep.subr.mxu0 0.0
      %1139 = vmatpush2.msra.mxu0 0.0
      %1140 = vmatprep.subr.mxu0 0.0
      %1141 = vmatpush2.msra.mxu0 0.0
      %1142 = vmatprep.subr.mxu0 0.0
      %1143 = vmatpush2.msra.mxu0 0.0
      %1144 = vmatprep.mubr.f32.mxu0 0.0
      %1145 = vmatmul.mubr.f32.gmra.mxu0 %v452
      %v1146 = vpop.f32.mrf.mxu0
      %v1147 = vadd.f32 %v1042, %v1146
      %v1148 = vpop.f32.mrf.mxu0
      %1149 = vmatprep.mubr.f32.mxu0 0.0
      %1150 = vmatmul.mubr.f32.gmra.mxu0 %v461
      %v1151 = vpop.f32.mrf.mxu0
      %v1152 = vadd.f32 %v1047, %v1151
      %v1153 = vpop.f32.mrf.mxu0
      %1154 = vmatprep.mubr.f32.mxu0 0.0
      %1155 = vmatmul.mubr.f32.gmra.mxu0 %v470
      %v1156 = vpop.f32.mrf.mxu0
      %v1157 = vadd.f32 %v1052, %v1156
      %v1158 = vpop.f32.mrf.mxu0
      %1159 = vmatprep.mubr.f32.mxu0 0.0
      %1160 = vmatmul.mubr.f32.gmra.mxu0 %v479
      %v1161 = vpop.f32.mrf.mxu0
      %v1162 = vadd.f32 %v1057, %v1161
      %v1163 = vpop.f32.mrf.mxu0
      %1164 = vmatprep.mubr.f32.mxu0 0.0
      %1165 = vmatmul.mubr.f32.gmra.mxu0 %v488
      %v1166 = vpop.f32.mrf.mxu0
      %v1167 = vadd.f32 %v1062, %v1166
      %v1168 = vpop.f32.mrf.mxu0
      %1169 = vmatprep.mubr.f32.mxu0 0.0
      %1170 = vmatmul.mubr.f32.gmra.mxu0 %v497
      %v1171 = vpop.f32.mrf.mxu0
      %v1172 = vadd.f32 %v1067, %v1171
      %v1173 = vpop.f32.mrf.mxu0
      %1174 = vmatprep.mubr.f32.mxu0 0.0
      %1175 = vmatmul.mubr.f32.gmra.mxu0 %v506
      %v1176 = vpop.f32.mrf.mxu0
      %v1177 = vadd.f32 %v1072, %v1176
      %v1178 = vpop.f32.mrf.mxu0
      %1179 = vmatprep.mubr.f32.mxu0 0.0
      %1180 = vmatmul.mubr.f32.gmra.mxu0 %v515
      %v1181 = vpop.f32.mrf.mxu0
      %v1182 = vadd.f32 %v1077, %v1181
      %v1183 = vpop.f32.mrf.mxu0
      %1184 = vdwg.mxu0
      %1185 = vst [vmem:[%s177] sm:$0xff] %v1147
      %1186 = vst [vmem:[%s177 + $0x8] sm:$0xff] %v1152
      %1187 = vst [vmem:[%s177 + $0x10] sm:$0xff] %v1157
      %1188 = vst [vmem:[%s177 + $0x18] sm:$0xff] %v1162
      %1189 = vst [vmem:[%s177 + $0x20] sm:$0xff] %v1167
      %1190 = vst [vmem:[%s177 + $0x28] sm:$0xff] %v1172
      %1191 = vst [vmem:[%s177 + $0x30] sm:$0xff] %v1177
      %1192 = vst [vmem:[%s177 + $0x38] sm:$0xff] %v1182
      %v1193 = vadd.f32 %v1147, %v1152
      %v1194 = vadd.f32 %v1193, %v1157
      %v1195 = vadd.f32 %v1194, %v1162
      %v1196 = vadd.f32 %v1195, %v1167
      %v1197 = vadd.f32 %v1196, %v1172
      %v1198 = vadd.f32 %v1197, %v1177
      %v1199 = vadd.f32 %v1198, %v1182
      %v1200 = vrot.slane %v1199, 4
      %v1201 = vadd.f32 %v1199, %v1200
      %v1202 = vrot.slane %v1201, 2
      %v1203 = vadd.f32 %v1201, %v1202
      %v1204 = vrot.slane %v1203, 1
      %v1205 = vadd.f32 %v1203, %v1204
      %v1206 = vmul.f32 %v1147, %v1147
      %v1207 = vmul.f32 %v1152, %v1152
      %v1208 = vmul.f32 %v1157, %v1157
      %v1209 = vmul.f32 %v1162, %v1162
      %v1210 = vmul.f32 %v1167, %v1167
      %v1211 = vmul.f32 %v1172, %v1172
      %v1212 = vmul.f32 %v1177, %v1177
      %v1213 = vmul.f32 %v1182, %v1182
      %v1214 = vadd.f32 %v1206, %v1207
      %v1215 = vadd.f32 %v1214, %v1208
      %v1216 = vadd.f32 %v1215, %v1209
      %v1217 = vadd.f32 %v1216, %v1210
      %v1218 = vadd.f32 %v1217, %v1211
      %v1219 = vadd.f32 %v1218, %v1212
      %v1220 = vadd.f32 %v1219, %v1213
      %v1221 = vrot.slane %v1220, 4
      %v1222 = vadd.f32 %v1220, %v1221
      %v1223 = vrot.slane %v1222, 2
      %v1224 = vadd.f32 %v1222, %v1223
      %v1225 = vrot.slane %v1224, 1
      %v1226 = vadd.f32 %v1224, %v1225
      %vm1227 = vcmask 1040384
      %v1228 = vsel %vm1227, %v1205, %v1226
      %1229 = vst [vmem:[%s181] sm:$0x3] %v1228
      %p1230 = scmp.lt.s32.totalorder %s15, 1
      %s1231 = scalar_select %p1230, %s15, 1
      %s1232 = smul.addr %s1231, 8
      %s1233 = smul.addr %s1232, 8
      %s1234 = scalar_lea.vmem %s2, %s1233
      %p1235 = scmp.lt.s32.totalorder %s15, 1
      %s1236 = scalar_select %p1235, %s15, 1
      %s1237 = smul.addr %s1236, 2
      %s1238 = scalar_lea.vmem %s3, %s1237
      // Predicated region
      $region29: #{down_forward.3} parent=27 // pred_check
        %p1239 = pneg %p80
      $region30: #{down_forward.3} parent=27 // pred_check_branch
        %1241 = sbr.rel (%p1239) target = $region32
      $region31: #{down_forward.3} parent=27 // pred_region
        _
      $region32: #{down_forward.3} parent=27 // pred_fallthru
        _
      // Predicated region
      $region33: #{down_forward.3} parent=27 // pred_check
        %p1242 = pneg %p106
      $region34: #{down_forward.3} parent=27 // pred_check_branch
        %1244 = sbr.rel (%p1242) target = $region36
      $region35: #{down_forward.3} parent=27 // pred_region
        _
      $region36: #{down_forward.3} parent=27 // pred_fallthru
        _
    $region28: #{down_forward.3} parent=5 // pred_fallthru
      _
    %p1245 = scmp.le.s32.totalorder 2, %s10
    // Predicated region
    $region37: #{down_forward.3} parent=5 // pred_check
      %p1246 = pneg %p1245
    $region38: #{down_forward.3} parent=5 // pred_check_branch
      %1248 = sbr.rel (%p1246) target = $region40
    $region39: #{down_forward.3} parent=5 // pred_region
      %s1249 = ssub.s32 %s10, 2
      // Predicated region
      $region41: #{down_forward.3} parent=39 // pred_check
        %p1250 = pneg %p86
      $region42: #{down_forward.3} parent=39 // pred_check_branch
        %1252 = sbr.rel (%p1250) target = $region44
      $region43: #{down_forward.3} parent=39 // pred_region
        %p1253 = scmp.lt.s32.totalorder %s16, 1
        %s1254 = scalar_select %p1253, %s16, 1
        %s1255 = smul.addr %s1254, 8
        %s1256 = smul.addr %s1255, 8
        %s1257 = scalar_lea.vmem %s2, %s1256
      $region44: #{down_forward.3} parent=39 // pred_fallthru
        _
      // Predicated region
      $region45: #{down_forward.3} parent=39 // pred_check
        %p1258 = pneg %p112
      $region46: #{down_forward.3} parent=39 // pred_check_branch
        %1260 = sbr.rel (%p1258) target = $region48
      $region47: #{down_forward.3} parent=39 // pred_region
        %p1261 = scmp.lt.s32.totalorder %s16, 1
        %s1262 = scalar_select %p1261, %s16, 1
        %s1263 = smul.addr %s1262, 2
        %s1264 = scalar_lea.vmem %s3, %s1263
      $region48: #{down_forward.3} parent=39 // pred_fallthru
        _
    $region40: #{down_forward.3} parent=5 // pred_fallthru
      _
  $region6: #{down_forward.3} parent=0 // loop_footer
    %s14 = sadd.s32 1, %s10
  $region7: #{down_forward.3} parent=0 // loop_footer_branch
    %9 = sbr.rel target = $region3
  $region8: #{down_forward.3} parent=0 // loop_exit
    _

// kernel: down_forward.4
$region0: #{down_forward.4}
  #allocation0 [shape = 'u32[]', space=smem, size = 0x4, offset = 0x4, fixed_abs, tag = 'smem constant byte address 0x4 - core index']
  #allocation1 [shape = 'u32[144,128]{1,0:T(1,128)}', space=vmem, size = 0x12000, scoped, tag = 'internal scratch']
  #allocation2 [shape = 'f32[1,10,10,128]{3,2,1,0:T(8,128)}', space=vmem, size = 0x14000, scoped, tag = 'scratch operand']
  #allocation3 [shape = 'f32[1,8,8,1152]{3,2,1,0:T(8,128)}', space=vmem, size = 0x48000, scoped, tag = 'scratch operand']
  %s0 = inlined_call_operand.vmem [shape: f32[2,8,8,128], index: 0, kind: input, shape index: {}]
  %s1 = inlined_call_operand.vmem [shape: f32[1,128], index: 1, kind: input, shape index: {}]
  %s2 = inlined_call_operand.vmem [shape: f32[1,128], index: 2, kind: input, shape index: {}]
  %s3 = inlined_call_operand.vmem [shape: f32[1152,128], index: 3, kind: input, shape index: {}]
  %s4 = inlined_call_operand.vmem [shape: f32[2,8,8,128], index: 4, kind: output, shape index: {0}]
  %s5 = inlined_call_operand.vmem [shape: f32[2,2,128], index: 5, kind: output, shape index: {1}]
  %6 = xla_tuple %s4, %s5
  %s7 = sld [smem:[#allocation0]]
  $region57: #{down_forward.4} parent=0
    _
  %s9 = ssub.s32 1, %s7
  %s10 = scalar_select 0, %s9, %s7
  loop: start=0, step=1, limit=4
  $region2: #{down_forward.4} parent=0 // loop_pre_header
    _
  $region3: #{down_forward.4} parent=0 // loop_header
    %s12 = sphi 0, %s16
    %p13 = scmp.ge.s32.totalorder %s12, 4
    %s22 = sphi 0, %s24
    %s25 = sphi 0, %s22
    %s26 = sphi 0, %s25
    %s42 = sphi 0, %s26
    %s46 = sphi 0, %s46
    %s48 = sphi 0, %s46
    %s49 = sphi 0, %s48
    %s63 = sphi 0, %s49
    %s67 = sphi 0, %s67
    %s69 = sphi 0, %s67
    %s70 = sphi 0, %s69
    %s84 = sphi 0, %s70
    %s88 = sphi 0, %s88
    %s90 = sphi 0, %s88
    %s91 = sphi 0, %s90
    %s105 = sphi 0, %s91
    %s111 = sphi 0, %s113
    %s114 = sphi 0, %s111
    %s115 = sphi 0, %s114
    %s131 = sphi 0, %s115
    %s137 = sphi 0, %s139
    %s140 = sphi 0, %s137
    %s141 = sphi 0, %s140
    %s157 = sphi 0, %s141
  $region4: #{down_forward.4} parent=0 // loop_header_branch
    %15 = sbr.rel (%p13) target = $region8
  $region5: #{down_forward.4} parent=0 // loop_body
    %s17 = ssub.s32 %s12, 1
    %s18 = ssub.s32 %s12, 2
    %s19 = sadd.s32 %s12, 1
    %s20 = ssub.s32 %s12, %s19
    %p21 = scmp.eq.s32.totalorder %s20, 0
    %s23 = sadd.s32 %s22, 1
    %s24 = scalar_select %p21, %s22, %s23
    %p27 = pneg %p21
    %p28 = scmp.eq.s32.totalorder %s12, 1
    %p29 = por %p27, %p28
    %p30 = scmp.ne.s32.totalorder %s22, %s25
    %p31 = scmp.eq.s32.totalorder %s12, 0
    %p32 = por %p30, %p31
    %p33 = scmp.ne.s32.totalorder %s22, %s25
    %p34 = scmp.eq.s32.totalorder %s17, 1
    %p35 = por %p33, %p34
    %p36 = scmp.ne.s32.totalorder %s25, %s26
    %p37 = scmp.eq.s32.totalorder %s17, 0
    %p38 = por %p36, %p37
    %p39 = scmp.ne.s32.totalorder %s25, %s26
    %p40 = scmp.eq.s32.totalorder %s18, 1
    %p41 = por %p39, %p40
    %p43 = scmp.ne.s32.totalorder %s26, %s42
    %p44 = scmp.eq.s32.totalorder %s18, 0
    %p45 = por %p43, %p44
    %s47 = sadd.s32 %s46, 1
    %p50 = scmp.eq.s32.totalorder %s12, 1
    %p51 = scmp.ne.s32.totalorder %s46, %s48
    %p52 = scmp.eq.s32.totalorder %s12, 0
    %p53 = por %p51, %p52
    %p54 = scmp.ne.s32.totalorder %s46, %s48
    %p55 = scmp.eq.s32.totalorder %s17, 1
    %p56 = por %p54, %p55
    %p57 = scmp.ne.s32.totalorder %s48, %s49
    %p58 = scmp.eq.s32.totalorder %s17, 0
    %p59 = por %p57, %p58
    %p60 = scmp.ne.s32.totalorder %s48, %s49
    %p61 = scmp.eq.s32.totalorder %s18, 1
    %p62 = por %p60, %p61
    %p64 = scmp.ne.s32.totalorder %s49, %s63
    %p65 = scmp.eq.s32.totalorder %s18, 0
    %p66 = por %p64, %p65
    %s68 = sadd.s32 %s67, 1
    %p71 = scmp.eq.s32.totalorder %s12, 1
    %p72 = scmp.ne.s32.totalorder %s67, %s69
    %p73 = scmp.eq.s32.totalorder %s12, 0
    %p74 = por %p72, %p73
    %p75 = scmp.ne.s32.totalorder %s67, %s69
    %p76 = scmp.eq.s32.totalorder %s17, 1
    %p77 = por %p75, %p76
    %p78 = scmp.ne.s32.totalorder %s69, %s70
    %p79 = scmp.eq.s32.totalorder %s17, 0
    %p80 = por %p78, %p79
    %p81 = scmp.ne.s32.totalorder %s69, %s70
    %p82 = scmp.eq.s32.totalorder %s18, 1
    %p83 = por %p81, %p82
    %p85 = scmp.ne.s32.totalorder %s70, %s84
    %p86 = scmp.eq.s32.totalorder %s18, 0
    %p87 = por %p85, %p86
    %s89 = sadd.s32 %s88, 1
    %p92 = scmp.eq.s32.totalorder %s12, 1
    %p93 = scmp.ne.s32.totalorder %s88, %s90
    %p94 = scmp.eq.s32.totalorder %s12, 0
    %p95 = por %p93, %p94
    %p96 = scmp.ne.s32.totalorder %s88, %s90
    %p97 = scmp.eq.s32.totalorder %s17, 1
    %p98 = por %p96, %p97
    %p99 = scmp.ne.s32.totalorder %s90, %s91
    %p100 = scmp.eq.s32.totalorder %s17, 0
    %p101 = por %p99, %p100
    %p102 = scmp.ne.s32.totalorder %s90, %s91
    %p103 = scmp.eq.s32.totalorder %s18, 1
    %p104 = por %p102, %p103
    %p106 = scmp.ne.s32.totalorder %s91, %s105
    %p107 = scmp.eq.s32.totalorder %s18, 0
    %p108 = por %p106, %p107
    %s109 = ssub.s32 %s12, %s19
    %p110 = scmp.eq.s32.totalorder %s109, 0
    %s112 = sadd.s32 %s111, 1
    %s113 = scalar_select %p110, %s111, %s112
    %p116 = pneg %p110
    %p117 = scmp.eq.s32.totalorder %s12, 1
    %p118 = por %p116, %p117
    %p119 = scmp.ne.s32.totalorder %s111, %s114
    %p120 = scmp.eq.s32.totalorder %s12, 0
    %p121 = por %p119, %p120
    %p122 = scmp.ne.s32.totalorder %s111, %s114
    %p123 = scmp.eq.s32.totalorder %s17, 1
    %p124 = por %p122, %p123
    %p125 = scmp.ne.s32.totalorder %s114, %s115
    %p126 = scmp.eq.s32.totalorder %s17, 0
    %p127 = por %p125, %p126
    %p128 = scmp.ne.s32.totalorder %s114, %s115
    %p129 = scmp.eq.s32.totalorder %s18, 1
    %p130 = por %p128, %p129
    %p132 = scmp.ne.s32.totalorder %s115, %s131
    %p133 = scmp.eq.s32.totalorder %s18, 0
    %p134 = por %p132, %p133
    %s135 = ssub.s32 %s12, %s19
    %p136 = scmp.eq.s32.totalorder %s135, 0
    %s138 = sadd.s32 %s137, 1
    %s139 = scalar_select %p136, %s137, %s138
    %p142 = pneg %p136
    %p143 = scmp.eq.s32.totalorder %s12, 1
    %p144 = por %p142, %p143
    %p145 = scmp.ne.s32.totalorder %s137, %s140
    %p146 = scmp.eq.s32.totalorder %s12, 0
    %p147 = por %p145, %p146
    %p148 = scmp.ne.s32.totalorder %s137, %s140
    %p149 = scmp.eq.s32.totalorder %s17, 1
    %p150 = por %p148, %p149
    %p151 = scmp.ne.s32.totalorder %s140, %s141
    %p152 = scmp.eq.s32.totalorder %s17, 0
    %p153 = por %p151, %p152
    %p154 = scmp.ne.s32.totalorder %s140, %s141
    %p155 = scmp.eq.s32.totalorder %s18, 1
    %p156 = por %p154, %p155
    %p158 = scmp.ne.s32.totalorder %s141, %s157
    %p159 = scmp.eq.s32.totalorder %s18, 0
    %p160 = por %p158, %p159
    %p161 = scmp.le.s32.totalorder 1, %s12
    %p162 = scmp.lt.s32.totalorder %s12, 3
    %p163 = pnand %p161, %p162
    %p164 = pneg %p163
    // Predicated region
    $region9: #{down_forward.4} parent=5 // pred_check
      _
    $region10: #{down_forward.4} parent=5 // pred_check_branch
      %166 = sbr.rel (%p163) target = $region12
    $region11: #{down_forward.4} parent=5 // pred_region
      %s167 = ssub.s32 %s12, 1
      // Predicated region
      $region13: #{down_forward.4} parent=11 // pred_check
        %p168 = pneg %p59
      $region14: #{down_forward.4} parent=11 // pred_check_branch
        %170 = sbr.rel (%p168) target = $region16
      $region15: #{down_forward.4} parent=11 // pred_region
        _
      $region16: #{down_forward.4} parent=11 // pred_fallthru
        _
      // Predicated region
      $region17: #{down_forward.4} parent=11 // pred_check
        %p171 = pneg %p80
      $region18: #{down_forward.4} parent=11 // pred_check_branch
        %173 = sbr.rel (%p171) target = $region20
      $region19: #{down_forward.4} parent=11 // pred_region
        _
      $region20: #{down_forward.4} parent=11 // pred_fallthru
        _
      // Predicated region
      $region21: #{down_forward.4} parent=11 // pred_check
        %p174 = pneg %p101
      $region22: #{down_forward.4} parent=11 // pred_check_branch
        %176 = sbr.rel (%p174) target = $region24
      $region23: #{down_forward.4} parent=11 // pred_region
        _
      $region24: #{down_forward.4} parent=11 // pred_fallthru
        _
    $region12: #{down_forward.4} parent=5 // pred_fallthru
      _
    %p177 = scmp.lt.s32.totalorder %s12, 2
    // Predicated region
    $region25: #{down_forward.4} parent=5 // pred_check
      %p178 = pneg %p177
    $region26: #{down_forward.4} parent=5 // pred_check_branch
      %180 = sbr.rel (%p178) target = $region28
    $region27: #{down_forward.4} parent=5 // pred_region
      // Predicated region
      $region29: #{down_forward.4} parent=27 // pred_check
        %p181 = pneg %p32
      $region30: #{down_forward.4} parent=27 // pred_check_branch
        %183 = sbr.rel (%p181) target = $region32
      $region31: #{down_forward.4} parent=27 // pred_region
        %p184 = scmp.lt.s32.totalorder %s12, 1
        %s185 = scalar_select %p184, %s12, 1
        %s186 = smul.addr %s185, 8
        %s187 = smul.addr %s186, 8
        %s188 = scalar_lea.vmem %s0, %s187
      $region32: #{down_forward.4} parent=27 // pred_fallthru
        _
    $region28: #{down_forward.4} parent=5 // pred_fallthru
      _
    %p189 = scmp.le.s32.totalorder 1, %s12
    %p190 = scmp.lt.s32.totalorder %s12, 3
    %p191 = pnand %p189, %p190
    %p192 = pneg %p191
    // Predicated region
    $region33: #{down_forward.4} parent=5 // pred_check
      _
    $region34: #{down_forward.4} parent=5 // pred_check_branch
      %194 = sbr.rel (%p191) target = $region36
    $region35: #{down_forward.4} parent=5 // pred_region
      %s195 = ssub.s32 %s12, 1
      %p196 = scmp.lt.s32.totalorder %s17, 1
      %s197 = scalar_select %p196, %s17, 1
      %s198 = smul.addr %s197, 8
      %s199 = smul.addr %s198, 8
      %s200 = scalar_lea.vmem %s0, %s199
      %p201 = pneg %p38
      %p202 = pneg %p35
      %p203 = pneg %p59
      %p204 = pneg %p56
      %p205 = pneg %p80
      %p206 = pneg %p77
      %p207 = pneg %p101
      %p208 = pneg %p98
      %p209 = pneg %p127
      %p210 = pneg %p124
      %p211 = scmp.lt.s32.totalorder %s17, 1
      %s212 = scalar_select %p211, %s17, 1
      %s213 = smul.addr %s212, 8
      %s214 = smul.addr %s213, 8
      %s215 = scalar_lea.vmem %s4, %s214
      %p216 = pneg %p153
      %p217 = pneg %p150
      %p218 = scmp.lt.s32.totalorder %s17, 1
      %s219 = scalar_select %p218, %s17, 1
      %s220 = smul.addr %s219, 2
      %s221 = scalar_lea.vmem %s5, %s220
      %p222 = scmp.lt.s32.totalorder %s17, 1
      %s223 = scalar_select %p222, %s17, 1
      %s224 = smul.addr %s223, 8
      %s225 = smul.addr %s224, 8
      %s226 = scalar_lea.vmem %s0, %s225
      %p227 = scmp.lt.s32.totalorder %s17, 1
      %s228 = scalar_select %p227, %s17, 1
      %s229 = smul.addr %s228, 8
      %s230 = smul.addr %s229, 8
      %s231 = scalar_lea.vmem %s4, %s230
      %p232 = scmp.lt.s32.totalorder %s17, 1
      %s233 = scalar_select %p232, %s17, 1
      %s234 = smul.addr %s233, 2
      %s235 = scalar_lea.vmem %s5, %s234
      %v236 = vld [vmem:[%s226] sm:$0xff]
      %v237 = vld [vmem:[%s226 + $0x8] sm:$0xff]
      %v238 = vld [vmem:[%s226 + $0x10] sm:$0xff]
      %v239 = vld [vmem:[%s226 + $0x18] sm:$0xff]
      %v240 = vld [vmem:[%s226 + $0x20] sm:$0xff]
      %v241 = vld [vmem:[%s226 + $0x28] sm:$0xff]
      %v242 = vld [vmem:[%s226 + $0x30] sm:$0xff]
      %v243 = vld [vmem:[%s226 + $0x38] sm:$0xff]
      %v244 = vld [vmem:[%s1] sm:$0x1]
      %v246 = vlaneseq
      %v247 = vshrl.u32 %v246, 7
      %v248 = vsub.s32 0, %v247
      %v249 = vrot.slane %v244, %v248
      %v251 = vmul.f32 %v236, %v249
      %v252 = vmul.f32 %v237, %v249
      %v253 = vmul.f32 %v238, %v249
      %v254 = vmul.f32 %v239, %v249
      %v255 = vmul.f32 %v240, %v249
      %v256 = vmul.f32 %v241, %v249
      %v257 = vmul.f32 %v242, %v249
      %v258 = vmul.f32 %v243, %v249
      %v259 = vld [vmem:[%s2] sm:$0x1]
      %v261 = vlaneseq
      %v262 = vshrl.u32 %v261, 7
      %v263 = vsub.s32 0, %v262
      %v264 = vrot.slane %v259, %v263
      %v266 = vadd.f32 %v251, %v264
      %v267 = vadd.f32 %v252, %v264
      %v268 = vadd.f32 %v253, %v264
      %v269 = vadd.f32 %v254, %v264
      %v270 = vadd.f32 %v255, %v264
      %v271 = vadd.f32 %v256, %v264
      %v272 = vadd.f32 %v257, %v264
      %v273 = vadd.f32 %v258, %v264
      %v274 = vmax.f32 %v266, 0.0
      %v275 = vmax.f32 %v267, 0.0
      %v276 = vmax.f32 %v268, 0.0
      %v277 = vmax.f32 %v269, 0.0
      %v278 = vmax.f32 %v270, 0.0
      %v279 = vmax.f32 %v271, 0.0
      %v280 = vmax.f32 %v272, 0.0
      %v281 = vmax.f32 %v273, 0.0
      %282 = vst [vmem:[#allocation2] sm:$0xff] 0.0
      %283 = vst [vmem:[#allocation2 + $0x8] sm:$0x3] 0.0
      %s284 = scalar_lea.vmem [#allocation2], 144
      %285 = vst [vmem:[%s284] sm:$0xff] 0.0
      %286 = vst [vmem:[%s284 + $0x8] sm:$0x3] 0.0
      %s287 = scalar_lea.vmem [#allocation2], 16
      %288 = vst [vmem:[%s287] sm:$0x1] 0.0
      %289 = vst [vmem:[%s287 + $0x10] sm:$0x1] 0.0
      %290 = vst [vmem:[%s287 + $0x20] sm:$0x1] 0.0
      %291 = vst [vmem:[%s287 + $0x30] sm:$0x1] 0.0
      %292 = vst [vmem:[%s287 + $0x40] sm:$0x1] 0.0
      %293 = vst [vmem:[%s287 + $0x50] sm:$0x1] 0.0
      %294 = vst [vmem:[%s287 + $0x60] sm:$0x1] 0.0
      %295 = vst [vmem:[%s287 + $0x70] sm:$0x1] 0.0
      %296 = vst [vmem:[%s287 + $0x9] sm:$0x1] 0.0
      %297 = vst [vmem:[%s287 + $0x19] sm:$0x1] 0.0
      %298 = vst [vmem:[%s287 + $0x29] sm:$0x1] 0.0
      %299 = vst [vmem:[%s287 + $0x39] sm:$0x1] 0.0
      %300 = vst [vmem:[%s287 + $0x49] sm:$0x1] 0.0
      %301 = vst [vmem:[%s287 + $0x59] sm:$0x1] 0.0
      %302 = vst [vmem:[%s287 + $0x69] sm:$0x1] 0.0
      %303 = vst [vmem:[%s287 + $0x79] sm:$0x1] 0.0
      %304 = vst [vmem:[%s287 + $0x1] sm:$0xff] %v274
      %305 = vst [vmem:[%s287 + $0x11] sm:$0xff] %v275
      %306 = vst [vmem:[%s287 + $0x21] sm:$0xff] %v276
      %307 = vst [vmem:[%s287 + $0x31] sm:$0xff] %v277
      %308 = vst [vmem:[%s287 + $0x41] sm:$0xff] %v278
      %309 = vst [vmem:[%s287 + $0x51] sm:$0xff] %v279
      %310 = vst [vmem:[%s287 + $0x61] sm:$0xff] %v280
      %311 = vst [vmem:[%s287 + $0x71] sm:$0xff] %v281
      %v312 = vld [vmem:[#allocation2] sm:$0xff]
      %v313 = vld [vmem:[#allocation2 + $0x10] sm:$0xff]
      %v314 = vld [vmem:[#allocation2 + $0x20] sm:$0xff]
      %v315 = vld [vmem:[#allocation2 + $0x30] sm:$0xff]
      %v316 = vld [vmem:[#allocation2 + $0x40] sm:$0xff]
      %v317 = vld [vmem:[#allocation2 + $0x50] sm:$0xff]
      %v318 = vld [vmem:[#allocation2 + $0x60] sm:$0xff]
      %v319 = vld [vmem:[#allocation2 + $0x70] sm:$0xff]
      %320 = vst [vmem:[#allocation3] sm:$0xff] %v312
      %321 = vst [vmem:[#allocation3 + $0x48] sm:$0xff] %v313
      %322 = vst [vmem:[#allocation3 + $0x90] sm:$0xff] %v314
      %323 = vst [vmem:[#allocation3 + $0xd8] sm:$0xff] %v315
      %324 = vst [vmem:[#allocation3 + $0x120] sm:$0xff] %v316
      %325 = vst [vmem:[#allocation3 + $0x168] sm:$0xff] %v317
      %326 = vst [vmem:[#allocation3 + $0x1b0] sm:$0xff] %v318
      %327 = vst [vmem:[#allocation3 + $0x1f8] sm:$0xff] %v319
      %v328 = vld [vmem:[#allocation2 + $0x1] sm:$0xff]
      %v329 = vld [vmem:[#allocation2 + $0x11] sm:$0xff]
      %v330 = vld [vmem:[#allocation2 + $0x21] sm:$0xff]
      %v331 = vld [vmem:[#allocation2 + $0x31] sm:$0xff]
      %v332 = vld [vmem:[#allocation2 + $0x41] sm:$0xff]
      %v333 = vld [vmem:[#allocation2 + $0x51] sm:$0xff]
      %v334 = vld [vmem:[#allocation2 + $0x61] sm:$0xff]
      %v335 = vld [vmem:[#allocation2 + $0x71] sm:$0xff]
      %336 = vst [vmem:[#allocation3 + $0x8] sm:$0xff] %v328
      %337 = vst [vmem:[#allocation3 + $0x50] sm:$0xff] %v329
      %338 = vst [vmem:[#allocation3 + $0x98] sm:$0xff] %v330
      %339 = vst [vmem:[#allocation3 + $0xe0] sm:$0xff] %v331
      %340 = vst [vmem:[#allocation3 + $0x128] sm:$0xff] %v332
      %341 = vst [vmem:[#allocation3 + $0x170] sm:$0xff] %v333
      %342 = vst [vmem:[#allocation3 + $0x1b8] sm:$0xff] %v334
      %343 = vst [vmem:[#allocation3 + $0x200] sm:$0xff] %v335
      %v344 = vld [vmem:[#allocation2 + $0x2] sm:$0xff]
      %v345 = vld [vmem:[#allocation2 + $0x12] sm:$0xff]
      %v346 = vld [vmem:[#allocation2 + $0x22] sm:$0xff]
      %v347 = vld [vmem:[#allocation2 + $0x32] sm:$0xff]
      %v348 = vld [vmem:[#allocation2 + $0x42] sm:$0xff]
      %v349 = vld [vmem:[#allocation2 + $0x52] sm:$0xff]
      %v350 = vld [vmem:[#allocation2 + $0x62] sm:$0xff]
      %v351 = vld [vmem:[#allocation2 + $0x72] sm:$0xff]
      %352 = vst [vmem:[#allocation3 + $0x10] sm:$0xff] %v344
      %353 = vst [vmem:[#allocation3 + $0x58] sm:$0xff] %v345
      %354 = vst [vmem:[#allocation3 + $0xa0] sm:$0xff] %v346
      %355 = vst [vmem:[#allocation3 + $0xe8] sm:$0xff] %v347
      %356 = vst [vmem:[#allocation3 + $0x130] sm:$0xff] %v348
      %357 = vst [vmem:[#allocation3 + $0x178] sm:$0xff] %v349
      %358 = vst [vmem:[#allocation3 + $0x1c0] sm:$0xff] %v350
      %359 = vst [vmem:[#allocation3 + $0x208] sm:$0xff] %v351
      %v360 = vld [vmem:[%s287] sm:$0xff]
      %v361 = vld [vmem:[%s287 + $0x10] sm:$0xff]
      %v362 = vld [vmem:[%s287 + $0x20] sm:$0xff]
      %v363 = vld [vmem:[%s287 + $0x30] sm:$0xff]
      %v364 = vld [vmem:[%s287 + $0x40] sm:$0xff]
      %v365 = vld [vmem:[%s287 + $0x50] sm:$0xff]
      %v366 = vld [vmem:[%s287 + $0x60] sm:$0xff]
      %v367 = vld [vmem:[%s287 + $0x70] sm:$0xff]
      %368 = vst [vmem:[#allocation3 + $0x18] sm:$0xff] %v360
      %369 = vst [vmem:[#allocation3 + $0x60] sm:$0xff] %v361
      %370 = vst [vmem:[#allocation3 + $0xa8] sm:$0xff] %v362
      %371 = vst [vmem:[#allocation3 + $0xf0] sm:$0xff] %v363
      %372 = vst [vmem:[#allocation3 + $0x138] sm:$0xff] %v364
      %373 = vst [vmem:[#allocation3 + $0x180] sm:$0xff] %v365
      %374 = vst [vmem:[#allocation3 + $0x1c8] sm:$0xff] %v366
      %375 = vst [vmem:[#allocation3 + $0x210] sm:$0xff] %v367
      %v376 = vld [vmem:[%s287 + $0x1] sm:$0xff]
      %v377 = vld [vmem:[%s287 + $0x11] sm:$0xff]
      %v378 = vld [vmem:[%s287 + $0x21] sm:$0xff]
      %v379 = vld [vmem:[%s287 + $0x31] sm:$0xff]
      %v380 = vld [vmem:[%s287 + $0x41] sm:$0xff]
      %v381 = vld [vmem:[%s287 + $0x51] sm:$0xff]
      %v382 = vld [vmem:[%s287 + $0x61] sm:$0xff]
      %v383 = vld [vmem:[%s287 + $0x71] sm:$0xff]
      %384 = vst [vmem:[#allocation3 + $0x20] sm:$0xff] %v376
      %385 = vst [vmem:[#allocation3 + $0x68] sm:$0xff] %v377
      %386 = vst [vmem:[#allocation3 + $0xb0] sm:$0xff] %v378
      %387 = vst [vmem:[#allocation3 + $0xf8] sm:$0xff] %v379
      %388 = vst [vmem:[#allocation3 + $0x140] sm:$0xff] %v380
      %389 = vst [vmem:[#allocation3 + $0x188] sm:$0xff] %v381
      %390 = vst [vmem:[#allocation3 + $0x1d0] sm:$0xff] %v382
      %391 = vst [vmem:[#allocation3 + $0x218] sm:$0xff] %v383
      %v392 = vld [vmem:[%s287 + $0x2] sm:$0xff]
      %v393 = vld [vmem:[%s287 + $0x12] sm:$0xff]
      %v394 = vld [vmem:[%s287 + $0x22] sm:$0xff]
      %v395 = vld [vmem:[%s287 + $0x32] sm:$0xff]
      %v396 = vld [vmem:[%s287 + $0x42] sm:$0xff]
      %v397 = vld [vmem:[%s287 + $0x52] sm:$0xff]
      %v398 = vld [vmem:[%s287 + $0x62] sm:$0xff]
      %v399 = vld [vmem:[%s287 + $0x72] sm:$0xff]
      %400 = vst [vmem:[#allocation3 + $0x28] sm:$0xff] %v392
      %401 = vst [vmem:[#allocation3 + $0x70] sm:$0xff] %v393
      %402 = vst [vmem:[#allocation3 + $0xb8] sm:$0xff] %v394
      %403 = vst [vmem:[#allocation3 + $0x100] sm:$0xff] %v395
      %404 = vst [vmem:[#allocation3 + $0x148] sm:$0xff] %v396
      %405 = vst [vmem:[#allocation3 + $0x190] sm:$0xff] %v397
      %406 = vst [vmem:[#allocation3 + $0x1d8] sm:$0xff] %v398
      %407 = vst [vmem:[#allocation3 + $0x220] sm:$0xff] %v399
      %s408 = scalar_lea.vmem [#allocation2], 32
      %v409 = vld [vmem:[%s408] sm:$0xff]
      %v410 = vld [vmem:[%s408 + $0x10] sm:$0xff]
      %v411 = vld [vmem:[%s408 + $0x20] sm:$0xff]
      %v412 = vld [vmem:[%s408 + $0x30] sm:$0xff]
      %v413 = vld [vmem:[%s408 + $0x40] sm:$0xff]
      %v414 = vld [vmem:[%s408 + $0x50] sm:$0xff]
      %v415 = vld [vmem:[%s408 + $0x60] sm:$0xff]
      %v416 = vld [vmem:[%s408 + $0x70] sm:$0xff]
      %417 = vst [vmem:[#allocation3 + $0x30] sm:$0xff] %v409
      %418 = vst [vmem:[#allocation3 + $0x78] sm:$0xff] %v410
      %419 = vst [vmem:[#allocation3 + $0xc0] sm:$0xff] %v411
      %420 = vst [vmem:[#allocation3 + $0x108] sm:$0xff] %v412
      %421 = vst [vmem:[#allocation3 + $0x150] sm:$0xff] %v413
      %422 = vst [vmem:[#allocation3 + $0x198] sm:$0xff] %v414
      %423 = vst [vmem:[#allocation3 + $0x1e0] sm:$0xff] %v415
      %424 = vst [vmem:[#allocation3 + $0x228] sm:$0xff] %v416
      %v425 = vld [vmem:[%s408 + $0x1] sm:$0xff]
      %v426 = vld [vmem:[%s408 + $0x11] sm:$0xff]
      %v427 = vld [vmem:[%s408 + $0x21] sm:$0xff]
      %v428 = vld [vmem:[%s408 + $0x31] sm:$0xff]
      %v429 = vld [vmem:[%s408 + $0x41] sm:$0xff]
      %v430 = vld [vmem:[%s408 + $0x51] sm:$0xff]
      %v431 = vld [vmem:[%s408 + $0x61] sm:$0xff]
      %v432 = vld [vmem:[%s408 + $0x71] sm:$0xff]
      %433 = vst [vmem:[#allocation3 + $0x38] sm:$0xff] %v425
      %434 = vst [vmem:[#allocation3 + $0x80] sm:$0xff] %v426
      %435 = vst [vmem:[#allocation3 + $0xc8] sm:$0xff] %v427
      %436 = vst [vmem:[#allocation3 + $0x110] sm:$0xff] %v428
      %437 = vst [vmem:[#allocation3 + $0x158] sm:$0xff] %v429
      %438 = vst [vmem:[#allocation3 + $0x1a0] sm:$0xff] %v430
      %439 = vst [vmem:[#allocation3 + $0x1e8] sm:$0xff] %v431
      %440 = vst [vmem:[#allocation3 + $0x230] sm:$0xff] %v432
      %v441 = vld [vmem:[%s408 + $0x2] sm:$0xff]
      %v442 = vld [vmem:[%s408 + $0x12] sm:$0xff]
      %v443 = vld [vmem:[%s408 + $0x22] sm:$0xff]
      %v444 = vld [vmem:[%s408 + $0x32] sm:$0xff]
      %v445 = vld [vmem:[%s408 + $0x42] sm:$0xff]
      %v446 = vld [vmem:[%s408 + $0x52] sm:$0xff]
      %v447 = vld [vmem:[%s408 + $0x62] sm:$0xff]
      %v448 = vld [vmem:[%s408 + $0x72] sm:$0xff]
      %449 = vst [vmem:[#allocation3 + $0x40] sm:$0xff] %v441
      %450 = vst [vmem:[#allocation3 + $0x88] sm:$0xff] %v442
      %451 = vst [vmem:[#allocation3 + $0xd0] sm:$0xff] %v443
      %452 = vst [vmem:[#allocation3 + $0x118] sm:$0xff] %v444
      %453 = vst [vmem:[#allocation3 + $0x160] sm:$0xff] %v445
      %454 = vst [vmem:[#allocation3 + $0x1a8] sm:$0xff] %v446
      %455 = vst [vmem:[#allocation3 + $0x1f0] sm:$0xff] %v447
      %456 = vst [vmem:[#allocation3 + $0x238] sm:$0xff] %v448
      %v457 = vld [vmem:[#allocation3] sm:$0xff]
      %v458 = vld [vmem:[#allocation3 + $0x8] sm:$0xff]
      %v459 = vld [vmem:[#allocation3 + $0x10] sm:$0xff]
      %v460 = vld [vmem:[#allocation3 + $0x18] sm:$0xff]
      %v461 = vld [vmem:[#allocation3 + $0x20] sm:$0xff]
      %v462 = vld [vmem:[#allocation3 + $0x28] sm:$0xff]
      %v463 = vld [vmem:[#allocation3 + $0x30] sm:$0xff]
      %v464 = vld [vmem:[#allocation3 + $0x38] sm:$0xff]
      %v465 = vld [vmem:[#allocation3 + $0x40] sm:$0xff]
      %v466 = vld [vmem:[#allocation3 + $0x48] sm:$0xff]
      %v467 = vld [vmem:[#allocation3 + $0x50] sm:$0xff]
      %v468 = vld [vmem:[#allocation3 + $0x58] sm:$0xff]
      %v469 = vld [vmem:[#allocation3 + $0x60] sm:$0xff]
      %v470 = vld [vmem:[#allocation3 + $0x68] sm:$0xff]
      %v471 = vld [vmem:[#allocation3 + $0x70] sm:$0xff]
      %v472 = vld [vmem:[#allocation3 + $0x78] sm:$0xff]
      %v473 = vld [vmem:[#allocation3 + $0x80] sm:$0xff]
      %v474 = vld [vmem:[#allocation3 + $0x88] sm:$0xff]
      %v475 = vld [vmem:[#allocation3 + $0x90] sm:$0xff]
      %v476 = vld [vmem:[#allocation3 + $0x98] sm:$0xff]
      %v477 = vld [vmem:[#allocation3 + $0xa0] sm:$0xff]
      %v478 = vld [vmem:[#allocation3 + $0xa8] sm:$0xff]
      %v479 = vld [vmem:[#allocation3 + $0xb0] sm:$0xff]
      %v480 = vld [vmem:[#allocation3 + $0xb8] sm:$0xff]
      %v481 = vld [vmem:[#allocation3 + $0xc0] sm:$0xff]
      %v482 = vld [vmem:[#allocation3 + $0xc8] sm:$0xff]
      %v483 = vld [vmem:[#allocation3 + $0xd0] sm:$0xff]
      %v484 = vld [vmem:[#allocation3 + $0xd8] sm:$0xff]
      %v485 = vld [vmem:[#allocation3 + $0xe0] sm:$0xff]
      %v486 = vld [vmem:[#allocation3 + $0xe8] sm:$0xff]
      %v487 = vld [vmem:[#allocation3 + $0xf0] sm:$0xff]
      %v488 = vld [vmem:[#allocation3 + $0xf8] sm:$0xff]
      %v489 = vld [vmem:[#allocation3 + $0x100] sm:$0xff]
      %v490 = vld [vmem:[#allocation3 + $0x108] sm:$0xff]
      %v491 = vld [vmem:[#allocation3 + $0x110] sm:$0xff]
      %v492 = vld [vmem:[#allocation3 + $0x118] sm:$0xff]
      %v493 = vld [vmem:[#allocation3 + $0x120] sm:$0xff]
      %v494 = vld [vmem:[#allocation3 + $0x128] sm:$0xff]
      %v495 = vld [vmem:[#allocation3 + $0x130] sm:$0xff]
      %v496 = vld [vmem:[#allocation3 + $0x138] sm:$0xff]
      %v497 = vld [vmem:[#allocation3 + $0x140] sm:$0xff]
      %v498 = vld [vmem:[#allocation3 + $0x148] sm:$0xff]
      %v499 = vld [vmem:[#allocation3 + $0x150] sm:$0xff]
      %v500 = vld [vmem:[#allocation3 + $0x158] sm:$0xff]
      %v501 = vld [vmem:[#allocation3 + $0x160] sm:$0xff]
      %v502 = vld [vmem:[#allocation3 + $0x168] sm:$0xff]
      %v503 = vld [vmem:[#allocation3 + $0x170] sm:$0xff]
      %v504 = vld [vmem:[#allocation3 + $0x178] sm:$0xff]
      %v505 = vld [vmem:[#allocation3 + $0x180] sm:$0xff]
      %v506 = vld [vmem:[#allocation3 + $0x188] sm:$0xff]
      %v507 = vld [vmem:[#allocation3 + $0x190] sm:$0xff]
      %v508 = vld [vmem:[#allocation3 + $0x198] sm:$0xff]
      %v509 = vld [vmem:[#allocation3 + $0x1a0] sm:$0xff]
      %v510 = vld [vmem:[#allocation3 + $0x1a8] sm:$0xff]
      %v511 = vld [vmem:[#allocation3 + $0x1b0] sm:$0xff]
      %v512 = vld [vmem:[#allocation3 + $0x1b8] sm:$0xff]
      %v513 = vld [vmem:[#allocation3 + $0x1c0] sm:$0xff]
      %v514 = vld [vmem:[#allocation3 + $0x1c8] sm:$0xff]
      %v515 = vld [vmem:[#allocation3 + $0x1d0] sm:$0xff]
      %v516 = vld [vmem:[#allocation3 + $0x1d8] sm:$0xff]
      %v517 = vld [vmem:[#allocation3 + $0x1e0] sm:$0xff]
      %v518 = vld [vmem:[#allocation3 + $0x1e8] sm:$0xff]
      %v519 = vld [vmem:[#allocation3 + $0x1f0] sm:$0xff]
      %v520 = vld [vmem:[#allocation3 + $0x1f8] sm:$0xff]
      %v521 = vld [vmem:[#allocation3 + $0x200] sm:$0xff]
      %v522 = vld [vmem:[#allocation3 + $0x208] sm:$0xff]
      %v523 = vld [vmem:[#allocation3 + $0x210] sm:$0xff]
      %v524 = vld [vmem:[#allocation3 + $0x218] sm:$0xff]
      %v525 = vld [vmem:[#allocation3 + $0x220] sm:$0xff]
      %v526 = vld [vmem:[#allocation3 + $0x228] sm:$0xff]
      %v527 = vld [vmem:[#allocation3 + $0x230] sm:$0xff]
      %v528 = vld [vmem:[#allocation3 + $0x238] sm:$0xff]
      %v529 = vld [vmem:[%s3] sm:$0xff]
      %v530 = vld [vmem:[%s3 + $0x8] sm:$0xff]
      %v531 = vld [vmem:[%s3 + $0x10] sm:$0xff]
      %v532 = vld [vmem:[%s3 + $0x18] sm:$0xff]
      %v533 = vld [vmem:[%s3 + $0x20] sm:$0xff]
      %v534 = vld [vmem:[%s3 + $0x28] sm:$0xff]
      %v535 = vld [vmem:[%s3 + $0x30] sm:$0xff]
      %v536 = vld [vmem:[%s3 + $0x38] sm:$0xff]
      %v537 = vld [vmem:[%s3 + $0x40] sm:$0xff]
      %v538 = vld [vmem:[%s3 + $0x48] sm:$0xff]
      %v539 = vld [vmem:[%s3 + $0x50] sm:$0xff]
      %v540 = vld [vmem:[%s3 + $0x58] sm:$0xff]
      %v541 = vld [vmem:[%s3 + $0x60] sm:$0xff]
      %v542 = vld [vmem:[%s3 + $0x68] sm:$0xff]
      %v543 = vld [vmem:[%s3 + $0x70] sm:$0xff]
      %v544 = vld [vmem:[%s3 + $0x78] sm:$0xff]
      %v545 = vld [vmem:[%s3 + $0x80] sm:$0xff]
      %v546 = vld [vmem:[%s3 + $0x88] sm:$0xff]
      %v547 = vld [vmem:[%s3 + $0x90] sm:$0xff]
      %v548 = vld [vmem:[%s3 + $0x98] sm:$0xff]
      %v549 = vld [vmem:[%s3 + $0xa0] sm:$0xff]
      %v550 = vld [vmem:[%s3 + $0xa8] sm:$0xff]
      %v551 = vld [vmem:[%s3 + $0xb0] sm:$0xff]
      %v552 = vld [vmem:[%s3 + $0xb8] sm:$0xff]
      %v553 = vld [vmem:[%s3 + $0xc0] sm:$0xff]
      %v554 = vld [vmem:[%s3 + $0xc8] sm:$0xff]
      %v555 = vld [vmem:[%s3 + $0xd0] sm:$0xff]
      %v556 = vld [vmem:[%s3 + $0xd8] sm:$0xff]
      %v557 = vld [vmem:[%s3 + $0xe0] sm:$0xff]
      %v558 = vld [vmem:[%s3 + $0xe8] sm:$0xff]
      %v559 = vld [vmem:[%s3 + $0xf0] sm:$0xff]
      %v560 = vld [vmem:[%s3 + $0xf8] sm:$0xff]
      %v561 = vld [vmem:[%s3 + $0x100] sm:$0xff]
      %v562 = vld [vmem:[%s3 + $0x108] sm:$0xff]
      %v563 = vld [vmem:[%s3 + $0x110] sm:$0xff]
      %v564 = vld [vmem:[%s3 + $0x118] sm:$0xff]
      %v565 = vld [vmem:[%s3 + $0x120] sm:$0xff]
      %v566 = vld [vmem:[%s3 + $0x128] sm:$0xff]
      %v567 = vld [vmem:[%s3 + $0x130] sm:$0xff]
      %v568 = vld [vmem:[%s3 + $0x138] sm:$0xff]
      %v569 = vld [vmem:[%s3 + $0x140] sm:$0xff]
      %v570 = vld [vmem:[%s3 + $0x148] sm:$0xff]
      %v571 = vld [vmem:[%s3 + $0x150] sm:$0xff]
      %v572 = vld [vmem:[%s3 + $0x158] sm:$0xff]
      %v573 = vld [vmem:[%s3 + $0x160] sm:$0xff]
      %v574 = vld [vmem:[%s3 + $0x168] sm:$0xff]
      %v575 = vld [vmem:[%s3 + $0x170] sm:$0xff]
      %v576 = vld [vmem:[%s3 + $0x178] sm:$0xff]
      %v577 = vld [vmem:[%s3 + $0x180] sm:$0xff]
      %v578 = vld [vmem:[%s3 + $0x188] sm:$0xff]
      %v579 = vld [vmem:[%s3 + $0x190] sm:$0xff]
      %v580 = vld [vmem:[%s3 + $0x198] sm:$0xff]
      %v581 = vld [vmem:[%s3 + $0x1a0] sm:$0xff]
      %v582 = vld [vmem:[%s3 + $0x1a8] sm:$0xff]
      %v583 = vld [vmem:[%s3 + $0x1b0] sm:$0xff]
      %v584 = vld [vmem:[%s3 + $0x1b8] sm:$0xff]
      %v585 = vld [vmem:[%s3 + $0x1c0] sm:$0xff]
      %v586 = vld [vmem:[%s3 + $0x1c8] sm:$0xff]
      %v587 = vld [vmem:[%s3 + $0x1d0] sm:$0xff]
      %v588 = vld [vmem:[%s3 + $0x1d8] sm:$0xff]
      %v589 = vld [vmem:[%s3 + $0x1e0] sm:$0xff]
      %v590 = vld [vmem:[%s3 + $0x1e8] sm:$0xff]
      %v591 = vld [vmem:[%s3 + $0x1f0] sm:$0xff]
      %v592 = vld [vmem:[%s3 + $0x1f8] sm:$0xff]
      %v593 = vld [vmem:[%s3 + $0x200] sm:$0xff]
      %v594 = vld [vmem:[%s3 + $0x208] sm:$0xff]
      %v595 = vld [vmem:[%s3 + $0x210] sm:$0xff]
      %v596 = vld [vmem:[%s3 + $0x218] sm:$0xff]
      %v597 = vld [vmem:[%s3 + $0x220] sm:$0xff]
      %v598 = vld [vmem:[%s3 + $0x228] sm:$0xff]
      %v599 = vld [vmem:[%s3 + $0x230] sm:$0xff]
      %v600 = vld [vmem:[%s3 + $0x238] sm:$0xff]
      %v601 = vld [vmem:[%s3 + $0x240] sm:$0xff]
      %v602 = vld [vmem:[%s3 + $0x248] sm:$0xff]
      %v603 = vld [vmem:[%s3 + $0x250] sm:$0xff]
      %v604 = vld [vmem:[%s3 + $0x258] sm:$0xff]
      %v605 = vld [vmem:[%s3 + $0x260] sm:$0xff]
      %v606 = vld [vmem:[%s3 + $0x268] sm:$0xff]
      %v607 = vld [vmem:[%s3 + $0x270] sm:$0xff]
      %v608 = vld [vmem:[%s3 + $0x278] sm:$0xff]
      %v609 = vld [vmem:[%s3 + $0x280] sm:$0xff]
      %v610 = vld [vmem:[%s3 + $0x288] sm:$0xff]
      %v611 = vld [vmem:[%s3 + $0x290] sm:$0xff]
      %v612 = vld [vmem:[%s3 + $0x298] sm:$0xff]
      %v613 = vld [vmem:[%s3 + $0x2a0] sm:$0xff]
      %v614 = vld [vmem:[%s3 + $0x2a8] sm:$0xff]
      %v615 = vld [vmem:[%s3 + $0x2b0] sm:$0xff]
      %v616 = vld [vmem:[%s3 + $0x2b8] sm:$0xff]
      %v617 = vld [vmem:[%s3 + $0x2c0] sm:$0xff]
      %v618 = vld [vmem:[%s3 + $0x2c8] sm:$0xff]
      %v619 = vld [vmem:[%s3 + $0x2d0] sm:$0xff]
      %v620 = vld [vmem:[%s3 + $0x2d8] sm:$0xff]
      %v621 = vld [vmem:[%s3 + $0x2e0] sm:$0xff]
      %v622 = vld [vmem:[%s3 + $0x2e8] sm:$0xff]
      %v623 = vld [vmem:[%s3 + $0x2f0] sm:$0xff]
      %v624 = vld [vmem:[%s3 + $0x2f8] sm:$0xff]
      %v625 = vld [vmem:[%s3 + $0x300] sm:$0xff]
      %v626 = vld [vmem:[%s3 + $0x308] sm:$0xff]
      %v627 = vld [vmem:[%s3 + $0x310] sm:$0xff]
      %v628 = vld [vmem:[%s3 + $0x318] sm:$0xff]
      %v629 = vld [vmem:[%s3 + $0x320] sm:$0xff]
      %v630 = vld [vmem:[%s3 + $0x328] sm:$0xff]
      %v631 = vld [vmem:[%s3 + $0x330] sm:$0xff]
      %v632 = vld [vmem:[%s3 + $0x338] sm:$0xff]
      %v633 = vld [vmem:[%s3 + $0x340] sm:$0xff]
      %v634 = vld [vmem:[%s3 + $0x348] sm:$0xff]
      %v635 = vld [vmem:[%s3 + $0x350] sm:$0xff]
      %v636 = vld [vmem:[%s3 + $0x358] sm:$0xff]
      %v637 = vld [vmem:[%s3 + $0x360] sm:$0xff]
      %v638 = vld [vmem:[%s3 + $0x368] sm:$0xff]
      %v639 = vld [vmem:[%s3 + $0x370] sm:$0xff]
      %v640 = vld [vmem:[%s3 + $0x378] sm:$0xff]
      %v641 = vld [vmem:[%s3 + $0x380] sm:$0xff]
      %v642 = vld [vmem:[%s3 + $0x388] sm:$0xff]
      %v643 = vld [vmem:[%s3 + $0x390] sm:$0xff]
      %v644 = vld [vmem:[%s3 + $0x398] sm:$0xff]
      %v645 = vld [vmem:[%s3 + $0x3a0] sm:$0xff]
      %v646 = vld [vmem:[%s3 + $0x3a8] sm:$0xff]
      %v647 = vld [vmem:[%s3 + $0x3b0] sm:$0xff]
      %v648 = vld [vmem:[%s3 + $0x3b8] sm:$0xff]
      %v649 = vld [vmem:[%s3 + $0x3c0] sm:$0xff]
      %v650 = vld [vmem:[%s3 + $0x3c8] sm:$0xff]
      %v651 = vld [vmem:[%s3 + $0x3d0] sm:$0xff]
      %v652 = vld [vmem:[%s3 + $0x3d8] sm:$0xff]
      %v653 = vld [vmem:[%s3 + $0x3e0] sm:$0xff]
      %v654 = vld [vmem:[%s3 + $0x3e8] sm:$0xff]
      %v655 = vld [vmem:[%s3 + $0x3f0] sm:$0xff]
      %v656 = vld [vmem:[%s3 + $0x3f8] sm:$0xff]
      %v657 = vld [vmem:[%s3 + $0x400] sm:$0xff]
      %v658 = vld [vmem:[%s3 + $0x408] sm:$0xff]
      %v659 = vld [vmem:[%s3 + $0x410] sm:$0xff]
      %v660 = vld [vmem:[%s3 + $0x418] sm:$0xff]
      %v661 = vld [vmem:[%s3 + $0x420] sm:$0xff]
      %v662 = vld [vmem:[%s3 + $0x428] sm:$0xff]
      %v663 = vld [vmem:[%s3 + $0x430] sm:$0xff]
      %v664 = vld [vmem:[%s3 + $0x438] sm:$0xff]
      %v665 = vld [vmem:[%s3 + $0x440] sm:$0xff]
      %v666 = vld [vmem:[%s3 + $0x448] sm:$0xff]
      %v667 = vld [vmem:[%s3 + $0x450] sm:$0xff]
      %v668 = vld [vmem:[%s3 + $0x458] sm:$0xff]
      %v669 = vld [vmem:[%s3 + $0x460] sm:$0xff]
      %v670 = vld [vmem:[%s3 + $0x468] sm:$0xff]
      %v671 = vld [vmem:[%s3 + $0x470] sm:$0xff]
      %v672 = vld [vmem:[%s3 + $0x478] sm:$0xff]
      %673 = vmatprep.subr.mxu0 0.0
      %674 = vmatpush1.msra.mxu0 %v544
      %675 = vmatprep.subr.mxu0 0.0
      %676 = vmatpush1.msra.mxu0 %v543
      %677 = vmatprep.subr.mxu0 0.0
      %678 = vmatpush1.msra.mxu0 %v542
      %679 = vmatprep.subr.mxu0 0.0
      %680 = vmatpush1.msra.mxu0 %v541
      %681 = vmatprep.subr.mxu0 0.0
      %682 = vmatpush1.msra.mxu0 %v540
      %683 = vmatprep.subr.mxu0 0.0
      %684 = vmatpush1.msra.mxu0 %v539
      %685 = vmatprep.subr.mxu0 0.0
      %686 = vmatpush1.msra.mxu0 %v538
      %687 = vmatprep.subr.mxu0 0.0
      %688 = vmatpush1.msra.mxu0 %v537
      %689 = vmatprep.subr.mxu0 0.0
      %690 = vmatpush1.msra.mxu0 %v536
      %691 = vmatprep.subr.mxu0 0.0
      %692 = vmatpush1.msra.mxu0 %v535
      %693 = vmatprep.subr.mxu0 0.0
      %694 = vmatpush1.msra.mxu0 %v534
      %695 = vmatprep.subr.mxu0 0.0
      %696 = vmatpush1.msra.mxu0 %v533
      %697 = vmatprep.subr.mxu0 0.0
      %698 = vmatpush1.msra.mxu0 %v532
      %699 = vmatprep.subr.mxu0 0.0
      %700 = vmatpush1.msra.mxu0 %v531
      %701 = vmatprep.subr.mxu0 0.0
      %702 = vmatpush1.msra.mxu0 %v530
      %703 = vmatprep.subr.mxu0 0.0
      %704 = vmatpush1.msra.mxu0 %v529
      %705 = vmatprep.subr.mxu0 0.0
      %706 = vmatpush2.msra.mxu0 %v560
      %707 = vmatprep.subr.mxu0 0.0
      %708 = vmatpush2.msra.mxu0 %v559
      %709 = vmatprep.subr.mxu0 0.0
      %710 = vmatpush2.msra.mxu0 %v558
      %711 = vmatprep.subr.mxu0 0.0
      %712 = vmatpush2.msra.mxu0 %v557
      %713 = vmatprep.subr.mxu0 0.0
      %714 = vmatpush2.msra.mxu0 %v556
      %715 = vmatprep.subr.mxu0 0.0
      %716 = vmatpush2.msra.mxu0 %v555
      %717 = vmatprep.subr.mxu0 0.0
      %718 = vmatpush2.msra.mxu0 %v554
      %719 = vmatprep.subr.mxu0 0.0
      %720 = vmatpush2.msra.mxu0 %v553
      %721 = vmatprep.subr.mxu0 0.0
      %722 = vmatpush2.msra.mxu0 %v552
      %723 = vmatprep.subr.mxu0 0.0
      %724 = vmatpush2.msra.mxu0 %v551
      %725 = vmatprep.subr.mxu0 0.0
      %726 = vmatpush2.msra.mxu0 %v550
      %727 = vmatprep.subr.mxu0 0.0
      %728 = vmatpush2.msra.mxu0 %v549
      %729 = vmatprep.subr.mxu0 0.0
      %730 = vmatpush2.msra.mxu0 %v548
      %731 = vmatprep.subr.mxu0 0.0
      %732 = vmatpush2.msra.mxu0 %v547
      %733 = vmatprep.subr.mxu0 0.0
      %734 = vmatpush2.msra.mxu0 %v546
      %735 = vmatprep.subr.mxu0 0.0
      %736 = vmatpush2.msra.mxu0 %v545
      %737 = vmatprep.mubr.f32.mxu0 %v458
      %738 = vmatmul.mubr.f32.gmra.mxu0 %v457
      %v739 = vpop.f32.mrf.mxu0
      %v740 = vadd.f32 0.0, %v739
      %v741 = vpop.f32.mrf.mxu0
      %742 = vmatprep.mubr.f32.mxu0 %v467
      %743 = vmatmul.mubr.f32.gmra.mxu0 %v466
      %v744 = vpop.f32.mrf.mxu0
      %v745 = vadd.f32 0.0, %v744
      %v746 = vpop.f32.mrf.mxu0
      %747 = vmatprep.mubr.f32.mxu0 %v476
      %748 = vmatmul.mubr.f32.gmra.mxu0 %v475
      %v749 = vpop.f32.mrf.mxu0
      %v750 = vadd.f32 0.0, %v749
      %v751 = vpop.f32.mrf.mxu0
      %752 = vmatprep.mubr.f32.mxu0 %v485
      %753 = vmatmul.mubr.f32.gmra.mxu0 %v484
      %v754 = vpop.f32.mrf.mxu0
      %v755 = vadd.f32 0.0, %v754
      %v756 = vpop.f32.mrf.mxu0
      %757 = vmatprep.mubr.f32.mxu0 %v494
      %758 = vmatmul.mubr.f32.gmra.mxu0 %v493
      %v759 = vpop.f32.mrf.mxu0
      %v760 = vadd.f32 0.0, %v759
      %v761 = vpop.f32.mrf.mxu0
      %762 = vmatprep.mubr.f32.mxu0 %v503
      %763 = vmatmul.mubr.f32.gmra.mxu0 %v502
      %v764 = vpop.f32.mrf.mxu0
      %v765 = vadd.f32 0.0, %v764
      %v766 = vpop.f32.mrf.mxu0
      %767 = vmatprep.mubr.f32.mxu0 %v512
      %768 = vmatmul.mubr.f32.gmra.mxu0 %v511
      %v769 = vpop.f32.mrf.mxu0
      %v770 = vadd.f32 0.0, %v769
      %v771 = vpop.f32.mrf.mxu0
      %772 = vmatprep.mubr.f32.mxu0 %v521
      %773 = vmatmul.mubr.f32.gmra.mxu0 %v520
      %v774 = vpop.f32.mrf.mxu0
      %v775 = vadd.f32 0.0, %v774
      %v776 = vpop.f32.mrf.mxu0
      %777 = vdwg.mxu0
      %778 = vmatprep.subr.mxu0 0.0
      %779 = vmatpush1.msra.mxu0 %v576
      %780 = vmatprep.subr.mxu0 0.0
      %781 = vmatpush1.msra.mxu0 %v575
      %782 = vmatprep.subr.mxu0 0.0
      %783 = vmatpush1.msra.mxu0 %v574
      %784 = vmatprep.subr.mxu0 0.0
      %785 = vmatpush1.msra.mxu0 %v573
      %786 = vmatprep.subr.mxu0 0.0
      %787 = vmatpush1.msra.mxu0 %v572
      %788 = vmatprep.subr.mxu0 0.0
      %789 = vmatpush1.msra.mxu0 %v571
      %790 = vmatprep.subr.mxu0 0.0
      %791 = vmatpush1.msra.mxu0 %v570
      %792 = vmatprep.subr.mxu0 0.0
      %793 = vmatpush1.msra.mxu0 %v569
      %794 = vmatprep.subr.mxu0 0.0
      %795 = vmatpush1.msra.mxu0 %v568
      %796 = vmatprep.subr.mxu0 0.0
      %797 = vmatpush1.msra.mxu0 %v567
      %798 = vmatprep.subr.mxu0 0.0
      %799 = vmatpush1.msra.mxu0 %v566
      %800 = vmatprep.subr.mxu0 0.0
      %801 = vmatpush1.msra.mxu0 %v565
      %802 = vmatprep.subr.mxu0 0.0
      %803 = vmatpush1.msra.mxu0 %v564
      %804 = vmatprep.subr.mxu0 0.0
      %805 = vmatpush1.msra.mxu0 %v563
      %806 = vmatprep.subr.mxu0 0.0
      %807 = vmatpush1.msra.mxu0 %v562
      %808 = vmatprep.subr.mxu0 0.0
      %809 = vmatpush1.msra.mxu0 %v561
      %810 = vmatprep.subr.mxu0 0.0
      %811 = vmatpush2.msra.mxu0 %v592
      %812 = vmatprep.subr.mxu0 0.0
      %813 = vmatpush2.msra.mxu0 %v591
      %814 = vmatprep.subr.mxu0 0.0
      %815 = vmatpush2.msra.mxu0 %v590
      %816 = vmatprep.subr.mxu0 0.0
      %817 = vmatpush2.msra.mxu0 %v589
      %818 = vmatprep.subr.mxu0 0.0
      %819 = vmatpush2.msra.mxu0 %v588
      %820 = vmatprep.subr.mxu0 0.0
      %821 = vmatpush2.msra.mxu0 %v587
      %822 = vmatprep.subr.mxu0 0.0
      %823 = vmatpush2.msra.mxu0 %v586
      %824 = vmatprep.subr.mxu0 0.0
      %825 = vmatpush2.msra.mxu0 %v585
      %826 = vmatprep.subr.mxu0 0.0
      %827 = vmatpush2.msra.mxu0 %v584
      %828 = vmatprep.subr.mxu0 0.0
      %829 = vmatpush2.msra.mxu0 %v583
      %830 = vmatprep.subr.mxu0 0.0
      %831 = vmatpush2.msra.mxu0 %v582
      %832 = vmatprep.subr.mxu0 0.0
      %833 = vmatpush2.msra.mxu0 %v581
      %834 = vmatprep.subr.mxu0 0.0
      %835 = vmatpush2.msra.mxu0 %v580
      %836 = vmatprep.subr.mxu0 0.0
      %837 = vmatpush2.msra.mxu0 %v579
      %838 = vmatprep.subr.mxu0 0.0
      %839 = vmatpush2.msra.mxu0 %v578
      %840 = vmatprep.subr.mxu0 0.0
      %841 = vmatpush2.msra.mxu0 %v577
      %842 = vmatprep.mubr.f32.mxu0 %v460
      %843 = vmatmul.mubr.f32.gmra.mxu0 %v459
      %v844 = vpop.f32.mrf.mxu0
      %v845 = vadd.f32 %v740, %v844
      %v846 = vpop.f32.mrf.mxu0
      %847 = vmatprep.mubr.f32.mxu0 %v469
      %848 = vmatmul.mubr.f32.gmra.mxu0 %v468
      %v849 = vpop.f32.mrf.mxu0
      %v850 = vadd.f32 %v745, %v849
      %v851 = vpop.f32.mrf.mxu0
      %852 = vmatprep.mubr.f32.mxu0 %v478
      %853 = vmatmul.mubr.f32.gmra.mxu0 %v477
      %v854 = vpop.f32.mrf.mxu0
      %v855 = vadd.f32 %v750, %v854
      %v856 = vpop.f32.mrf.mxu0
      %857 = vmatprep.mubr.f32.mxu0 %v487
      %858 = vmatmul.mubr.f32.gmra.mxu0 %v486
      %v859 = vpop.f32.mrf.mxu0
      %v860 = vadd.f32 %v755, %v859
      %v861 = vpop.f32.mrf.mxu0
      %862 = vmatprep.mubr.f32.mxu0 %v496
      %863 = vmatmul.mubr.f32.gmra.mxu0 %v495
      %v864 = vpop.f32.mrf.mxu0
      %v865 = vadd.f32 %v760, %v864
      %v866 = vpop.f32.mrf.mxu0
      %867 = vmatprep.mubr.f32.mxu0 %v505
      %868 = vmatmul.mubr.f32.gmra.mxu0 %v504
      %v869 = vpop.f32.mrf.mxu0
      %v870 = vadd.f32 %v765, %v869
      %v871 = vpop.f32.mrf.mxu0
      %872 = vmatprep.mubr.f32.mxu0 %v514
      %873 = vmatmul.mubr.f32.gmra.mxu0 %v513
      %v874 = vpop.f32.mrf.mxu0
      %v875 = vadd.f32 %v770, %v874
      %v876 = vpop.f32.mrf.mxu0
      %877 = vmatprep.mubr.f32.mxu0 %v523
      %878 = vmatmul.mubr.f32.gmra.mxu0 %v522
      %v879 = vpop.f32.mrf.mxu0
      %v880 = vadd.f32 %v775, %v879
      %v881 = vpop.f32.mrf.mxu0
      %882 = vdwg.mxu0
      %883 = vmatprep.subr.mxu0 0.0
      %884 = vmatpush1.msra.mxu0 %v608
      %885 = vmatprep.subr.mxu0 0.0
      %886 = vmatpush1.msra.mxu0 %v607
      %887 = vmatprep.subr.mxu0 0.0
      %888 = vmatpush1.msra.mxu0 %v606
      %889 = vmatprep.subr.mxu0 0.0
      %890 = vmatpush1.msra.mxu0 %v605
      %891 = vmatprep.subr.mxu0 0.0
      %892 = vmatpush1.msra.mxu0 %v604
      %893 = vmatprep.subr.mxu0 0.0
      %894 = vmatpush1.msra.mxu0 %v603
      %895 = vmatprep.subr.mxu0 0.0
      %896 = vmatpush1.msra.mxu0 %v602
      %897 = vmatprep.subr.mxu0 0.0
      %898 = vmatpush1.msra.mxu0 %v601
      %899 = vmatprep.subr.mxu0 0.0
      %900 = vmatpush1.msra.mxu0 %v600
      %901 = vmatprep.subr.mxu0 0.0
      %902 = vmatpush1.msra.mxu0 %v599
      %903 = vmatprep.subr.mxu0 0.0
      %904 = vmatpush1.msra.mxu0 %v598
      %905 = vmatprep.subr.mxu0 0.0
      %906 = vmatpush1.msra.mxu0 %v597
      %907 = vmatprep.subr.mxu0 0.0
      %908 = vmatpush1.msra.mxu0 %v596
      %909 = vmatprep.subr.mxu0 0.0
      %910 = vmatpush1.msra.mxu0 %v595
      %911 = vmatprep.subr.mxu0 0.0
      %912 = vmatpush1.msra.mxu0 %v594
      %913 = vmatprep.subr.mxu0 0.0
      %914 = vmatpush1.msra.mxu0 %v593
      %915 = vmatprep.subr.mxu0 0.0
      %916 = vmatpush2.msra.mxu0 %v624
      %917 = vmatprep.subr.mxu0 0.0
      %918 = vmatpush2.msra.mxu0 %v623
      %919 = vmatprep.subr.mxu0 0.0
      %920 = vmatpush2.msra.mxu0 %v622
      %921 = vmatprep.subr.mxu0 0.0
      %922 = vmatpush2.msra.mxu0 %v621
      %923 = vmatprep.subr.mxu0 0.0
      %924 = vmatpush2.msra.mxu0 %v620
      %925 = vmatprep.subr.mxu0 0.0
      %926 = vmatpush2.msra.mxu0 %v619
      %927 = vmatprep.subr.mxu0 0.0
      %928 = vmatpush2.msra.mxu0 %v618
      %929 = vmatprep.subr.mxu0 0.0
      %930 = vmatpush2.msra.mxu0 %v617
      %931 = vmatprep.subr.mxu0 0.0
      %932 = vmatpush2.msra.mxu0 %v616
      %933 = vmatprep.subr.mxu0 0.0
      %934 = vmatpush2.msra.mxu0 %v615
      %935 = vmatprep.subr.mxu0 0.0
      %936 = vmatpush2.msra.mxu0 %v614
      %937 = vmatprep.subr.mxu0 0.0
      %938 = vmatpush2.msra.mxu0 %v613
      %939 = vmatprep.subr.mxu0 0.0
      %940 = vmatpush2.msra.mxu0 %v612
      %941 = vmatprep.subr.mxu0 0.0
      %942 = vmatpush2.msra.mxu0 %v611
      %943 = vmatprep.subr.mxu0 0.0
      %944 = vmatpush2.msra.mxu0 %v610
      %945 = vmatprep.subr.mxu0 0.0
      %946 = vmatpush2.msra.mxu0 %v609
      %947 = vmatprep.mubr.f32.mxu0 %v462
      %948 = vmatmul.mubr.f32.gmra.mxu0 %v461
      %v949 = vpop.f32.mrf.mxu0
      %v950 = vadd.f32 %v845, %v949
      %v951 = vpop.f32.mrf.mxu0
      %952 = vmatprep.mubr.f32.mxu0 %v471
      %953 = vmatmul.mubr.f32.gmra.mxu0 %v470
      %v954 = vpop.f32.mrf.mxu0
      %v955 = vadd.f32 %v850, %v954
      %v956 = vpop.f32.mrf.mxu0
      %957 = vmatprep.mubr.f32.mxu0 %v480
      %958 = vmatmul.mubr.f32.gmra.mxu0 %v479
      %v959 = vpop.f32.mrf.mxu0
      %v960 = vadd.f32 %v855, %v959
      %v961 = vpop.f32.mrf.mxu0
      %962 = vmatprep.mubr.f32.mxu0 %v489
      %963 = vmatmul.mubr.f32.gmra.mxu0 %v488
      %v964 = vpop.f32.mrf.mxu0
      %v965 = vadd.f32 %v860, %v964
      %v966 = vpop.f32.mrf.mxu0
      %967 = vmatprep.mubr.f32.mxu0 %v498
      %968 = vmatmul.mubr.f32.gmra.mxu0 %v497
      %v969 = vpop.f32.mrf.mxu0
      %v970 = vadd.f32 %v865, %v969
      %v971 = vpop.f32.mrf.mxu0
      %972 = vmatprep.mubr.f32.mxu0 %v507
      %973 = vmatmul.mubr.f32.gmra.mxu0 %v506
      %v974 = vpop.f32.mrf.mxu0
      %v975 = vadd.f32 %v870, %v974
      %v976 = vpop.f32.mrf.mxu0
      %977 = vmatprep.mubr.f32.mxu0 %v516
      %978 = vmatmul.mubr.f32.gmra.mxu0 %v515
      %v979 = vpop.f32.mrf.mxu0
      %v980 = vadd.f32 %v875, %v979
      %v981 = vpop.f32.mrf.mxu0
      %982 = vmatprep.mubr.f32.mxu0 %v525
      %983 = vmatmul.mubr.f32.gmra.mxu0 %v524
      %v984 = vpop.f32.mrf.mxu0
      %v985 = vadd.f32 %v880, %v984
      %v986 = vpop.f32.mrf.mxu0
      %987 = vdwg.mxu0
      %988 = vmatprep.subr.mxu0 0.0
      %989 = vmatpush1.msra.mxu0 %v640
      %990 = vmatprep.subr.mxu0 0.0
      %991 = vmatpush1.msra.mxu0 %v639
      %992 = vmatprep.subr.mxu0 0.0
      %993 = vmatpush1.msra.mxu0 %v638
      %994 = vmatprep.subr.mxu0 0.0
      %995 = vmatpush1.msra.mxu0 %v637
      %996 = vmatprep.subr.mxu0 0.0
      %997 = vmatpush1.msra.mxu0 %v636
      %998 = vmatprep.subr.mxu0 0.0
      %999 = vmatpush1.msra.mxu0 %v635
      %1000 = vmatprep.subr.mxu0 0.0
      %1001 = vmatpush1.msra.mxu0 %v634
      %1002 = vmatprep.subr.mxu0 0.0
      %1003 = vmatpush1.msra.mxu0 %v633
      %1004 = vmatprep.subr.mxu0 0.0
      %1005 = vmatpush1.msra.mxu0 %v632
      %1006 = vmatprep.subr.mxu0 0.0
      %1007 = vmatpush1.msra.mxu0 %v631
      %1008 = vmatprep.subr.mxu0 0.0
      %1009 = vmatpush1.msra.mxu0 %v630
      %1010 = vmatprep.subr.mxu0 0.0
      %1011 = vmatpush1.msra.mxu0 %v629
      %1012 = vmatprep.subr.mxu0 0.0
      %1013 = vmatpush1.msra.mxu0 %v628
      %1014 = vmatprep.subr.mxu0 0.0
      %1015 = vmatpush1.msra.mxu0 %v627
      %1016 = vmatprep.subr.mxu0 0.0
      %1017 = vmatpush1.msra.mxu0 %v626
      %1018 = vmatprep.subr.mxu0 0.0
      %1019 = vmatpush1.msra.mxu0 %v625
      %1020 = vmatprep.subr.mxu0 0.0
      %1021 = vmatpush2.msra.mxu0 %v656
      %1022 = vmatprep.subr.mxu0 0.0
      %1023 = vmatpush2.msra.mxu0 %v655
      %1024 = vmatprep.subr.mxu0 0.0
      %1025 = vmatpush2.msra.mxu0 %v654
      %1026 = vmatprep.subr.mxu0 0.0
      %1027 = vmatpush2.msra.mxu0 %v653
      %1028 = vmatprep.subr.mxu0 0.0
      %1029 = vmatpush2.msra.mxu0 %v652
      %1030 = vmatprep.subr.mxu0 0.0
      %1031 = vmatpush2.msra.mxu0 %v651
      %1032 = vmatprep.subr.mxu0 0.0
      %1033 = vmatpush2.msra.mxu0 %v650
      %1034 = vmatprep.subr.mxu0 0.0
      %1035 = vmatpush2.msra.mxu0 %v649
      %1036 = vmatprep.subr.mxu0 0.0
      %1037 = vmatpush2.msra.mxu0 %v648
      %1038 = vmatprep.subr.mxu0 0.0
      %1039 = vmatpush2.msra.mxu0 %v647
      %1040 = vmatprep.subr.mxu0 0.0
      %1041 = vmatpush2.msra.mxu0 %v646
      %1042 = vmatprep.subr.mxu0 0.0
      %1043 = vmatpush2.msra.mxu0 %v645
      %1044 = vmatprep.subr.mxu0 0.0
      %1045 = vmatpush2.msra.mxu0 %v644
      %1046 = vmatprep.subr.mxu0 0.0
      %1047 = vmatpush2.msra.mxu0 %v643
      %1048 = vmatprep.subr.mxu0 0.0
      %1049 = vmatpush2.msra.mxu0 %v642
      %1050 = vmatprep.subr.mxu0 0.0
      %1051 = vmatpush2.msra.mxu0 %v641
      %1052 = vmatprep.mubr.f32.mxu0 %v464
      %1053 = vmatmul.mubr.f32.gmra.mxu0 %v463
      %v1054 = vpop.f32.mrf.mxu0
      %v1055 = vadd.f32 %v950, %v1054
      %v1056 = vpop.f32.mrf.mxu0
      %1057 = vmatprep.mubr.f32.mxu0 %v473
      %1058 = vmatmul.mubr.f32.gmra.mxu0 %v472
      %v1059 = vpop.f32.mrf.mxu0
      %v1060 = vadd.f32 %v955, %v1059
      %v1061 = vpop.f32.mrf.mxu0
      %1062 = vmatprep.mubr.f32.mxu0 %v482
      %1063 = vmatmul.mubr.f32.gmra.mxu0 %v481
      %v1064 = vpop.f32.mrf.mxu0
      %v1065 = vadd.f32 %v960, %v1064
      %v1066 = vpop.f32.mrf.mxu0
      %1067 = vmatprep.mubr.f32.mxu0 %v491
      %1068 = vmatmul.mubr.f32.gmra.mxu0 %v490
      %v1069 = vpop.f32.mrf.mxu0
      %v1070 = vadd.f32 %v965, %v1069
      %v1071 = vpop.f32.mrf.mxu0
      %1072 = vmatprep.mubr.f32.mxu0 %v500
      %1073 = vmatmul.mubr.f32.gmra.mxu0 %v499
      %v1074 = vpop.f32.mrf.mxu0
      %v1075 = vadd.f32 %v970, %v1074
      %v1076 = vpop.f32.mrf.mxu0
      %1077 = vmatprep.mubr.f32.mxu0 %v509
      %1078 = vmatmul.mubr.f32.gmra.mxu0 %v508
      %v1079 = vpop.f32.mrf.mxu0
      %v1080 = vadd.f32 %v975, %v1079
      %v1081 = vpop.f32.mrf.mxu0
      %1082 = vmatprep.mubr.f32.mxu0 %v518
      %1083 = vmatmul.mubr.f32.gmra.mxu0 %v517
      %v1084 = vpop.f32.mrf.mxu0
      %v1085 = vadd.f32 %v980, %v1084
      %v1086 = vpop.f32.mrf.mxu0
      %1087 = vmatprep.mubr.f32.mxu0 %v527
      %1088 = vmatmul.mubr.f32.gmra.mxu0 %v526
      %v1089 = vpop.f32.mrf.mxu0
      %v1090 = vadd.f32 %v985, %v1089
      %v1091 = vpop.f32.mrf.mxu0
      %1092 = vdwg.mxu0
      %1093 = vmatprep.subr.mxu0 0.0
      %1094 = vmatpush1.msra.mxu0 %v672
      %1095 = vmatprep.subr.mxu0 0.0
      %1096 = vmatpush1.msra.mxu0 %v671
      %1097 = vmatprep.subr.mxu0 0.0
      %1098 = vmatpush1.msra.mxu0 %v670
      %1099 = vmatprep.subr.mxu0 0.0
      %1100 = vmatpush1.msra.mxu0 %v669
      %1101 = vmatprep.subr.mxu0 0.0
      %1102 = vmatpush1.msra.mxu0 %v668
      %1103 = vmatprep.subr.mxu0 0.0
      %1104 = vmatpush1.msra.mxu0 %v667
      %1105 = vmatprep.subr.mxu0 0.0
      %1106 = vmatpush1.msra.mxu0 %v666
      %1107 = vmatprep.subr.mxu0 0.0
      %1108 = vmatpush1.msra.mxu0 %v665
      %1109 = vmatprep.subr.mxu0 0.0
      %1110 = vmatpush1.msra.mxu0 %v664
      %1111 = vmatprep.subr.mxu0 0.0
      %1112 = vmatpush1.msra.mxu0 %v663
      %1113 = vmatprep.subr.mxu0 0.0
      %1114 = vmatpush1.msra.mxu0 %v662
      %1115 = vmatprep.subr.mxu0 0.0
      %1116 = vmatpush1.msra.mxu0 %v661
      %1117 = vmatprep.subr.mxu0 0.0
      %1118 = vmatpush1.msra.mxu0 %v660
      %1119 = vmatprep.subr.mxu0 0.0
      %1120 = vmatpush1.msra.mxu0 %v659
      %1121 = vmatprep.subr.mxu0 0.0
      %1122 = vmatpush1.msra.mxu0 %v658
      %1123 = vmatprep.subr.mxu0 0.0
      %1124 = vmatpush1.msra.mxu0 %v657
      %1125 = vmatprep.subr.mxu0 0.0
      %1126 = vmatpush2.msra.mxu0 0.0
      %1127 = vmatprep.subr.mxu0 0.0
      %1128 = vmatpush2.msra.mxu0 0.0
      %1129 = vmatprep.subr.mxu0 0.0
      %1130 = vmatpush2.msra.mxu0 0.0
      %1131 = vmatprep.subr.mxu0 0.0
      %1132 = vmatpush2.msra.mxu0 0.0
      %1133 = vmatprep.subr.mxu0 0.0
      %1134 = vmatpush2.msra.mxu0 0.0
      %1135 = vmatprep.subr.mxu0 0.0
      %1136 = vmatpush2.msra.mxu0 0.0
      %1137 = vmatprep.subr.mxu0 0.0
      %1138 = vmatpush2.msra.mxu0 0.0
      %1139 = vmatprep.subr.mxu0 0.0
      %1140 = vmatpush2.msra.mxu0 0.0
      %1141 = vmatprep.subr.mxu0 0.0
      %1142 = vmatpush2.msra.mxu0 0.0
      %1143 = vmatprep.subr.mxu0 0.0
      %1144 = vmatpush2.msra.mxu0 0.0
      %1145 = vmatprep.subr.mxu0 0.0
      %1146 = vmatpush2.msra.mxu0 0.0
      %1147 = vmatprep.subr.mxu0 0.0
      %1148 = vmatpush2.msra.mxu0 0.0
      %1149 = vmatprep.subr.mxu0 0.0
      %1150 = vmatpush2.msra.mxu0 0.0
      %1151 = vmatprep.subr.mxu0 0.0
      %1152 = vmatpush2.msra.mxu0 0.0
      %1153 = vmatprep.subr.mxu0 0.0
      %1154 = vmatpush2.msra.mxu0 0.0
      %1155 = vmatprep.subr.mxu0 0.0
      %1156 = vmatpush2.msra.mxu0 0.0
      %1157 = vmatprep.mubr.f32.mxu0 0.0
      %1158 = vmatmul.mubr.f32.gmra.mxu0 %v465
      %v1159 = vpop.f32.mrf.mxu0
      %v1160 = vadd.f32 %v1055, %v1159
      %v1161 = vpop.f32.mrf.mxu0
      %1162 = vmatprep.mubr.f32.mxu0 0.0
      %1163 = vmatmul.mubr.f32.gmra.mxu0 %v474
      %v1164 = vpop.f32.mrf.mxu0
      %v1165 = vadd.f32 %v1060, %v1164
      %v1166 = vpop.f32.mrf.mxu0
      %1167 = vmatprep.mubr.f32.mxu0 0.0
      %1168 = vmatmul.mubr.f32.gmra.mxu0 %v483
      %v1169 = vpop.f32.mrf.mxu0
      %v1170 = vadd.f32 %v1065, %v1169
      %v1171 = vpop.f32.mrf.mxu0
      %1172 = vmatprep.mubr.f32.mxu0 0.0
      %1173 = vmatmul.mubr.f32.gmra.mxu0 %v492
      %v1174 = vpop.f32.mrf.mxu0
      %v1175 = vadd.f32 %v1070, %v1174
      %v1176 = vpop.f32.mrf.mxu0
      %1177 = vmatprep.mubr.f32.mxu0 0.0
      %1178 = vmatmul.mubr.f32.gmra.mxu0 %v501
      %v1179 = vpop.f32.mrf.mxu0
      %v1180 = vadd.f32 %v1075, %v1179
      %v1181 = vpop.f32.mrf.mxu0
      %1182 = vmatprep.mubr.f32.mxu0 0.0
      %1183 = vmatmul.mubr.f32.gmra.mxu0 %v510
      %v1184 = vpop.f32.mrf.mxu0
      %v1185 = vadd.f32 %v1080, %v1184
      %v1186 = vpop.f32.mrf.mxu0
      %1187 = vmatprep.mubr.f32.mxu0 0.0
      %1188 = vmatmul.mubr.f32.gmra.mxu0 %v519
      %v1189 = vpop.f32.mrf.mxu0
      %v1190 = vadd.f32 %v1085, %v1189
      %v1191 = vpop.f32.mrf.mxu0
      %1192 = vmatprep.mubr.f32.mxu0 0.0
      %1193 = vmatmul.mubr.f32.gmra.mxu0 %v528
      %v1194 = vpop.f32.mrf.mxu0
      %v1195 = vadd.f32 %v1090, %v1194
      %v1196 = vpop.f32.mrf.mxu0
      %1197 = vdwg.mxu0
      %1198 = vst [vmem:[%s231] sm:$0xff] %v1160
      %1199 = vst [vmem:[%s231 + $0x8] sm:$0xff] %v1165
      %1200 = vst [vmem:[%s231 + $0x10] sm:$0xff] %v1170
      %1201 = vst [vmem:[%s231 + $0x18] sm:$0xff] %v1175
      %1202 = vst [vmem:[%s231 + $0x20] sm:$0xff] %v1180
      %1203 = vst [vmem:[%s231 + $0x28] sm:$0xff] %v1185
      %1204 = vst [vmem:[%s231 + $0x30] sm:$0xff] %v1190
      %1205 = vst [vmem:[%s231 + $0x38] sm:$0xff] %v1195
      %v1206 = vadd.f32 %v1160, %v1165
      %v1207 = vadd.f32 %v1206, %v1170
      %v1208 = vadd.f32 %v1207, %v1175
      %v1209 = vadd.f32 %v1208, %v1180
      %v1210 = vadd.f32 %v1209, %v1185
      %v1211 = vadd.f32 %v1210, %v1190
      %v1212 = vadd.f32 %v1211, %v1195
      %v1213 = vrot.slane %v1212, 4
      %v1214 = vadd.f32 %v1212, %v1213
      %v1215 = vrot.slane %v1214, 2
      %v1216 = vadd.f32 %v1214, %v1215
      %v1217 = vrot.slane %v1216, 1
      %v1218 = vadd.f32 %v1216, %v1217
      %v1219 = vmul.f32 %v1160, %v1160
      %v1220 = vmul.f32 %v1165, %v1165
      %v1221 = vmul.f32 %v1170, %v1170
      %v1222 = vmul.f32 %v1175, %v1175
      %v1223 = vmul.f32 %v1180, %v1180
      %v1224 = vmul.f32 %v1185, %v1185
      %v1225 = vmul.f32 %v1190, %v1190
      %v1226 = vmul.f32 %v1195, %v1195
      %v1227 = vadd.f32 %v1219, %v1220
      %v1228 = vadd.f32 %v1227, %v1221
      %v1229 = vadd.f32 %v1228, %v1222
      %v1230 = vadd.f32 %v1229, %v1223
      %v1231 = vadd.f32 %v1230, %v1224
      %v1232 = vadd.f32 %v1231, %v1225
      %v1233 = vadd.f32 %v1232, %v1226
      %v1234 = vrot.slane %v1233, 4
      %v1235 = vadd.f32 %v1233, %v1234
      %v1236 = vrot.slane %v1235, 2
      %v1237 = vadd.f32 %v1235, %v1236
      %v1238 = vrot.slane %v1237, 1
      %v1239 = vadd.f32 %v1237, %v1238
      %vm1240 = vcmask 1040384
      %v1241 = vsel %vm1240, %v1218, %v1239
      %1242 = vst [vmem:[%s235] sm:$0x3] %v1241
      %p1243 = scmp.lt.s32.totalorder %s17, 1
      %s1244 = scalar_select %p1243, %s17, 1
      %s1245 = smul.addr %s1244, 8
      %s1246 = smul.addr %s1245, 8
      %s1247 = scalar_lea.vmem %s4, %s1246
      %p1248 = scmp.lt.s32.totalorder %s17, 1
      %s1249 = scalar_select %p1248, %s17, 1
      %s1250 = smul.addr %s1249, 2
      %s1251 = scalar_lea.vmem %s5, %s1250
      // Predicated region
      $region37: #{down_forward.4} parent=35 // pred_check
        %p1252 = pneg %p124
      $region38: #{down_forward.4} parent=35 // pred_check_branch
        %1254 = sbr.rel (%p1252) target = $region40
      $region39: #{down_forward.4} parent=35 // pred_region
        _
      $region40: #{down_forward.4} parent=35 // pred_fallthru
        _
      // Predicated region
      $region41: #{down_forward.4} parent=35 // pred_check
        %p1255 = pneg %p150
      $region42: #{down_forward.4} parent=35 // pred_check_branch
        %1257 = sbr.rel (%p1255) target = $region44
      $region43: #{down_forward.4} parent=35 // pred_region
        _
      $region44: #{down_forward.4} parent=35 // pred_fallthru
        _
    $region36: #{down_forward.4} parent=5 // pred_fallthru
      _
    %p1258 = scmp.le.s32.totalorder 2, %s12
    // Predicated region
    $region45: #{down_forward.4} parent=5 // pred_check
      %p1259 = pneg %p1258
    $region46: #{down_forward.4} parent=5 // pred_check_branch
      %1261 = sbr.rel (%p1259) target = $region48
    $region47: #{down_forward.4} parent=5 // pred_region
      %s1262 = ssub.s32 %s12, 2
      // Predicated region
      $region49: #{down_forward.4} parent=47 // pred_check
        %p1263 = pneg %p130
      $region50: #{down_forward.4} parent=47 // pred_check_branch
        %1265 = sbr.rel (%p1263) target = $region52
      $region51: #{down_forward.4} parent=47 // pred_region
        %p1266 = scmp.lt.s32.totalorder %s18, 1
        %s1267 = scalar_select %p1266, %s18, 1
        %s1268 = smul.addr %s1267, 8
        %s1269 = smul.addr %s1268, 8
        %s1270 = scalar_lea.vmem %s4, %s1269
      $region52: #{down_forward.4} parent=47 // pred_fallthru
        _
      // Predicated region
      $region53: #{down_forward.4} parent=47 // pred_check
        %p1271 = pneg %p156
      $region54: #{down_forward.4} parent=47 // pred_check_branch
        %1273 = sbr.rel (%p1271) target = $region56
      $region55: #{down_forward.4} parent=47 // pred_region
        %p1274 = scmp.lt.s32.totalorder %s18, 1
        %s1275 = scalar_select %p1274, %s18, 1
        %s1276 = smul.addr %s1275, 2
        %s1277 = scalar_lea.vmem %s5, %s1276
      $region56: #{down_forward.4} parent=47 // pred_fallthru
        _
    $region48: #{down_forward.4} parent=5 // pred_fallthru
      _
  $region6: #{down_forward.4} parent=0 // loop_footer
    %s16 = sadd.s32 1, %s12
  $region7: #{down_forward.4} parent=0 // loop_footer_branch
    %11 = sbr.rel target = $region3
  $region8: #{down_forward.4} parent=0 // loop_exit
    _

</llo_original>
